<compile_context>
chip_gen: v7x
topology: tpu7x:2x2x1
jax: 0.10.0
libtpu: 0.0.40
codegen_flags: <defaults>
</compile_context>

<pallas_src>
import numpy as np
import jax
import jax.numpy as jnp
from jax import lax
from jax.experimental import pallas as pl
from jax.experimental.pallas import tpu as pltpu

# ---------------- small config (consistent with the module's structure) -------
N_VOCAB   = 64
N_DEC_SEQ = 8
N_ENC_SEQ = 8
N_LAYER   = 2
D_HIDN    = 32
D_FF      = 64
N_HEAD    = 4
D_HEAD    = 8
I_PAD     = 0
LN_EPS    = 1e-12
SCALE     = 1.0 / (D_HEAD ** 0.5)
NEG_INF   = -1e9


# ---------------- reference helper (plain numpy glue) -------------------------
def get_sinusoid_encoding_table(n_seq, d_hidn):
    def cal_angle(position, i_hidn):
        return position / np.power(10000, 2 * (i_hidn // 2) / d_hidn)

    def get_posi_angle_vec(position):
        return [cal_angle(position, i_hidn) for i_hidn in range(d_hidn)]

    tbl = np.array([get_posi_angle_vec(i) for i in range(n_seq)])
    tbl[:, 0::2] = np.sin(tbl[:, 0::2])
    tbl[:, 1::2] = np.cos(tbl[:, 1::2])
    return jnp.asarray(tbl, dtype=jnp.float32)


# ---------------- in-kernel helpers -------------------------------------------
def _layer_norm(x, gamma, beta):
    mu = jnp.mean(x, axis=-1, keepdims=True)
    var = jnp.mean(jnp.square(x - mu), axis=-1, keepdims=True)
    return (x - mu) * lax.rsqrt(var + LN_EPS) * gamma + beta


def _erf(x):
    # Abramowitz & Stegun 7.1.26 (|error| < 1.5e-7).  Uses only exp/mul/add so
    # exact GELU never depends on a lax.erf Mosaic lowering.
    a1, a2, a3, a4, a5 = (0.254829592, -0.284496736, 1.421413741,
                          -1.453152027, 1.061405429)
    p = 0.3275911
    sgn = jnp.where(x >= 0.0, 1.0, -1.0)
    ax = x * sgn
    t = 1.0 / (1.0 + p * ax)
    poly = ((((a5 * t + a4) * t + a3) * t + a2) * t + a1) * t
    return sgn * (1.0 - poly * jnp.exp(-ax * ax))


def _gelu(x):
    return 0.5 * x * (1.0 + _erf(x * 0.7071067811865476))


def _mm(a, b):
    # bf16 MXU operands, f32 accumulation.
    return jnp.dot(a.astype(jnp.bfloat16), b.astype(jnp.bfloat16),
                   preferred_element_type=jnp.float32)


def _mm_nt(a, b):
    # a @ b.T without materializing the transpose (MXU takes it directly).
    return lax.dot_general(a.astype(jnp.bfloat16), b.astype(jnp.bfloat16),
                           (((1,), (1,)), ((), ())),
                           preferred_element_type=jnp.float32)


def _attend(q_all, k_all, v_all, mask_add, prob_ref):
    """Per-head scaled-dot attention.

    q_all/k_all/v_all: (Nq|Nk, H*Dh) f32, heads laid out contiguously along
    the lane axis.  mask_add: (Nq, Nk) additive mask (0 / -1e9).  Attention
    probabilities are stored per head into prob_ref[0, 0, h] (f32).
    The per-head loop is fully unrolled (H is static); the MXU work is the same
    as a head-batched dot_general would generate at these tiny head dims.
    """
    ctx_heads = []
    for h in range(N_HEAD):
        sl = slice(h * D_HEAD, (h + 1) * D_HEAD)
        s = _mm_nt(q_all[:, sl], k_all[:, sl]) * SCALE + mask_add
        m = jnp.max(s, axis=-1, keepdims=True)
        e = jnp.exp(s - m)
        p = e / jnp.sum(e, axis=-1, keepdims=True)       # exact softmax (f32)
        prob_ref[0, 0, h] = p
        ctx_heads.append(_mm(p, v_all[:, sl]))           # (Nq, Dh) f32
    # concat(heads) along lanes -> single dense output projection afterwards
    return jnp.concatenate(ctx_heads, axis=-1)            # (Nq, H*Dh)


# ---------------- fused Pallas kernel: the whole decoder stack ----------------
def decoder_stack_kernel(
        dec_ref, enc_ref, dpad_ref, epad_ref,
        wqkv1_ref, bqkv1_ref, wo1_ref, bo1_ref,
        wq2_ref, bq2_ref, wkv2_ref, bkv2_ref, wo2_ref, bo2_ref,
        wff1_ref, bff1_ref, wff2_ref, bff2_ref, ln_ref,
        out_ref, sprob_ref, eprob_ref):
    layer = pl.program_id(1)

    # layer 0: load this batch's embedded decoder input into the output block,
    # which stays VMEM-resident across the layer axis (activation carry).
    @pl.when(layer == 0)
    def _():
        out_ref[...] = dec_ref[...]

    x = out_ref[0]            # (Sd, D)  f32 activation carry
    enc = enc_ref[0]          # (Se, D)  f32 encoder outputs for this batch
    ln = ln_ref[0]            # (6, D)   f32: g1, b1, g2, b2, g3, b3
    Sd = x.shape[0]
    Se = enc.shape[0]
    HD = N_HEAD * D_HEAD

    # ---- additive attention masks, built in-kernel (VPU only) ----
    row = lax.broadcasted_iota(jnp.int32, (Sd, Sd), 0)
    col = lax.broadcasted_iota(jnp.int32, (Sd, Sd), 1)
    dec_key_pad = jnp.broadcast_to(dpad_ref[0], (Sd, Sd)) > 0.5
    smask = jnp.where(jnp.logical_or(col > row, dec_key_pad),
                      jnp.float32(NEG_INF), jnp.float32(0.0))      # (Sd, Sd)
    emask = jnp.where(jnp.broadcast_to(epad_ref[0], (Sd, Se)) > 0.5,
                      jnp.float32(NEG_INF), jnp.float32(0.0))      # (Sd, Se)

    # ---- self attention + residual + LayerNorm ----
    qkv = _mm(x, wqkv1_ref[0]) + bqkv1_ref[0]            # (Sd, 3*H*Dh), one matmul
    ctx1 = _attend(qkv[:, 0:HD], qkv[:, HD:2 * HD], qkv[:, 2 * HD:3 * HD],
                   smask, sprob_ref)
    att1 = _mm(ctx1, wo1_ref[0]) + bo1_ref[0]            # concat(heads) @ W_O
    h1 = _layer_norm(x + att1, ln[0:1], ln[1:2])

    # ---- decoder-encoder attention + residual + LayerNorm ----
    q2 = _mm(h1, wq2_ref[0]) + bq2_ref[0]                # (Sd, H*Dh)
    kv2 = _mm(enc, wkv2_ref[0]) + bkv2_ref[0]            # (Se, 2*H*Dh)
    ctx2 = _attend(q2, kv2[:, 0:HD], kv2[:, HD:2 * HD], emask, eprob_ref)
    att2 = _mm(ctx2, wo2_ref[0]) + bo2_ref[0]
    h2 = _layer_norm(h1 + att2, ln[2:3], ln[3:4])

    # ---- position-wise FFN (Conv1d k=1 == Linear), exact (erf) GELU ----
    ff = _mm(h2, wff1_ref[0]) + bff1_ref[0]
    ff = _gelu(ff)
    ff = _mm(ff, wff2_ref[0]) + bff2_ref[0]
    h3 = _layer_norm(h2 + ff, ln[4:5], ln[5:6])

    out_ref[0] = h3                                      # carry to next layer


PACKED_ORDER = [
    "wqkv1", "bqkv1", "wo1", "bo1",
    "wq2", "bq2", "wkv2", "bkv2", "wo2", "bo2",
    "wff1", "bff1", "wff2", "bff2", "ln",
]


def run_decoder_stack(dec_emb, enc_out, dec_pad, enc_pad, packed):
    B, Sd, D = dec_emb.shape
    Se = enc_out.shape[1]
    L = packed["wqkv1"].shape[0]
    H = N_HEAD
    weights = [packed[k] for k in PACKED_ORDER]

    data_specs = [
        pl.BlockSpec((1, Sd, D), lambda b, l: (b, 0, 0)),   # decoder embeddings
        pl.BlockSpec((1, Se, D), lambda b, l: (b, 0, 0)),   # encoder outputs
        pl.BlockSpec((1, 1, Sd), lambda b, l: (b, 0, 0)),   # dec pad flags (f32)
        pl.BlockSpec((1, 1, Se), lambda b, l: (b, 0, 0)),   # enc pad flags (f32)
    ]
    # all weight slabs are (L, r, c); block over the layer axis only
    w_specs = [
        pl.BlockSpec((1,) + tuple(w.shape[1:]), lambda b, l: (l, 0, 0))
        for w in weights
    ]
    out_specs = [
        pl.BlockSpec((1, Sd, D), lambda b, l: (b, 0, 0)),            # activation carry
        pl.BlockSpec((1, 1, H, Sd, Sd), lambda b, l: (l, b, 0, 0, 0)),  # self-attn probs
        pl.BlockSpec((1, 1, H, Sd, Se), lambda b, l: (l, b, 0, 0, 0)),  # dec-enc probs
    ]
    out_shapes = [
        jax.ShapeDtypeStruct((B, Sd, D), jnp.float32),
        jax.ShapeDtypeStruct((L, B, H, Sd, Sd), jnp.float32),
        jax.ShapeDtypeStruct((L, B, H, Sd, Se), jnp.float32),
    ]

    return pl.pallas_call(
        decoder_stack_kernel,
        grid=(B, L),
        in_specs=data_specs + w_specs,
        out_specs=out_specs,
        out_shape=out_shapes,
        compiler_params=pltpu.CompilerParams(
            dimension_semantics=("parallel", "arbitrary")),  # batch || , layers seq.
    )(dec_emb, enc_out, dec_pad, enc_pad, *weights)


# ---------------- deterministic parameter initialization ----------------------
def _linear_init(key, fan_in, fan_out):
    bound = 1.0 / np.sqrt(fan_in)
    kw, kb = jax.random.split(key)
    w = jax.random.uniform(kw, (fan_in, fan_out), jnp.float32, -bound, bound)
    b = jax.random.uniform(kb, (1, fan_out), jnp.float32, -bound, bound)
    return w, b


def init_layer_params(key):
    ks = jax.random.split(key, 10)
    p = {}
    p["wq1"], p["bq1"] = _linear_init(ks[0], D_HIDN, N_HEAD * D_HEAD)
    p["wk1"], p["bk1"] = _linear_init(ks[1], D_HIDN, N_HEAD * D_HEAD)
    p["wv1"], p["bv1"] = _linear_init(ks[2], D_HIDN, N_HEAD * D_HEAD)
    p["wo1"], p["bo1"] = _linear_init(ks[3], N_HEAD * D_HEAD, D_HIDN)
    p["g1"], p["be1"] = jnp.ones((1, D_HIDN)), jnp.zeros((1, D_HIDN))
    p["wq2"], p["bq2"] = _linear_init(ks[4], D_HIDN, N_HEAD * D_HEAD)
    p["wk2"], p["bk2"] = _linear_init(ks[5], D_HIDN, N_HEAD * D_HEAD)
    p["wv2"], p["bv2"] = _linear_init(ks[6], D_HIDN, N_HEAD * D_HEAD)
    p["wo2"], p["bo2"] = _linear_init(ks[7], N_HEAD * D_HEAD, D_HIDN)
    p["g2"], p["be2"] = jnp.ones((1, D_HIDN)), jnp.zeros((1, D_HIDN))
    p["w1"], p["b1"] = _linear_init(ks[8], D_HIDN, D_FF)   # conv1 (k=1)
    p["w2"], p["b2"] = _linear_init(ks[9], D_FF, D_HIDN)   # conv2 (k=1)
    p["g3"], p["be3"] = jnp.ones((1, D_HIDN)), jnp.zeros((1, D_HIDN))
    return p


def pack_layer_params(layer_params):
    """Fuse per-layer weights into dense (L, D, .) slabs.

    Matmul weights are stored as bf16 (MXU operands, half the DMA); biases and
    LayerNorm parameters stay f32.  QKV columns are [Q_allheads|K_allheads|
    V_allheads] with heads contiguous (head-major, d_head-minor), matching the
    torch .view(..., n_head, d_head) split.
    """
    bf16 = jnp.bfloat16
    acc = {k: [] for k in PACKED_ORDER}
    for p in layer_params:
        per_layer = dict(
            wqkv1=jnp.concatenate([p["wq1"], p["wk1"], p["wv1"]], axis=1).astype(bf16),
            bqkv1=jnp.concatenate([p["bq1"], p["bk1"], p["bv1"]], axis=1),
            wo1=p["wo1"].astype(bf16),
            bo1=p["bo1"],
            wq2=p["wq2"].astype(bf16),
            bq2=p["bq2"],
            wkv2=jnp.concatenate([p["wk2"], p["wv2"]], axis=1).astype(bf16),
            bkv2=jnp.concatenate([p["bk2"], p["bv2"]], axis=1),
            wo2=p["wo2"].astype(bf16),
            bo2=p["bo2"],
            wff1=p["w1"].astype(bf16), bff1=p["b1"],
            wff2=p["w2"].astype(bf16), bff2=p["b2"],
            ln=jnp.concatenate([p["g1"], p["be1"], p["g2"], p["be2"],
                                p["g3"], p["be3"]], axis=0),
        )
        for k in PACKED_ORDER:
            acc[k].append(per_layer[k])
    return {k: jnp.stack(v, axis=0) for k, v in acc.items()}


# ---------------- DecoderLoop forward ------------------------------------------
@jax.jit
def decoder_loop_forward(dec_inputs, enc_inputs, enc_outputs,
                         dec_emb_table, pos_emb_table, packed):
    B, Sd = dec_inputs.shape
    Se = enc_inputs.shape[1]
    L = packed["wqkv1"].shape[0]

    positions = jnp.broadcast_to(
        jnp.arange(Sd, dtype=dec_inputs.dtype), (B, Sd)) + 1
    positions = jnp.where(dec_inputs == I_PAD, 0, positions)
    dec_emb = dec_emb_table[dec_inputs] + pos_emb_table[positions]   # (B, Sd, D)

    dec_pad = (dec_inputs == I_PAD).astype(jnp.float32).reshape(B, 1, Sd)
    enc_pad = (enc_inputs == I_PAD).astype(jnp.float32).reshape(B, 1, Se)

    dec_out, sprob, eprob = run_decoder_stack(
        dec_emb, enc_outputs, dec_pad, enc_pad, packed)

    self_attn_probs = [sprob[l] for l in range(L)]        # each (B, H, Sd, Sd)
    dec_enc_attn_probs = [eprob[l] for l in range(L)]     # each (B, H, Sd, Se)
    return dec_out, self_attn_probs, dec_enc_attn_probs


# ---------------- main ----------------------------------------------------------
if __name__ == "__main__":
    key = jax.random.PRNGKey(0)
    k_emb, k_dec, k_enc, k_encout, k_layers = jax.random.split(key, 5)

    B = 2
    dec_inputs = jax.random.randint(k_dec, (B, N_DEC_SEQ), 1, N_VOCAB, dtype=jnp.int32)
    dec_inputs = dec_inputs.at[1, -2:].set(I_PAD)          # some padding
    enc_inputs = jax.random.randint(k_enc, (B, N_ENC_SEQ), 1, N_VOCAB, dtype=jnp.int32)
    enc_inputs = enc_inputs.at[0, -1:].set(I_PAD)
    enc_outputs = jax.random.normal(k_encout, (B, N_ENC_SEQ, D_HIDN), jnp.float32)

    dec_emb_table = jax.random.normal(k_emb, (N_VOCAB, D_HIDN), jnp.float32)
    pos_emb_table = get_sinusoid_encoding_table(N_DEC_SEQ + 1, D_HIDN)

    layer_keys = jax.random.split(k_layers, N_LAYER)
    layer_params = [init_layer_params(k) for k in layer_keys]
    packed = pack_layer_params(layer_params)

    dec_out, self_probs, enc_probs = decoder_loop_forward(
        dec_inputs, enc_inputs, enc_outputs,
        dec_emb_table, pos_emb_table, packed)

    jax.block_until_ready(dec_out)
    jax.block_until_ready(self_probs)
    jax.block_until_ready(enc_probs)

    assert dec_out.shape == (B, N_DEC_SEQ, D_HIDN)
    assert len(self_probs) == N_LAYER and len(enc_probs) == N_LAYER
    assert self_probs[0].shape == (B, N_HEAD, N_DEC_SEQ, N_DEC_SEQ)
    assert enc_probs[0].shape == (B, N_HEAD, N_DEC_SEQ, N_ENC_SEQ)
    assert bool(jnp.all(jnp.isfinite(dec_out)))
    assert bool(jnp.all(jnp.isfinite(self_probs[0])))
    # softmax rows must sum to 1 (exact divide in-kernel)
    row_sums = self_probs[0].sum(axis=-1)
    assert bool(jnp.all(jnp.abs(row_sums - 1.0) < 1e-4))
    print("KERNEL_OK")
</pallas_src>

<mosaic_0001>
module attributes {stable_mosaic.version = 11 : i64} {
  func.func @decoder_stack_kernel(%arg0: i32, %arg1: i32, %arg2: memref<1x8x32xf32, #tpu.memory_space<vmem>>, %arg3: memref<1x8x32xf32, #tpu.memory_space<vmem>>, %arg4: memref<1x1x8xf32, #tpu.memory_space<vmem>>, %arg5: memref<1x1x8xf32, #tpu.memory_space<vmem>>, %arg6: memref<1x32x96xbf16, #tpu.memory_space<vmem>>, %arg7: memref<1x1x96xf32, #tpu.memory_space<vmem>>, %arg8: memref<1x32x32xbf16, #tpu.memory_space<vmem>>, %arg9: memref<1x1x32xf32, #tpu.memory_space<vmem>>, %arg10: memref<1x32x32xbf16, #tpu.memory_space<vmem>>, %arg11: memref<1x1x32xf32, #tpu.memory_space<vmem>>, %arg12: memref<1x32x64xbf16, #tpu.memory_space<vmem>>, %arg13: memref<1x1x64xf32, #tpu.memory_space<vmem>>, %arg14: memref<1x32x32xbf16, #tpu.memory_space<vmem>>, %arg15: memref<1x1x32xf32, #tpu.memory_space<vmem>>, %arg16: memref<1x32x64xbf16, #tpu.memory_space<vmem>>, %arg17: memref<1x1x64xf32, #tpu.memory_space<vmem>>, %arg18: memref<1x64x32xbf16, #tpu.memory_space<vmem>>, %arg19: memref<1x1x32xf32, #tpu.memory_space<vmem>>, %arg20: memref<1x6x32xf32, #tpu.memory_space<vmem>>, %arg21: memref<1x8x32xf32, #tpu.memory_space<vmem>>, %arg22: memref<1x1x4x8x8xf32, #tpu.memory_space<vmem>>, %arg23: memref<1x1x4x8x8xf32, #tpu.memory_space<vmem>>) attributes {dimension_semantics = [#tpu.dimension_semantics<parallel>, #tpu.dimension_semantics<arbitrary>], iteration_bounds = array<i64: 2, 2>, scalar_prefetch = 0 : i64, scratch_operands = 0 : i64, tpu.core_type = #tpu.core_type<tc>, window_params = [{transform_indices = @transform_0, window_bounds = array<i64: 1, 8, 32>}, {transform_indices = @transform_1, window_bounds = array<i64: 1, 8, 32>}, {transform_indices = @transform_2, window_bounds = array<i64: 1, 1, 8>}, {transform_indices = @transform_3, window_bounds = array<i64: 1, 1, 8>}, {transform_indices = @transform_4, window_bounds = array<i64: 1, 32, 96>}, {transform_indices = @transform_5, window_bounds = array<i64: 1, 1, 96>}, {transform_indices = @transform_6, window_bounds = array<i64: 1, 32, 32>}, {transform_indices = @transform_7, window_bounds = array<i64: 1, 1, 32>}, {transform_indices = @transform_8, window_bounds = array<i64: 1, 32, 32>}, {transform_indices = @transform_9, window_bounds = array<i64: 1, 1, 32>}, {transform_indices = @transform_10, window_bounds = array<i64: 1, 32, 64>}, {transform_indices = @transform_11, window_bounds = array<i64: 1, 1, 64>}, {transform_indices = @transform_12, window_bounds = array<i64: 1, 32, 32>}, {transform_indices = @transform_13, window_bounds = array<i64: 1, 1, 32>}, {transform_indices = @transform_14, window_bounds = array<i64: 1, 32, 64>}, {transform_indices = @transform_15, window_bounds = array<i64: 1, 1, 64>}, {transform_indices = @transform_16, window_bounds = array<i64: 1, 64, 32>}, {transform_indices = @transform_17, window_bounds = array<i64: 1, 1, 32>}, {transform_indices = @transform_18, window_bounds = array<i64: 1, 6, 32>}, {transform_indices = @transform_19, window_bounds = array<i64: 1, 8, 32>}, {transform_indices = @transform_20, window_bounds = array<i64: 1, 1, 4, 8, 8>}, {transform_indices = @transform_21, window_bounds = array<i64: 1, 1, 4, 8, 8>}]} {
    %c0_i32 = arith.constant 0 : i32
    %0 = arith.cmpi eq, %arg1, %c0_i32 : i32
    %1 = arith.extui %0 : i1 to i32
    %c0_i32_0 = arith.constant 0 : i32
    %2 = arith.cmpi ne, %1, %c0_i32_0 : i32
    scf.if %2 {
      %c0_180 = arith.constant 0 : index
      %c0_181 = arith.constant 0 : index
      %c0_182 = arith.constant 0 : index
      %405 = vector.load %arg2[%c0_180, %c0_181, %c0_182] : memref<1x8x32xf32, #tpu.memory_space<vmem>>, vector<1x8x32xf32>
      %c0_183 = arith.constant 0 : index
      %c0_184 = arith.constant 0 : index
      %c0_185 = arith.constant 0 : index
      %406 = vector.load %arg21[%c0_183, %c0_184, %c0_185] : memref<1x8x32xf32, #tpu.memory_space<vmem>>, vector<1x8x32xf32>
      tpu.vector_store %arg21[%c0_183, %c0_184, %c0_185], %405 {strides = array<i32>} : memref<1x8x32xf32, #tpu.memory_space<vmem>>, vector<1x8x32xf32>,
    } else {
    }
    %c0 = arith.constant 0 : index
    %c0_1 = arith.constant 0 : index
    %c0_2 = arith.constant 0 : index
    %3 = vector.load %arg21[%c0, %c0_1, %c0_2] : memref<1x8x32xf32, #tpu.memory_space<vmem>>, vector<1x8x32xf32>
    %4 = vector.shape_cast %3 : vector<1x8x32xf32> to vector<8x32xf32>
    %c0_3 = arith.constant 0 : index
    %c0_4 = arith.constant 0 : index
    %c0_5 = arith.constant 0 : index
    %5 = vector.load %arg3[%c0_3, %c0_4, %c0_5] : memref<1x8x32xf32, #tpu.memory_space<vmem>>, vector<1x8x32xf32>
    %6 = vector.shape_cast %5 : vector<1x8x32xf32> to vector<8x32xf32>
    %c0_6 = arith.constant 0 : index
    %c0_7 = arith.constant 0 : index
    %c0_8 = arith.constant 0 : index
    %7 = vector.load %arg20[%c0_6, %c0_7, %c0_8] : memref<1x6x32xf32, #tpu.memory_space<vmem>>, vector<1x6x32xf32>
    %8 = vector.shape_cast %7 : vector<1x6x32xf32> to vector<6x32xf32>
    %9 = tpu.iota {dimensions = array<i32: 0>} : vector<8x8xi32>
    %10 = tpu.iota {dimensions = array<i32: 1>} : vector<8x8xi32>
    %c0_9 = arith.constant 0 : index
    %c0_10 = arith.constant 0 : index
    %c0_11 = arith.constant 0 : index
    %11 = vector.load %arg4[%c0_9, %c0_10, %c0_11] : memref<1x1x8xf32, #tpu.memory_space<vmem>>, vector<1x1x8xf32>
    %12 = vector.shape_cast %11 : vector<1x1x8xf32> to vector<1x8xf32>
    %13 = vector.shape_cast %12 : vector<1x8xf32> to vector<1x8xf32>
    %14 = vector.broadcast %13 : vector<1x8xf32> to vector<8x8xf32>
    %cst = arith.constant 5.000000e-01 : f32
    %15 = vector.broadcast %cst : f32 to vector<8x8xf32>
    %16 = arith.cmpf ogt, %14, %15 : vector<8x8xf32>
    %17 = arith.cmpi sgt, %10, %9 : vector<8x8xi32>
    %18 = arith.ori %17, %16 : vector<8x8xi1>
    %cst_12 = arith.constant -1.000000e+09 : f32
    %cst_13 = arith.constant 0.000000e+00 : f32
    %19 = vector.broadcast %cst_12 : f32 to vector<8x8xf32>
    %20 = vector.broadcast %cst_13 : f32 to vector<8x8xf32>
    %21 = arith.select %18, %19, %20 : vector<8x8xi1>, vector<8x8xf32>
    %c0_14 = arith.constant 0 : index
    %c0_15 = arith.constant 0 : index
    %c0_16 = arith.constant 0 : index
    %22 = vector.load %arg5[%c0_14, %c0_15, %c0_16] : memref<1x1x8xf32, #tpu.memory_space<vmem>>, vector<1x1x8xf32>
    %23 = vector.shape_cast %22 : vector<1x1x8xf32> to vector<1x8xf32>
    %24 = vector.shape_cast %23 : vector<1x8xf32> to vector<1x8xf32>
    %25 = vector.broadcast %24 : vector<1x8xf32> to vector<8x8xf32>
    %cst_17 = arith.constant 5.000000e-01 : f32
    %26 = vector.broadcast %cst_17 : f32 to vector<8x8xf32>
    %27 = arith.cmpf ogt, %25, %26 : vector<8x8xf32>
    %cst_18 = arith.constant -1.000000e+09 : f32
    %cst_19 = arith.constant 0.000000e+00 : f32
    %28 = vector.broadcast %cst_18 : f32 to vector<8x8xf32>
    %29 = vector.broadcast %cst_19 : f32 to vector<8x8xf32>
    %30 = arith.select %27, %28, %29 : vector<8x8xi1>, vector<8x8xf32>
    %c0_20 = arith.constant 0 : index
    %c0_21 = arith.constant 0 : index
    %c0_22 = arith.constant 0 : index
    %31 = vector.load %arg6[%c0_20, %c0_21, %c0_22] : memref<1x32x96xbf16, #tpu.memory_space<vmem>>, vector<1x32x96xbf16>
    %32 = vector.shape_cast %31 : vector<1x32x96xbf16> to vector<32x96xbf16>
    %33 = arith.truncf %4 : vector<8x32xf32> to vector<8x32xbf16>
    %cst_23 = arith.constant dense<0.000000e+00> : vector<8x96xf32>
    %34 = tpu.matmul %33, %32, %cst_23 {dimension_numbers = #tpu.dot_dimension_numbers<[1], [0], [0], [1], [0, 0, 1, 1], [], []>} : vector<8x32xbf16>, vector<32x96xbf16>, vector<8x96xf32> -> vector<8x96xf32>
    %c0_24 = arith.constant 0 : index
    %c0_25 = arith.constant 0 : index
    %c0_26 = arith.constant 0 : index
    %35 = vector.load %arg7[%c0_24, %c0_25, %c0_26] : memref<1x1x96xf32, #tpu.memory_space<vmem>>, vector<1x1x96xf32>
    %36 = vector.shape_cast %35 : vector<1x1x96xf32> to vector<1x96xf32>
    %37 = vector.broadcast %36 : vector<1x96xf32> to vector<8x96xf32>
    %38 = arith.addf %34, %37 : vector<8x96xf32>
    %39 = vector.extract_strided_slice %38 {offsets = [0, 0], sizes = [8, 32], strides = [1, 1]} : vector<8x96xf32> to vector<8x32xf32>
    %40 = vector.extract_strided_slice %38 {offsets = [0, 32], sizes = [8, 32], strides = [1, 1]} : vector<8x96xf32> to vector<8x32xf32>
    %41 = vector.extract_strided_slice %38 {offsets = [0, 64], sizes = [8, 32], strides = [1, 1]} : vector<8x96xf32> to vector<8x32xf32>
    %42 = vector.extract_strided_slice %39 {offsets = [0, 0], sizes = [8, 8], strides = [1, 1]} : vector<8x32xf32> to vector<8x8xf32>
    %43 = vector.extract_strided_slice %40 {offsets = [0, 0], sizes = [8, 8], strides = [1, 1]} : vector<8x32xf32> to vector<8x8xf32>
    %44 = arith.truncf %42 : vector<8x8xf32> to vector<8x8xbf16>
    %45 = arith.truncf %43 : vector<8x8xf32> to vector<8x8xbf16>
    %cst_27 = arith.constant dense<0.000000e+00> : vector<8x8xf32>
    %46 = tpu.matmul %44, %45, %cst_27 {dimension_numbers = #tpu.dot_dimension_numbers<[1], [1], [0], [0], [0, 0, 1, 0], [], []>} : vector<8x8xbf16>, vector<8x8xbf16>, vector<8x8xf32> -> vector<8x8xf32>
    %cst_28 = arith.constant 0.353553385 : f32
    %47 = vector.broadcast %cst_28 : f32 to vector<8x8xf32>
    %48 = arith.mulf %46, %47 : vector<8x8xf32>
    %49 = arith.addf %48, %21 : vector<8x8xf32>
    %cst_29 = arith.constant dense<0xFF800000> : vector<8xf32>
    %50 = vector.multi_reduction <maximumf>, %49, %cst_29 [1] : vector<8x8xf32> to vector<8xf32>
    %51 = vector.shape_cast %50 : vector<8xf32> to vector<8x1xf32>
    %52 = vector.broadcast %51 : vector<8x1xf32> to vector<8x8xf32>
    %53 = arith.subf %49, %52 : vector<8x8xf32>
    %54 = math.exp %53 : vector<8x8xf32>
    %cst_30 = arith.constant dense<0.000000e+00> : vector<8xf32>
    %55 = vector.multi_reduction <add>, %54, %cst_30 [1] : vector<8x8xf32> to vector<8xf32>
    %56 = vector.shape_cast %55 : vector<8xf32> to vector<8x1xf32>
    %57 = vector.broadcast %56 : vector<8x1xf32> to vector<8x8xf32>
    %58 = arith.divf %54, %57 : vector<8x8xf32>
    %c0_31 = arith.constant 0 : index
    %c0_32 = arith.constant 0 : index
    %c0_33 = arith.constant 0 : index
    %c0_34 = arith.constant 0 : index
    %c0_35 = arith.constant 0 : index
    %59 = vector.load %arg22[%c0_31, %c0_32, %c0_33, %c0_34, %c0_35] : memref<1x1x4x8x8xf32, #tpu.memory_space<vmem>>, vector<1x1x1x8x8xf32>
    %60 = vector.shape_cast %59 : vector<1x1x1x8x8xf32> to vector<8x8xf32>
    %61 = vector.shape_cast %58 : vector<8x8xf32> to vector<1x1x1x8x8xf32>
    tpu.vector_store %arg22[%c0_31, %c0_32, %c0_33, %c0_34, %c0_35], %61 {strides = array<i32>} : memref<1x1x4x8x8xf32, #tpu.memory_space<vmem>>, vector<1x1x1x8x8xf32>,
    %62 = vector.extract_strided_slice %41 {offsets = [0, 0], sizes = [8, 8], strides = [1, 1]} : vector<8x32xf32> to vector<8x8xf32>
    %63 = arith.truncf %58 : vector<8x8xf32> to vector<8x8xbf16>
    %64 = arith.truncf %62 : vector<8x8xf32> to vector<8x8xbf16>
    %cst_36 = arith.constant dense<0.000000e+00> : vector<8x8xf32>
    %65 = tpu.matmul %63, %64, %cst_36 {dimension_numbers = #tpu.dot_dimension_numbers<[1], [0], [0], [1], [0, 0, 1, 1], [], []>} : vector<8x8xbf16>, vector<8x8xbf16>, vector<8x8xf32> -> vector<8x8xf32>
    %66 = vector.extract_strided_slice %39 {offsets = [0, 8], sizes = [8, 8], strides = [1, 1]} : vector<8x32xf32> to vector<8x8xf32>
    %67 = vector.extract_strided_slice %40 {offsets = [0, 8], sizes = [8, 8], strides = [1, 1]} : vector<8x32xf32> to vector<8x8xf32>
    %68 = arith.truncf %66 : vector<8x8xf32> to vector<8x8xbf16>
    %69 = arith.truncf %67 : vector<8x8xf32> to vector<8x8xbf16>
    %cst_37 = arith.constant dense<0.000000e+00> : vector<8x8xf32>
    %70 = tpu.matmul %68, %69, %cst_37 {dimension_numbers = #tpu.dot_dimension_numbers<[1], [1], [0], [0], [0, 0, 1, 0], [], []>} : vector<8x8xbf16>, vector<8x8xbf16>, vector<8x8xf32> -> vector<8x8xf32>
    %cst_38 = arith.constant 0.353553385 : f32
    %71 = vector.broadcast %cst_38 : f32 to vector<8x8xf32>
    %72 = arith.mulf %70, %71 : vector<8x8xf32>
    %73 = arith.addf %72, %21 : vector<8x8xf32>
    %cst_39 = arith.constant dense<0xFF800000> : vector<8xf32>
    %74 = vector.multi_reduction <maximumf>, %73, %cst_39 [1] : vector<8x8xf32> to vector<8xf32>
    %75 = vector.shape_cast %74 : vector<8xf32> to vector<8x1xf32>
    %76 = vector.broadcast %75 : vector<8x1xf32> to vector<8x8xf32>
    %77 = arith.subf %73, %76 : vector<8x8xf32>
    %78 = math.exp %77 : vector<8x8xf32>
    %cst_40 = arith.constant dense<0.000000e+00> : vector<8xf32>
    %79 = vector.multi_reduction <add>, %78, %cst_40 [1] : vector<8x8xf32> to vector<8xf32>
    %80 = vector.shape_cast %79 : vector<8xf32> to vector<8x1xf32>
    %81 = vector.broadcast %80 : vector<8x1xf32> to vector<8x8xf32>
    %82 = arith.divf %78, %81 : vector<8x8xf32>
    %c0_41 = arith.constant 0 : index
    %c0_42 = arith.constant 0 : index
    %c1 = arith.constant 1 : index
    %c0_43 = arith.constant 0 : index
    %c0_44 = arith.constant 0 : index
    %83 = vector.load %arg22[%c0_41, %c0_42, %c1, %c0_43, %c0_44] : memref<1x1x4x8x8xf32, #tpu.memory_space<vmem>>, vector<1x1x1x8x8xf32>
    %84 = vector.shape_cast %83 : vector<1x1x1x8x8xf32> to vector<8x8xf32>
    %85 = vector.shape_cast %82 : vector<8x8xf32> to vector<1x1x1x8x8xf32>
    tpu.vector_store %arg22[%c0_41, %c0_42, %c1, %c0_43, %c0_44], %85 {strides = array<i32>} : memref<1x1x4x8x8xf32, #tpu.memory_space<vmem>>, vector<1x1x1x8x8xf32>,
    %86 = vector.extract_strided_slice %41 {offsets = [0, 8], sizes = [8, 8], strides = [1, 1]} : vector<8x32xf32> to vector<8x8xf32>
    %87 = arith.truncf %82 : vector<8x8xf32> to vector<8x8xbf16>
    %88 = arith.truncf %86 : vector<8x8xf32> to vector<8x8xbf16>
    %cst_45 = arith.constant dense<0.000000e+00> : vector<8x8xf32>
    %89 = tpu.matmul %87, %88, %cst_45 {dimension_numbers = #tpu.dot_dimension_numbers<[1], [0], [0], [1], [0, 0, 1, 1], [], []>} : vector<8x8xbf16>, vector<8x8xbf16>, vector<8x8xf32> -> vector<8x8xf32>
    %90 = vector.extract_strided_slice %39 {offsets = [0, 16], sizes = [8, 8], strides = [1, 1]} : vector<8x32xf32> to vector<8x8xf32>
    %91 = vector.extract_strided_slice %40 {offsets = [0, 16], sizes = [8, 8], strides = [1, 1]} : vector<8x32xf32> to vector<8x8xf32>
    %92 = arith.truncf %90 : vector<8x8xf32> to vector<8x8xbf16>
    %93 = arith.truncf %91 : vector<8x8xf32> to vector<8x8xbf16>
    %cst_46 = arith.constant dense<0.000000e+00> : vector<8x8xf32>
    %94 = tpu.matmul %92, %93, %cst_46 {dimension_numbers = #tpu.dot_dimension_numbers<[1], [1], [0], [0], [0, 0, 1, 0], [], []>} : vector<8x8xbf16>, vector<8x8xbf16>, vector<8x8xf32> -> vector<8x8xf32>
    %cst_47 = arith.constant 0.353553385 : f32
    %95 = vector.broadcast %cst_47 : f32 to vector<8x8xf32>
    %96 = arith.mulf %94, %95 : vector<8x8xf32>
    %97 = arith.addf %96, %21 : vector<8x8xf32>
    %cst_48 = arith.constant dense<0xFF800000> : vector<8xf32>
    %98 = vector.multi_reduction <maximumf>, %97, %cst_48 [1] : vector<8x8xf32> to vector<8xf32>
    %99 = vector.shape_cast %98 : vector<8xf32> to vector<8x1xf32>
    %100 = vector.broadcast %99 : vector<8x1xf32> to vector<8x8xf32>
    %101 = arith.subf %97, %100 : vector<8x8xf32>
    %102 = math.exp %101 : vector<8x8xf32>
    %cst_49 = arith.constant dense<0.000000e+00> : vector<8xf32>
    %103 = vector.multi_reduction <add>, %102, %cst_49 [1] : vector<8x8xf32> to vector<8xf32>
    %104 = vector.shape_cast %103 : vector<8xf32> to vector<8x1xf32>
    %105 = vector.broadcast %104 : vector<8x1xf32> to vector<8x8xf32>
    %106 = arith.divf %102, %105 : vector<8x8xf32>
    %c0_50 = arith.constant 0 : index
    %c0_51 = arith.constant 0 : index
    %c2 = arith.constant 2 : index
    %c0_52 = arith.constant 0 : index
    %c0_53 = arith.constant 0 : index
    %107 = vector.load %arg22[%c0_50, %c0_51, %c2, %c0_52, %c0_53] : memref<1x1x4x8x8xf32, #tpu.memory_space<vmem>>, vector<1x1x1x8x8xf32>
    %108 = vector.shape_cast %107 : vector<1x1x1x8x8xf32> to vector<8x8xf32>
    %109 = vector.shape_cast %106 : vector<8x8xf32> to vector<1x1x1x8x8xf32>
    tpu.vector_store %arg22[%c0_50, %c0_51, %c2, %c0_52, %c0_53], %109 {strides = array<i32>} : memref<1x1x4x8x8xf32, #tpu.memory_space<vmem>>, vector<1x1x1x8x8xf32>,
    %110 = vector.extract_strided_slice %41 {offsets = [0, 16], sizes = [8, 8], strides = [1, 1]} : vector<8x32xf32> to vector<8x8xf32>
    %111 = arith.truncf %106 : vector<8x8xf32> to vector<8x8xbf16>
    %112 = arith.truncf %110 : vector<8x8xf32> to vector<8x8xbf16>
    %cst_54 = arith.constant dense<0.000000e+00> : vector<8x8xf32>
    %113 = tpu.matmul %111, %112, %cst_54 {dimension_numbers = #tpu.dot_dimension_numbers<[1], [0], [0], [1], [0, 0, 1, 1], [], []>} : vector<8x8xbf16>, vector<8x8xbf16>, vector<8x8xf32> -> vector<8x8xf32>
    %114 = vector.extract_strided_slice %39 {offsets = [0, 24], sizes = [8, 8], strides = [1, 1]} : vector<8x32xf32> to vector<8x8xf32>
    %115 = vector.extract_strided_slice %40 {offsets = [0, 24], sizes = [8, 8], strides = [1, 1]} : vector<8x32xf32> to vector<8x8xf32>
    %116 = arith.truncf %114 : vector<8x8xf32> to vector<8x8xbf16>
    %117 = arith.truncf %115 : vector<8x8xf32> to vector<8x8xbf16>
    %cst_55 = arith.constant dense<0.000000e+00> : vector<8x8xf32>
    %118 = tpu.matmul %116, %117, %cst_55 {dimension_numbers = #tpu.dot_dimension_numbers<[1], [1], [0], [0], [0, 0, 1, 0], [], []>} : vector<8x8xbf16>, vector<8x8xbf16>, vector<8x8xf32> -> vector<8x8xf32>
    %cst_56 = arith.constant 0.353553385 : f32
    %119 = vector.broadcast %cst_56 : f32 to vector<8x8xf32>
    %120 = arith.mulf %118, %119 : vector<8x8xf32>
    %121 = arith.addf %120, %21 : vector<8x8xf32>
    %cst_57 = arith.constant dense<0xFF800000> : vector<8xf32>
    %122 = vector.multi_reduction <maximumf>, %121, %cst_57 [1] : vector<8x8xf32> to vector<8xf32>
    %123 = vector.shape_cast %122 : vector<8xf32> to vector<8x1xf32>
    %124 = vector.broadcast %123 : vector<8x1xf32> to vector<8x8xf32>
    %125 = arith.subf %121, %124 : vector<8x8xf32>
    %126 = math.exp %125 : vector<8x8xf32>
    %cst_58 = arith.constant dense<0.000000e+00> : vector<8xf32>
    %127 = vector.multi_reduction <add>, %126, %cst_58 [1] : vector<8x8xf32> to vector<8xf32>
    %128 = vector.shape_cast %127 : vector<8xf32> to vector<8x1xf32>
    %129 = vector.broadcast %128 : vector<8x1xf32> to vector<8x8xf32>
    %130 = arith.divf %126, %129 : vector<8x8xf32>
    %c0_59 = arith.constant 0 : index
    %c0_60 = arith.constant 0 : index
    %c3 = arith.constant 3 : index
    %c0_61 = arith.constant 0 : index
    %c0_62 = arith.constant 0 : index
    %131 = vector.load %arg22[%c0_59, %c0_60, %c3, %c0_61, %c0_62] : memref<1x1x4x8x8xf32, #tpu.memory_space<vmem>>, vector<1x1x1x8x8xf32>
    %132 = vector.shape_cast %131 : vector<1x1x1x8x8xf32> to vector<8x8xf32>
    %133 = vector.shape_cast %130 : vector<8x8xf32> to vector<1x1x1x8x8xf32>
    tpu.vector_store %arg22[%c0_59, %c0_60, %c3, %c0_61, %c0_62], %133 {strides = array<i32>} : memref<1x1x4x8x8xf32, #tpu.memory_space<vmem>>, vector<1x1x1x8x8xf32>,
    %134 = vector.extract_strided_slice %41 {offsets = [0, 24], sizes = [8, 8], strides = [1, 1]} : vector<8x32xf32> to vector<8x8xf32>
    %135 = arith.truncf %130 : vector<8x8xf32> to vector<8x8xbf16>
    %136 = arith.truncf %134 : vector<8x8xf32> to vector<8x8xbf16>
    %cst_63 = arith.constant dense<0.000000e+00> : vector<8x8xf32>
    %137 = tpu.matmul %135, %136, %cst_63 {dimension_numbers = #tpu.dot_dimension_numbers<[1], [0], [0], [1], [0, 0, 1, 1], [], []>} : vector<8x8xbf16>, vector<8x8xbf16>, vector<8x8xf32> -> vector<8x8xf32>
    %138 = tpu.concatenate %65, %89, %113, %137 in 1 : vector<8x8xf32>, vector<8x8xf32>, vector<8x8xf32>, vector<8x8xf32> -> vector<8x32xf32>
    %c0_64 = arith.constant 0 : index
    %c0_65 = arith.constant 0 : index
    %c0_66 = arith.constant 0 : index
    %139 = vector.load %arg8[%c0_64, %c0_65, %c0_66] : memref<1x32x32xbf16, #tpu.memory_space<vmem>>, vector<1x32x32xbf16>
    %140 = vector.shape_cast %139 : vector<1x32x32xbf16> to vector<32x32xbf16>
    %141 = arith.truncf %138 : vector<8x32xf32> to vector<8x32xbf16>
    %cst_67 = arith.constant dense<0.000000e+00> : vector<8x32xf32>
    %142 = tpu.matmul %141, %140, %cst_67 {dimension_numbers = #tpu.dot_dimension_numbers<[1], [0], [0], [1], [0, 0, 1, 1], [], []>} : vector<8x32xbf16>, vector<32x32xbf16>, vector<8x32xf32> -> vector<8x32xf32>
    %c0_68 = arith.constant 0 : index
    %c0_69 = arith.constant 0 : index
    %c0_70 = arith.constant 0 : index
    %143 = vector.load %arg9[%c0_68, %c0_69, %c0_70] : memref<1x1x32xf32, #tpu.memory_space<vmem>>, vector<1x1x32xf32>
    %144 = vector.shape_cast %143 : vector<1x1x32xf32> to vector<1x32xf32>
    %145 = vector.broadcast %144 : vector<1x32xf32> to vector<8x32xf32>
    %146 = arith.addf %142, %145 : vector<8x32xf32>
    %147 = arith.addf %4, %146 : vector<8x32xf32>
    %148 = vector.extract_strided_slice %8 {offsets = [0, 0], sizes = [1, 32], strides = [1, 1]} : vector<6x32xf32> to vector<1x32xf32>
    %149 = vector.extract_strided_slice %8 {offsets = [1, 0], sizes = [1, 32], strides = [1, 1]} : vector<6x32xf32> to vector<1x32xf32>
    %cst_71 = arith.constant dense<0.000000e+00> : vector<8xf32>
    %150 = vector.multi_reduction <add>, %147, %cst_71 [1] : vector<8x32xf32> to vector<8xf32>
    %151 = vector.shape_cast %150 : vector<8xf32> to vector<8x1xf32>
    %cst_72 = arith.constant 3.200000e+01 : f32
    %152 = vector.broadcast %cst_72 : f32 to vector<8x1xf32>
    %153 = arith.divf %151, %152 : vector<8x1xf32>
    %154 = vector.broadcast %153 : vector<8x1xf32> to vector<8x32xf32>
    %155 = arith.subf %147, %154 : vector<8x32xf32>
    %156 = arith.mulf %155, %155 : vector<8x32xf32>
    %cst_73 = arith.constant dense<0.000000e+00> : vector<8xf32>
    %157 = vector.multi_reduction <add>, %156, %cst_73 [1] : vector<8x32xf32> to vector<8xf32>
    %158 = vector.shape_cast %157 : vector<8xf32> to vector<8x1xf32>
    %cst_74 = arith.constant 3.200000e+01 : f32
    %159 = vector.broadcast %cst_74 : f32 to vector<8x1xf32>
    %160 = arith.divf %158, %159 : vector<8x1xf32>
    %161 = vector.broadcast %153 : vector<8x1xf32> to vector<8x32xf32>
    %162 = arith.subf %147, %161 : vector<8x32xf32>
    %cst_75 = arith.constant 9.99999996E-13 : f32
    %163 = vector.broadcast %cst_75 : f32 to vector<8x1xf32>
    %164 = arith.addf %160, %163 : vector<8x1xf32>
    %165 = math.rsqrt %164 : vector<8x1xf32>
    %166 = vector.broadcast %165 : vector<8x1xf32> to vector<8x32xf32>
    %167 = arith.mulf %162, %166 : vector<8x32xf32>
    %168 = vector.broadcast %148 : vector<1x32xf32> to vector<8x32xf32>
    %169 = arith.mulf %167, %168 : vector<8x32xf32>
    %170 = vector.broadcast %149 : vector<1x32xf32> to vector<8x32xf32>
    %171 = arith.addf %169, %170 : vector<8x32xf32>
    %c0_76 = arith.constant 0 : index
    %c0_77 = arith.constant 0 : index
    %c0_78 = arith.constant 0 : index
    %172 = vector.load %arg10[%c0_76, %c0_77, %c0_78] : memref<1x32x32xbf16, #tpu.memory_space<vmem>>, vector<1x32x32xbf16>
    %173 = vector.shape_cast %172 : vector<1x32x32xbf16> to vector<32x32xbf16>
    %174 = arith.truncf %171 : vector<8x32xf32> to vector<8x32xbf16>
    %cst_79 = arith.constant dense<0.000000e+00> : vector<8x32xf32>
    %175 = tpu.matmul %174, %173, %cst_79 {dimension_numbers = #tpu.dot_dimension_numbers<[1], [0], [0], [1], [0, 0, 1, 1], [], []>} : vector<8x32xbf16>, vector<32x32xbf16>, vector<8x32xf32> -> vector<8x32xf32>
    %c0_80 = arith.constant 0 : index
    %c0_81 = arith.constant 0 : index
    %c0_82 = arith.constant 0 : index
    %176 = vector.load %arg11[%c0_80, %c0_81, %c0_82] : memref<1x1x32xf32, #tpu.memory_space<vmem>>, vector<1x1x32xf32>
    %177 = vector.shape_cast %176 : vector<1x1x32xf32> to vector<1x32xf32>
    %178 = vector.broadcast %177 : vector<1x32xf32> to vector<8x32xf32>
    %179 = arith.addf %175, %178 : vector<8x32xf32>
    %c0_83 = arith.constant 0 : index
    %c0_84 = arith.constant 0 : index
    %c0_85 = arith.constant 0 : index
    %180 = vector.load %arg12[%c0_83, %c0_84, %c0_85] : memref<1x32x64xbf16, #tpu.memory_space<vmem>>, vector<1x32x64xbf16>
    %181 = vector.shape_cast %180 : vector<1x32x64xbf16> to vector<32x64xbf16>
    %182 = arith.truncf %6 : vector<8x32xf32> to vector<8x32xbf16>
    %cst_86 = arith.constant dense<0.000000e+00> : vector<8x64xf32>
    %183 = tpu.matmul %182, %181, %cst_86 {dimension_numbers = #tpu.dot_dimension_numbers<[1], [0], [0], [1], [0, 0, 1, 1], [], []>} : vector<8x32xbf16>, vector<32x64xbf16>, vector<8x64xf32> -> vector<8x64xf32>
    %c0_87 = arith.constant 0 : index
    %c0_88 = arith.constant 0 : index
    %c0_89 = arith.constant 0 : index
    %184 = vector.load %arg13[%c0_87, %c0_88, %c0_89] : memref<1x1x64xf32, #tpu.memory_space<vmem>>, vector<1x1x64xf32>
    %185 = vector.shape_cast %184 : vector<1x1x64xf32> to vector<1x64xf32>
    %186 = vector.broadcast %185 : vector<1x64xf32> to vector<8x64xf32>
    %187 = arith.addf %183, %186 : vector<8x64xf32>
    %188 = vector.extract_strided_slice %187 {offsets = [0, 0], sizes = [8, 32], strides = [1, 1]} : vector<8x64xf32> to vector<8x32xf32>
    %189 = vector.extract_strided_slice %187 {offsets = [0, 32], sizes = [8, 32], strides = [1, 1]} : vector<8x64xf32> to vector<8x32xf32>
    %190 = vector.extract_strided_slice %179 {offsets = [0, 0], sizes = [8, 8], strides = [1, 1]} : vector<8x32xf32> to vector<8x8xf32>
    %191 = vector.extract_strided_slice %188 {offsets = [0, 0], sizes = [8, 8], strides = [1, 1]} : vector<8x32xf32> to vector<8x8xf32>
    %192 = arith.truncf %190 : vector<8x8xf32> to vector<8x8xbf16>
    %193 = arith.truncf %191 : vector<8x8xf32> to vector<8x8xbf16>
    %cst_90 = arith.constant dense<0.000000e+00> : vector<8x8xf32>
    %194 = tpu.matmul %192, %193, %cst_90 {dimension_numbers = #tpu.dot_dimension_numbers<[1], [1], [0], [0], [0, 0, 1, 0], [], []>} : vector<8x8xbf16>, vector<8x8xbf16>, vector<8x8xf32> -> vector<8x8xf32>
    %cst_91 = arith.constant 0.353553385 : f32
    %195 = vector.broadcast %cst_91 : f32 to vector<8x8xf32>
    %196 = arith.mulf %194, %195 : vector<8x8xf32>
    %197 = arith.addf %196, %30 : vector<8x8xf32>
    %cst_92 = arith.constant dense<0xFF800000> : vector<8xf32>
    %198 = vector.multi_reduction <maximumf>, %197, %cst_92 [1] : vector<8x8xf32> to vector<8xf32>
    %199 = vector.shape_cast %198 : vector<8xf32> to vector<8x1xf32>
    %200 = vector.broadcast %199 : vector<8x1xf32> to vector<8x8xf32>
    %201 = arith.subf %197, %200 : vector<8x8xf32>
    %202 = math.exp %201 : vector<8x8xf32>
    %cst_93 = arith.constant dense<0.000000e+00> : vector<8xf32>
    %203 = vector.multi_reduction <add>, %202, %cst_93 [1] : vector<8x8xf32> to vector<8xf32>
    %204 = vector.shape_cast %203 : vector<8xf32> to vector<8x1xf32>
    %205 = vector.broadcast %204 : vector<8x1xf32> to vector<8x8xf32>
    %206 = arith.divf %202, %205 : vector<8x8xf32>
    %c0_94 = arith.constant 0 : index
    %c0_95 = arith.constant 0 : index
    %c0_96 = arith.constant 0 : index
    %c0_97 = arith.constant 0 : index
    %c0_98 = arith.constant 0 : index
    %207 = vector.load %arg23[%c0_94, %c0_95, %c0_96, %c0_97, %c0_98] : memref<1x1x4x8x8xf32, #tpu.memory_space<vmem>>, vector<1x1x1x8x8xf32>
    %208 = vector.shape_cast %207 : vector<1x1x1x8x8xf32> to vector<8x8xf32>
    %209 = vector.shape_cast %206 : vector<8x8xf32> to vector<1x1x1x8x8xf32>
    tpu.vector_store %arg23[%c0_94, %c0_95, %c0_96, %c0_97, %c0_98], %209 {strides = array<i32>} : memref<1x1x4x8x8xf32, #tpu.memory_space<vmem>>, vector<1x1x1x8x8xf32>,
    %210 = vector.extract_strided_slice %189 {offsets = [0, 0], sizes = [8, 8], strides = [1, 1]} : vector<8x32xf32> to vector<8x8xf32>
    %211 = arith.truncf %206 : vector<8x8xf32> to vector<8x8xbf16>
    %212 = arith.truncf %210 : vector<8x8xf32> to vector<8x8xbf16>
    %cst_99 = arith.constant dense<0.000000e+00> : vector<8x8xf32>
    %213 = tpu.matmul %211, %212, %cst_99 {dimension_numbers = #tpu.dot_dimension_numbers<[1], [0], [0], [1], [0, 0, 1, 1], [], []>} : vector<8x8xbf16>, vector<8x8xbf16>, vector<8x8xf32> -> vector<8x8xf32>
    %214 = vector.extract_strided_slice %179 {offsets = [0, 8], sizes = [8, 8], strides = [1, 1]} : vector<8x32xf32> to vector<8x8xf32>
    %215 = vector.extract_strided_slice %188 {offsets = [0, 8], sizes = [8, 8], strides = [1, 1]} : vector<8x32xf32> to vector<8x8xf32>
    %216 = arith.truncf %214 : vector<8x8xf32> to vector<8x8xbf16>
    %217 = arith.truncf %215 : vector<8x8xf32> to vector<8x8xbf16>
    %cst_100 = arith.constant dense<0.000000e+00> : vector<8x8xf32>
    %218 = tpu.matmul %216, %217, %cst_100 {dimension_numbers = #tpu.dot_dimension_numbers<[1], [1], [0], [0], [0, 0, 1, 0], [], []>} : vector<8x8xbf16>, vector<8x8xbf16>, vector<8x8xf32> -> vector<8x8xf32>
    %cst_101 = arith.constant 0.353553385 : f32
    %219 = vector.broadcast %cst_101 : f32 to vector<8x8xf32>
    %220 = arith.mulf %218, %219 : vector<8x8xf32>
    %221 = arith.addf %220, %30 : vector<8x8xf32>
    %cst_102 = arith.constant dense<0xFF800000> : vector<8xf32>
    %222 = vector.multi_reduction <maximumf>, %221, %cst_102 [1] : vector<8x8xf32> to vector<8xf32>
    %223 = vector.shape_cast %222 : vector<8xf32> to vector<8x1xf32>
    %224 = vector.broadcast %223 : vector<8x1xf32> to vector<8x8xf32>
    %225 = arith.subf %221, %224 : vector<8x8xf32>
    %226 = math.exp %225 : vector<8x8xf32>
    %cst_103 = arith.constant dense<0.000000e+00> : vector<8xf32>
    %227 = vector.multi_reduction <add>, %226, %cst_103 [1] : vector<8x8xf32> to vector<8xf32>
    %228 = vector.shape_cast %227 : vector<8xf32> to vector<8x1xf32>
    %229 = vector.broadcast %228 : vector<8x1xf32> to vector<8x8xf32>
    %230 = arith.divf %226, %229 : vector<8x8xf32>
    %c0_104 = arith.constant 0 : index
    %c0_105 = arith.constant 0 : index
    %c1_106 = arith.constant 1 : index
    %c0_107 = arith.constant 0 : index
    %c0_108 = arith.constant 0 : index
    %231 = vector.load %arg23[%c0_104, %c0_105, %c1_106, %c0_107, %c0_108] : memref<1x1x4x8x8xf32, #tpu.memory_space<vmem>>, vector<1x1x1x8x8xf32>
    %232 = vector.shape_cast %231 : vector<1x1x1x8x8xf32> to vector<8x8xf32>
    %233 = vector.shape_cast %230 : vector<8x8xf32> to vector<1x1x1x8x8xf32>
    tpu.vector_store %arg23[%c0_104, %c0_105, %c1_106, %c0_107, %c0_108], %233 {strides = array<i32>} : memref<1x1x4x8x8xf32, #tpu.memory_space<vmem>>, vector<1x1x1x8x8xf32>,
    %234 = vector.extract_strided_slice %189 {offsets = [0, 8], sizes = [8, 8], strides = [1, 1]} : vector<8x32xf32> to vector<8x8xf32>
    %235 = arith.truncf %230 : vector<8x8xf32> to vector<8x8xbf16>
    %236 = arith.truncf %234 : vector<8x8xf32> to vector<8x8xbf16>
    %cst_109 = arith.constant dense<0.000000e+00> : vector<8x8xf32>
    %237 = tpu.matmul %235, %236, %cst_109 {dimension_numbers = #tpu.dot_dimension_numbers<[1], [0], [0], [1], [0, 0, 1, 1], [], []>} : vector<8x8xbf16>, vector<8x8xbf16>, vector<8x8xf32> -> vector<8x8xf32>
    %238 = vector.extract_strided_slice %179 {offsets = [0, 16], sizes = [8, 8], strides = [1, 1]} : vector<8x32xf32> to vector<8x8xf32>
    %239 = vector.extract_strided_slice %188 {offsets = [0, 16], sizes = [8, 8], strides = [1, 1]} : vector<8x32xf32> to vector<8x8xf32>
    %240 = arith.truncf %238 : vector<8x8xf32> to vector<8x8xbf16>
    %241 = arith.truncf %239 : vector<8x8xf32> to vector<8x8xbf16>
    %cst_110 = arith.constant dense<0.000000e+00> : vector<8x8xf32>
    %242 = tpu.matmul %240, %241, %cst_110 {dimension_numbers = #tpu.dot_dimension_numbers<[1], [1], [0], [0], [0, 0, 1, 0], [], []>} : vector<8x8xbf16>, vector<8x8xbf16>, vector<8x8xf32> -> vector<8x8xf32>
    %cst_111 = arith.constant 0.353553385 : f32
    %243 = vector.broadcast %cst_111 : f32 to vector<8x8xf32>
    %244 = arith.mulf %242, %243 : vector<8x8xf32>
    %245 = arith.addf %244, %30 : vector<8x8xf32>
    %cst_112 = arith.constant dense<0xFF800000> : vector<8xf32>
    %246 = vector.multi_reduction <maximumf>, %245, %cst_112 [1] : vector<8x8xf32> to vector<8xf32>
    %247 = vector.shape_cast %246 : vector<8xf32> to vector<8x1xf32>
    %248 = vector.broadcast %247 : vector<8x1xf32> to vector<8x8xf32>
    %249 = arith.subf %245, %248 : vector<8x8xf32>
    %250 = math.exp %249 : vector<8x8xf32>
    %cst_113 = arith.constant dense<0.000000e+00> : vector<8xf32>
    %251 = vector.multi_reduction <add>, %250, %cst_113 [1] : vector<8x8xf32> to vector<8xf32>
    %252 = vector.shape_cast %251 : vector<8xf32> to vector<8x1xf32>
    %253 = vector.broadcast %252 : vector<8x1xf32> to vector<8x8xf32>
    %254 = arith.divf %250, %253 : vector<8x8xf32>
    %c0_114 = arith.constant 0 : index
    %c0_115 = arith.constant 0 : index
    %c2_116 = arith.constant 2 : index
    %c0_117 = arith.constant 0 : index
    %c0_118 = arith.constant 0 : index
    %255 = vector.load %arg23[%c0_114, %c0_115, %c2_116, %c0_117, %c0_118] : memref<1x1x4x8x8xf32, #tpu.memory_space<vmem>>, vector<1x1x1x8x8xf32>
    %256 = vector.shape_cast %255 : vector<1x1x1x8x8xf32> to vector<8x8xf32>
    %257 = vector.shape_cast %254 : vector<8x8xf32> to vector<1x1x1x8x8xf32>
    tpu.vector_store %arg23[%c0_114, %c0_115, %c2_116, %c0_117, %c0_118], %257 {strides = array<i32>} : memref<1x1x4x8x8xf32, #tpu.memory_space<vmem>>, vector<1x1x1x8x8xf32>,
    %258 = vector.extract_strided_slice %189 {offsets = [0, 16], sizes = [8, 8], strides = [1, 1]} : vector<8x32xf32> to vector<8x8xf32>
    %259 = arith.truncf %254 : vector<8x8xf32> to vector<8x8xbf16>
    %260 = arith.truncf %258 : vector<8x8xf32> to vector<8x8xbf16>
    %cst_119 = arith.constant dense<0.000000e+00> : vector<8x8xf32>
    %261 = tpu.matmul %259, %260, %cst_119 {dimension_numbers = #tpu.dot_dimension_numbers<[1], [0], [0], [1], [0, 0, 1, 1], [], []>} : vector<8x8xbf16>, vector<8x8xbf16>, vector<8x8xf32> -> vector<8x8xf32>
    %262 = vector.extract_strided_slice %179 {offsets = [0, 24], sizes = [8, 8], strides = [1, 1]} : vector<8x32xf32> to vector<8x8xf32>
    %263 = vector.extract_strided_slice %188 {offsets = [0, 24], sizes = [8, 8], strides = [1, 1]} : vector<8x32xf32> to vector<8x8xf32>
    %264 = arith.truncf %262 : vector<8x8xf32> to vector<8x8xbf16>
    %265 = arith.truncf %263 : vector<8x8xf32> to vector<8x8xbf16>
    %cst_120 = arith.constant dense<0.000000e+00> : vector<8x8xf32>
    %266 = tpu.matmul %264, %265, %cst_120 {dimension_numbers = #tpu.dot_dimension_numbers<[1], [1], [0], [0], [0, 0, 1, 0], [], []>} : vector<8x8xbf16>, vector<8x8xbf16>, vector<8x8xf32> -> vector<8x8xf32>
    %cst_121 = arith.constant 0.353553385 : f32
    %267 = vector.broadcast %cst_121 : f32 to vector<8x8xf32>
    %268 = arith.mulf %266, %267 : vector<8x8xf32>
    %269 = arith.addf %268, %30 : vector<8x8xf32>
    %cst_122 = arith.constant dense<0xFF800000> : vector<8xf32>
    %270 = vector.multi_reduction <maximumf>, %269, %cst_122 [1] : vector<8x8xf32> to vector<8xf32>
    %271 = vector.shape_cast %270 : vector<8xf32> to vector<8x1xf32>
    %272 = vector.broadcast %271 : vector<8x1xf32> to vector<8x8xf32>
    %273 = arith.subf %269, %272 : vector<8x8xf32>
    %274 = math.exp %273 : vector<8x8xf32>
    %cst_123 = arith.constant dense<0.000000e+00> : vector<8xf32>
    %275 = vector.multi_reduction <add>, %274, %cst_123 [1] : vector<8x8xf32> to vector<8xf32>
    %276 = vector.shape_cast %275 : vector<8xf32> to vector<8x1xf32>
    %277 = vector.broadcast %276 : vector<8x1xf32> to vector<8x8xf32>
    %278 = arith.divf %274, %277 : vector<8x8xf32>
    %c0_124 = arith.constant 0 : index
    %c0_125 = arith.constant 0 : index
    %c3_126 = arith.constant 3 : index
    %c0_127 = arith.constant 0 : index
    %c0_128 = arith.constant 0 : index
    %279 = vector.load %arg23[%c0_124, %c0_125, %c3_126, %c0_127, %c0_128] : memref<1x1x4x8x8xf32, #tpu.memory_space<vmem>>, vector<1x1x1x8x8xf32>
    %280 = vector.shape_cast %279 : vector<1x1x1x8x8xf32> to vector<8x8xf32>
    %281 = vector.shape_cast %278 : vector<8x8xf32> to vector<1x1x1x8x8xf32>
    tpu.vector_store %arg23[%c0_124, %c0_125, %c3_126, %c0_127, %c0_128], %281 {strides = array<i32>} : memref<1x1x4x8x8xf32, #tpu.memory_space<vmem>>, vector<1x1x1x8x8xf32>,
    %282 = vector.extract_strided_slice %189 {offsets = [0, 24], sizes = [8, 8], strides = [1, 1]} : vector<8x32xf32> to vector<8x8xf32>
    %283 = arith.truncf %278 : vector<8x8xf32> to vector<8x8xbf16>
    %284 = arith.truncf %282 : vector<8x8xf32> to vector<8x8xbf16>
    %cst_129 = arith.constant dense<0.000000e+00> : vector<8x8xf32>
    %285 = tpu.matmul %283, %284, %cst_129 {dimension_numbers = #tpu.dot_dimension_numbers<[1], [0], [0], [1], [0, 0, 1, 1], [], []>} : vector<8x8xbf16>, vector<8x8xbf16>, vector<8x8xf32> -> vector<8x8xf32>
    %286 = tpu.concatenate %213, %237, %261, %285 in 1 : vector<8x8xf32>, vector<8x8xf32>, vector<8x8xf32>, vector<8x8xf32> -> vector<8x32xf32>
    %c0_130 = arith.constant 0 : index
    %c0_131 = arith.constant 0 : index
    %c0_132 = arith.constant 0 : index
    %287 = vector.load %arg14[%c0_130, %c0_131, %c0_132] : memref<1x32x32xbf16, #tpu.memory_space<vmem>>, vector<1x32x32xbf16>
    %288 = vector.shape_cast %287 : vector<1x32x32xbf16> to vector<32x32xbf16>
    %289 = arith.truncf %286 : vector<8x32xf32> to vector<8x32xbf16>
    %cst_133 = arith.constant dense<0.000000e+00> : vector<8x32xf32>
    %290 = tpu.matmul %289, %288, %cst_133 {dimension_numbers = #tpu.dot_dimension_numbers<[1], [0], [0], [1], [0, 0, 1, 1], [], []>} : vector<8x32xbf16>, vector<32x32xbf16>, vector<8x32xf32> -> vector<8x32xf32>
    %c0_134 = arith.constant 0 : index
    %c0_135 = arith.constant 0 : index
    %c0_136 = arith.constant 0 : index
    %291 = vector.load %arg15[%c0_134, %c0_135, %c0_136] : memref<1x1x32xf32, #tpu.memory_space<vmem>>, vector<1x1x32xf32>
    %292 = vector.shape_cast %291 : vector<1x1x32xf32> to vector<1x32xf32>
    %293 = vector.broadcast %292 : vector<1x32xf32> to vector<8x32xf32>
    %294 = arith.addf %290, %293 : vector<8x32xf32>
    %295 = arith.addf %171, %294 : vector<8x32xf32>
    %296 = vector.extract_strided_slice %8 {offsets = [2, 0], sizes = [1, 32], strides = [1, 1]} : vector<6x32xf32> to vector<1x32xf32>
    %297 = vector.extract_strided_slice %8 {offsets = [3, 0], sizes = [1, 32], strides = [1, 1]} : vector<6x32xf32> to vector<1x32xf32>
    %cst_137 = arith.constant dense<0.000000e+00> : vector<8xf32>
    %298 = vector.multi_reduction <add>, %295, %cst_137 [1] : vector<8x32xf32> to vector<8xf32>
    %299 = vector.shape_cast %298 : vector<8xf32> to vector<8x1xf32>
    %cst_138 = arith.constant 3.200000e+01 : f32
    %300 = vector.broadcast %cst_138 : f32 to vector<8x1xf32>
    %301 = arith.divf %299, %300 : vector<8x1xf32>
    %302 = vector.broadcast %301 : vector<8x1xf32> to vector<8x32xf32>
    %303 = arith.subf %295, %302 : vector<8x32xf32>
    %304 = arith.mulf %303, %303 : vector<8x32xf32>
    %cst_139 = arith.constant dense<0.000000e+00> : vector<8xf32>
    %305 = vector.multi_reduction <add>, %304, %cst_139 [1] : vector<8x32xf32> to vector<8xf32>
    %306 = vector.shape_cast %305 : vector<8xf32> to vector<8x1xf32>
    %cst_140 = arith.constant 3.200000e+01 : f32
    %307 = vector.broadcast %cst_140 : f32 to vector<8x1xf32>
    %308 = arith.divf %306, %307 : vector<8x1xf32>
    %309 = vector.broadcast %301 : vector<8x1xf32> to vector<8x32xf32>
    %310 = arith.subf %295, %309 : vector<8x32xf32>
    %cst_141 = arith.constant 9.99999996E-13 : f32
    %311 = vector.broadcast %cst_141 : f32 to vector<8x1xf32>
    %312 = arith.addf %308, %311 : vector<8x1xf32>
    %313 = math.rsqrt %312 : vector<8x1xf32>
    %314 = vector.broadcast %313 : vector<8x1xf32> to vector<8x32xf32>
    %315 = arith.mulf %310, %314 : vector<8x32xf32>
    %316 = vector.broadcast %296 : vector<1x32xf32> to vector<8x32xf32>
    %317 = arith.mulf %315, %316 : vector<8x32xf32>
    %318 = vector.broadcast %297 : vector<1x32xf32> to vector<8x32xf32>
    %319 = arith.addf %317, %318 : vector<8x32xf32>
    %c0_142 = arith.constant 0 : index
    %c0_143 = arith.constant 0 : index
    %c0_144 = arith.constant 0 : index
    %320 = vector.load %arg16[%c0_142, %c0_143, %c0_144] : memref<1x32x64xbf16, #tpu.memory_space<vmem>>, vector<1x32x64xbf16>
    %321 = vector.shape_cast %320 : vector<1x32x64xbf16> to vector<32x64xbf16>
    %322 = arith.truncf %319 : vector<8x32xf32> to vector<8x32xbf16>
    %cst_145 = arith.constant dense<0.000000e+00> : vector<8x64xf32>
    %323 = tpu.matmul %322, %321, %cst_145 {dimension_numbers = #tpu.dot_dimension_numbers<[1], [0], [0], [1], [0, 0, 1, 1], [], []>} : vector<8x32xbf16>, vector<32x64xbf16>, vector<8x64xf32> -> vector<8x64xf32>
    %c0_146 = arith.constant 0 : index
    %c0_147 = arith.constant 0 : index
    %c0_148 = arith.constant 0 : index
    %324 = vector.load %arg17[%c0_146, %c0_147, %c0_148] : memref<1x1x64xf32, #tpu.memory_space<vmem>>, vector<1x1x64xf32>
    %325 = vector.shape_cast %324 : vector<1x1x64xf32> to vector<1x64xf32>
    %326 = vector.broadcast %325 : vector<1x64xf32> to vector<8x64xf32>
    %327 = arith.addf %323, %326 : vector<8x64xf32>
    %cst_149 = arith.constant 5.000000e-01 : f32
    %328 = vector.broadcast %cst_149 : f32 to vector<8x64xf32>
    %329 = arith.mulf %328, %327 : vector<8x64xf32>
    %cst_150 = arith.constant 0.707106769 : f32
    %330 = vector.broadcast %cst_150 : f32 to vector<8x64xf32>
    %331 = arith.mulf %327, %330 : vector<8x64xf32>
    %cst_151 = arith.constant 0.000000e+00 : f32
    %332 = vector.broadcast %cst_151 : f32 to vector<8x64xf32>
    %333 = arith.cmpf oge, %331, %332 : vector<8x64xf32>
    %cst_152 = arith.constant 1.000000e+00 : f32
    %cst_153 = arith.constant -1.000000e+00 : f32
    %334 = vector.broadcast %cst_152 : f32 to vector<8x64xf32>
    %335 = vector.broadcast %cst_153 : f32 to vector<8x64xf32>
    %336 = arith.select %333, %334, %335 : vector<8x64xi1>, vector<8x64xf32>
    %337 = arith.mulf %331, %336 : vector<8x64xf32>
    %cst_154 = arith.constant 0.327591091 : f32
    %338 = vector.broadcast %cst_154 : f32 to vector<8x64xf32>
    %339 = arith.mulf %338, %337 : vector<8x64xf32>
    %cst_155 = arith.constant 1.000000e+00 : f32
    %340 = vector.broadcast %cst_155 : f32 to vector<8x64xf32>
    %341 = arith.addf %340, %339 : vector<8x64xf32>
    %cst_156 = arith.constant 1.000000e+00 : f32
    %342 = vector.broadcast %cst_156 : f32 to vector<8x64xf32>
    %343 = arith.divf %342, %341 : vector<8x64xf32>
    %cst_157 = arith.constant 1.06140542 : f32
    %344 = vector.broadcast %cst_157 : f32 to vector<8x64xf32>
    %345 = arith.mulf %344, %343 : vector<8x64xf32>
    %cst_158 = arith.constant -1.45315206 : f32
    %346 = vector.broadcast %cst_158 : f32 to vector<8x64xf32>
    %347 = arith.addf %345, %346 : vector<8x64xf32>
    %348 = arith.mulf %347, %343 : vector<8x64xf32>
    %cst_159 = arith.constant 1.42141378 : f32
    %349 = vector.broadcast %cst_159 : f32 to vector<8x64xf32>
    %350 = arith.addf %348, %349 : vector<8x64xf32>
    %351 = arith.mulf %350, %343 : vector<8x64xf32>
    %cst_160 = arith.constant -0.284496725 : f32
    %352 = vector.broadcast %cst_160 : f32 to vector<8x64xf32>
    %353 = arith.addf %351, %352 : vector<8x64xf32>
    %354 = arith.mulf %353, %343 : vector<8x64xf32>
    %cst_161 = arith.constant 0.254829586 : f32
    %355 = vector.broadcast %cst_161 : f32 to vector<8x64xf32>
    %356 = arith.addf %354, %355 : vector<8x64xf32>
    %357 = arith.mulf %356, %343 : vector<8x64xf32>
    %cst_162 = arith.constant 0.000000e+00 : f32
    %358 = vector.broadcast %cst_162 : f32 to vector<8x64xf32>
    %359 = arith.subf %358, %337 : vector<8x64xf32>
    %360 = arith.mulf %359, %337 : vector<8x64xf32>
    %361 = math.exp %360 : vector<8x64xf32>
    %362 = arith.mulf %357, %361 : vector<8x64xf32>
    %cst_163 = arith.constant 1.000000e+00 : f32
    %363 = vector.broadcast %cst_163 : f32 to vector<8x64xf32>
    %364 = arith.subf %363, %362 : vector<8x64xf32>
    %365 = arith.mulf %336, %364 : vector<8x64xf32>
    %cst_164 = arith.constant 1.000000e+00 : f32
    %366 = vector.broadcast %cst_164 : f32 to vector<8x64xf32>
    %367 = arith.addf %366, %365 : vector<8x64xf32>
    %368 = arith.mulf %329, %367 : vector<8x64xf32>
    %c0_165 = arith.constant 0 : index
    %c0_166 = arith.constant 0 : index
    %c0_167 = arith.constant 0 : index
    %369 = vector.load %arg18[%c0_165, %c0_166, %c0_167] : memref<1x64x32xbf16, #tpu.memory_space<vmem>>, vector<1x64x32xbf16>
    %370 = vector.shape_cast %369 : vector<1x64x32xbf16> to vector<64x32xbf16>
    %371 = arith.truncf %368 : vector<8x64xf32> to vector<8x64xbf16>
    %cst_168 = arith.constant dense<0.000000e+00> : vector<8x32xf32>
    %372 = tpu.matmul %371, %370, %cst_168 {dimension_numbers = #tpu.dot_dimension_numbers<[1], [0], [0], [1], [0, 0, 1, 1], [], []>} : vector<8x64xbf16>, vector<64x32xbf16>, vector<8x32xf32> -> vector<8x32xf32>
    %c0_169 = arith.constant 0 : index
    %c0_170 = arith.constant 0 : index
    %c0_171 = arith.constant 0 : index
    %373 = vector.load %arg19[%c0_169, %c0_170, %c0_171] : memref<1x1x32xf32, #tpu.memory_space<vmem>>, vector<1x1x32xf32>
    %374 = vector.shape_cast %373 : vector<1x1x32xf32> to vector<1x32xf32>
    %375 = vector.broadcast %374 : vector<1x32xf32> to vector<8x32xf32>
    %376 = arith.addf %372, %375 : vector<8x32xf32>
    %377 = arith.addf %319, %376 : vector<8x32xf32>
    %378 = vector.extract_strided_slice %8 {offsets = [4, 0], sizes = [1, 32], strides = [1, 1]} : vector<6x32xf32> to vector<1x32xf32>
    %379 = vector.extract_strided_slice %8 {offsets = [5, 0], sizes = [1, 32], strides = [1, 1]} : vector<6x32xf32> to vector<1x32xf32>
    %cst_172 = arith.constant dense<0.000000e+00> : vector<8xf32>
    %380 = vector.multi_reduction <add>, %377, %cst_172 [1] : vector<8x32xf32> to vector<8xf32>
    %381 = vector.shape_cast %380 : vector<8xf32> to vector<8x1xf32>
    %cst_173 = arith.constant 3.200000e+01 : f32
    %382 = vector.broadcast %cst_173 : f32 to vector<8x1xf32>
    %383 = arith.divf %381, %382 : vector<8x1xf32>
    %384 = vector.broadcast %383 : vector<8x1xf32> to vector<8x32xf32>
    %385 = arith.subf %377, %384 : vector<8x32xf32>
    %386 = arith.mulf %385, %385 : vector<8x32xf32>
    %cst_174 = arith.constant dense<0.000000e+00> : vector<8xf32>
    %387 = vector.multi_reduction <add>, %386, %cst_174 [1] : vector<8x32xf32> to vector<8xf32>
    %388 = vector.shape_cast %387 : vector<8xf32> to vector<8x1xf32>
    %cst_175 = arith.constant 3.200000e+01 : f32
    %389 = vector.broadcast %cst_175 : f32 to vector<8x1xf32>
    %390 = arith.divf %388, %389 : vector<8x1xf32>
    %391 = vector.broadcast %383 : vector<8x1xf32> to vector<8x32xf32>
    %392 = arith.subf %377, %391 : vector<8x32xf32>
    %cst_176 = arith.constant 9.99999996E-13 : f32
    %393 = vector.broadcast %cst_176 : f32 to vector<8x1xf32>
    %394 = arith.addf %390, %393 : vector<8x1xf32>
    %395 = math.rsqrt %394 : vector<8x1xf32>
    %396 = vector.broadcast %395 : vector<8x1xf32> to vector<8x32xf32>
    %397 = arith.mulf %392, %396 : vector<8x32xf32>
    %398 = vector.broadcast %378 : vector<1x32xf32> to vector<8x32xf32>
    %399 = arith.mulf %397, %398 : vector<8x32xf32>
    %400 = vector.broadcast %379 : vector<1x32xf32> to vector<8x32xf32>
    %401 = arith.addf %399, %400 : vector<8x32xf32>
    %c0_177 = arith.constant 0 : index
    %c0_178 = arith.constant 0 : index
    %c0_179 = arith.constant 0 : index
    %402 = vector.load %arg21[%c0_177, %c0_178, %c0_179] : memref<1x8x32xf32, #tpu.memory_space<vmem>>, vector<1x8x32xf32>
    %403 = vector.shape_cast %402 : vector<1x8x32xf32> to vector<8x32xf32>
    %404 = vector.shape_cast %401 : vector<8x32xf32> to vector<1x8x32xf32>
    tpu.vector_store %arg21[%c0_177, %c0_178, %c0_179], %404 {strides = array<i32>} : memref<1x8x32xf32, #tpu.memory_space<vmem>>, vector<1x8x32xf32>,
    return
  }
  func.func @transform_0(%arg0: i32, %arg1: i32) -> (i32, i32, i32) {
    %c0_i32 = arith.constant 0 : i32
    %c0_i32_0 = arith.constant 0 : i32
    %c0_i32_1 = arith.constant 0 : i32
    return %arg0, %c0_i32, %c0_i32_0 : i32, i32, i32
  }
  func.func @transform_1(%arg0: i32, %arg1: i32) -> (i32, i32, i32) {
    %c0_i32 = arith.constant 0 : i32
    %c0_i32_0 = arith.constant 0 : i32
    %c0_i32_1 = arith.constant 0 : i32
    return %arg0, %c0_i32, %c0_i32_0 : i32, i32, i32
  }
  func.func @transform_2(%arg0: i32, %arg1: i32) -> (i32, i32, i32) {
    %c0_i32 = arith.constant 0 : i32
    %c0_i32_0 = arith.constant 0 : i32
    %c0_i32_1 = arith.constant 0 : i32
    return %arg0, %c0_i32, %c0_i32_0 : i32, i32, i32
  }
  func.func @transform_3(%arg0: i32, %arg1: i32) -> (i32, i32, i32) {
    %c0_i32 = arith.constant 0 : i32
    %c0_i32_0 = arith.constant 0 : i32
    %c0_i32_1 = arith.constant 0 : i32
    return %arg0, %c0_i32, %c0_i32_0 : i32, i32, i32
  }
  func.func @transform_4(%arg0: i32, %arg1: i32) -> (i32, i32, i32) {
    %c0_i32 = arith.constant 0 : i32
    %c0_i32_0 = arith.constant 0 : i32
    %c0_i32_1 = arith.constant 0 : i32
    return %arg1, %c0_i32, %c0_i32_0 : i32, i32, i32
  }
  func.func @transform_5(%arg0: i32, %arg1: i32) -> (i32, i32, i32) {
    %c0_i32 = arith.constant 0 : i32
    %c0_i32_0 = arith.constant 0 : i32
    %c0_i32_1 = arith.constant 0 : i32
    return %arg1, %c0_i32, %c0_i32_0 : i32, i32, i32
  }
  func.func @transform_6(%arg0: i32, %arg1: i32) -> (i32, i32, i32) {
    %c0_i32 = arith.constant 0 : i32
    %c0_i32_0 = arith.constant 0 : i32
    %c0_i32_1 = arith.constant 0 : i32
    return %arg1, %c0_i32, %c0_i32_0 : i32, i32, i32
  }
  func.func @transform_7(%arg0: i32, %arg1: i32) -> (i32, i32, i32) {
    %c0_i32 = arith.constant 0 : i32
    %c0_i32_0 = arith.constant 0 : i32
    %c0_i32_1 = arith.constant 0 : i32
    return %arg1, %c0_i32, %c0_i32_0 : i32, i32, i32
  }
  func.func @transform_8(%arg0: i32, %arg1: i32) -> (i32, i32, i32) {
    %c0_i32 = arith.constant 0 : i32
    %c0_i32_0 = arith.constant 0 : i32
    %c0_i32_1 = arith.constant 0 : i32
    return %arg1, %c0_i32, %c0_i32_0 : i32, i32, i32
  }
  func.func @transform_9(%arg0: i32, %arg1: i32) -> (i32, i32, i32) {
    %c0_i32 = arith.constant 0 : i32
    %c0_i32_0 = arith.constant 0 : i32
    %c0_i32_1 = arith.constant 0 : i32
    return %arg1, %c0_i32, %c0_i32_0 : i32, i32, i32
  }
  func.func @transform_10(%arg0: i32, %arg1: i32) -> (i32, i32, i32) {
    %c0_i32 = arith.constant 0 : i32
    %c0_i32_0 = arith.constant 0 : i32
    %c0_i32_1 = arith.constant 0 : i32
    return %arg1, %c0_i32, %c0_i32_0 : i32, i32, i32
  }
  func.func @transform_11(%arg0: i32, %arg1: i32) -> (i32, i32, i32) {
    %c0_i32 = arith.constant 0 : i32
    %c0_i32_0 = arith.constant 0 : i32
    %c0_i32_1 = arith.constant 0 : i32
    return %arg1, %c0_i32, %c0_i32_0 : i32, i32, i32
  }
  func.func @transform_12(%arg0: i32, %arg1: i32) -> (i32, i32, i32) {
    %c0_i32 = arith.constant 0 : i32
    %c0_i32_0 = arith.constant 0 : i32
    %c0_i32_1 = arith.constant 0 : i32
    return %arg1, %c0_i32, %c0_i32_0 : i32, i32, i32
  }
  func.func @transform_13(%arg0: i32, %arg1: i32) -> (i32, i32, i32) {
    %c0_i32 = arith.constant 0 : i32
    %c0_i32_0 = arith.constant 0 : i32
    %c0_i32_1 = arith.constant 0 : i32
    return %arg1, %c0_i32, %c0_i32_0 : i32, i32, i32
  }
  func.func @transform_14(%arg0: i32, %arg1: i32) -> (i32, i32, i32) {
    %c0_i32 = arith.constant 0 : i32
    %c0_i32_0 = arith.constant 0 : i32
    %c0_i32_1 = arith.constant 0 : i32
    return %arg1, %c0_i32, %c0_i32_0 : i32, i32, i32
  }
  func.func @transform_15(%arg0: i32, %arg1: i32) -> (i32, i32, i32) {
    %c0_i32 = arith.constant 0 : i32
    %c0_i32_0 = arith.constant 0 : i32
    %c0_i32_1 = arith.constant 0 : i32
    return %arg1, %c0_i32, %c0_i32_0 : i32, i32, i32
  }
  func.func @transform_16(%arg0: i32, %arg1: i32) -> (i32, i32, i32) {
    %c0_i32 = arith.constant 0 : i32
    %c0_i32_0 = arith.constant 0 : i32
    %c0_i32_1 = arith.constant 0 : i32
    return %arg1, %c0_i32, %c0_i32_0 : i32, i32, i32
  }
  func.func @transform_17(%arg0: i32, %arg1: i32) -> (i32, i32, i32) {
    %c0_i32 = arith.constant 0 : i32
    %c0_i32_0 = arith.constant 0 : i32
    %c0_i32_1 = arith.constant 0 : i32
    return %arg1, %c0_i32, %c0_i32_0 : i32, i32, i32
  }
  func.func @transform_18(%arg0: i32, %arg1: i32) -> (i32, i32, i32) {
    %c0_i32 = arith.constant 0 : i32
    %c0_i32_0 = arith.constant 0 : i32
    %c0_i32_1 = arith.constant 0 : i32
    return %arg1, %c0_i32, %c0_i32_0 : i32, i32, i32
  }
  func.func @transform_19(%arg0: i32, %arg1: i32) -> (i32, i32, i32) {
    %c0_i32 = arith.constant 0 : i32
    %c0_i32_0 = arith.constant 0 : i32
    %c0_i32_1 = arith.constant 0 : i32
    return %arg0, %c0_i32, %c0_i32_0 : i32, i32, i32
  }
  func.func @transform_20(%arg0: i32, %arg1: i32) -> (i32, i32, i32, i32, i32) {
    %c0_i32 = arith.constant 0 : i32
    %c0_i32_0 = arith.constant 0 : i32
    %c0_i32_1 = arith.constant 0 : i32
    %c0_i32_2 = arith.constant 0 : i32
    return %arg1, %arg0, %c0_i32, %c0_i32_0, %c0_i32_1 : i32, i32, i32, i32, i32
  }
  func.func @transform_21(%arg0: i32, %arg1: i32) -> (i32, i32, i32, i32, i32) {
    %c0_i32 = arith.constant 0 : i32
    %c0_i32_0 = arith.constant 0 : i32
    %c0_i32_1 = arith.constant 0 : i32
    %c0_i32_2 = arith.constant 0 : i32
    return %arg1, %arg0, %c0_i32, %c0_i32_0, %c0_i32_1 : i32, i32, i32, i32, i32
  }
}

</mosaic_0001>

<llo_original>
// kernel: decoder_loop_forward.1
$region0: #{decoder_loop_forward.1}
  #allocation0 [shape = 'u32[]', space=smem, size = 0x4, offset = 0x4, fixed_abs, tag = 'smem constant byte address 0x4 - core index']
  #allocation1 [shape = 'u32[144,128]{1,0:T(1,128)}', space=vmem, size = 0x12000, scoped, tag = 'internal scratch']
  %s0 = inlined_call_operand.vmem [shape: f32[2,8,32], index: 0, kind: input, shape index: {}]
  %s1 = inlined_call_operand.vmem [shape: f32[2,8,32], index: 1, kind: input, shape index: {}]
  %s2 = inlined_call_operand.vmem [shape: f32[2,1,8], index: 2, kind: input, shape index: {}]
  %s3 = inlined_call_operand.vmem [shape: f32[2,1,8], index: 3, kind: input, shape index: {}]
  %s4 = inlined_call_operand.vmem [shape: bf16[2,32,96], index: 4, kind: input, shape index: {}]
  %s5 = inlined_call_operand.vmem [shape: f32[2,1,96], index: 5, kind: input, shape index: {}]
  %s6 = inlined_call_operand.vmem [shape: bf16[2,32,32], index: 6, kind: input, shape index: {}]
  %s7 = inlined_call_operand.vmem [shape: f32[2,1,32], index: 7, kind: input, shape index: {}]
  %s8 = inlined_call_operand.vmem [shape: bf16[2,32,32], index: 8, kind: input, shape index: {}]
  %s9 = inlined_call_operand.vmem [shape: f32[2,1,32], index: 9, kind: input, shape index: {}]
  %s10 = inlined_call_operand.vmem [shape: bf16[2,32,64], index: 10, kind: input, shape index: {}]
  %s11 = inlined_call_operand.vmem [shape: f32[2,1,64], index: 11, kind: input, shape index: {}]
  %s12 = inlined_call_operand.vmem [shape: bf16[2,32,32], index: 12, kind: input, shape index: {}]
  %s13 = inlined_call_operand.vmem [shape: f32[2,1,32], index: 13, kind: input, shape index: {}]
  %s14 = inlined_call_operand.vmem [shape: bf16[2,32,64], index: 14, kind: input, shape index: {}]
  %s15 = inlined_call_operand.vmem [shape: f32[2,1,64], index: 15, kind: input, shape index: {}]
  %s16 = inlined_call_operand.vmem [shape: bf16[2,64,32], index: 16, kind: input, shape index: {}]
  %s17 = inlined_call_operand.vmem [shape: f32[2,1,32], index: 17, kind: input, shape index: {}]
  %s18 = inlined_call_operand.vmem [shape: f32[2,6,32], index: 18, kind: input, shape index: {}]
  %s19 = inlined_call_operand.hbm [shape: f32[2,8,32], index: 19, kind: output, shape index: {0}]
  %s20 = inlined_call_operand.vmem [shape: f32[2,2,4,8,8], index: 20, kind: output, shape index: {1}]
  %s21 = inlined_call_operand.vmem [shape: f32[2,2,4,8,8], index: 21, kind: output, shape index: {2}]
  %22 = xla_tuple %s19, %s20, %s21
  %s23 = sld [smem:[#allocation0]]
  $region129: #{decoder_loop_forward.1} parent=0
    _
  %s25 = ssub.s32 1, %s23
  %s26 = scalar_select 0, %s25, %s23
  $region1: #{decoder_loop_forward.1} parent=0
    #allocation2 [shape = 'u8[8192]{0}', space=vmem, size = 0x2000, scoped, tag = 'output window, operand 0']
    #allocation3 [shape = 's32[2]{0}', space=sflag, size = 0x8, scoped, tag = 'scoped memory for decoder_loop_forward.1']
    %27 = vsyncpa [#allocation3], 0
    %s28 = scalar_lea.sflag [#allocation3], 1
    %29 = vsyncpa %s28, 0
    loop: start=0, step=1, limit=6
    $region2: #{decoder_loop_forward.1} parent=1 // loop_pre_header
      _
    $region3: #{decoder_loop_forward.1} parent=1 // loop_header
      %s31 = sphi 0, %s35
      %p32 = scmp.ge.s32.totalorder %s31, 6
      %s38 = sphi 0, %s50
      %s39 = sphi 0, %s46
      %s40 = sphi 0, %s38
      %s41 = sphi 0, %s39
      %s42 = sphi 0, %s40
      %s43 = sphi 0, %s41
      %s53 = sphi 0, %s55
      %s56 = sphi 0, %s53
      %s57 = sphi 0, %s56
      %s73 = sphi 0, %s57
      %s79 = sphi 0, %s81
      %s82 = sphi 0, %s79
      %s83 = sphi 0, %s82
      %s99 = sphi 0, %s83
      %s105 = sphi 0, %s107
      %s108 = sphi 0, %s105
      %s109 = sphi 0, %s108
      %s125 = sphi 0, %s109
      %s131 = sphi 0, %s133
      %s134 = sphi 0, %s131
      %s135 = sphi 0, %s134
      %s151 = sphi 0, %s135
      %s157 = sphi 0, %s159
      %s160 = sphi 0, %s157
      %s161 = sphi 0, %s160
      %s177 = sphi 0, %s161
      %s183 = sphi 0, %s185
      %s186 = sphi 0, %s183
      %s187 = sphi 0, %s186
      %s203 = sphi 0, %s187
      %s209 = sphi 0, %s211
      %s212 = sphi 0, %s209
      %s213 = sphi 0, %s212
      %s229 = sphi 0, %s213
      %s235 = sphi 0, %s237
      %s238 = sphi 0, %s235
      %s239 = sphi 0, %s238
      %s255 = sphi 0, %s239
      %s261 = sphi 0, %s263
      %s264 = sphi 0, %s261
      %s265 = sphi 0, %s264
      %s281 = sphi 0, %s265
      %s287 = sphi 0, %s289
      %s290 = sphi 0, %s287
      %s291 = sphi 0, %s290
      %s307 = sphi 0, %s291
      %s313 = sphi 0, %s315
      %s316 = sphi 0, %s313
      %s317 = sphi 0, %s316
      %s333 = sphi 0, %s317
      %s339 = sphi 0, %s341
      %s342 = sphi 0, %s339
      %s343 = sphi 0, %s342
      %s359 = sphi 0, %s343
      %s365 = sphi 0, %s367
      %s368 = sphi 0, %s365
      %s369 = sphi 0, %s368
      %s385 = sphi 0, %s369
      %s391 = sphi 0, %s393
      %s394 = sphi 0, %s391
      %s395 = sphi 0, %s394
      %s411 = sphi 0, %s395
      %s417 = sphi 0, %s419
      %s420 = sphi 0, %s417
      %s421 = sphi 0, %s420
      %s437 = sphi 0, %s421
      %s443 = sphi 0, %s445
      %s446 = sphi 0, %s443
      %s447 = sphi 0, %s446
      %s463 = sphi 0, %s447
      %s469 = sphi 0, %s471
      %s472 = sphi 0, %s469
      %s473 = sphi 0, %s472
      %s489 = sphi 0, %s473
      %s495 = sphi 0, %s497
      %s498 = sphi 0, %s495
      %s499 = sphi 0, %s498
      %s515 = sphi 0, %s499
      %s521 = sphi 0, %s523
      %s524 = sphi 0, %s521
      %s525 = sphi 0, %s524
      %s541 = sphi 0, %s525
      %s547 = sphi 0, %s549
      %s550 = sphi 0, %s547
      %s551 = sphi 0, %s550
      %s567 = sphi 0, %s551
      %s575 = sphi 0, %s577
      %s578 = sphi 0, %s575
      %s579 = sphi 0, %s578
      %s595 = sphi 0, %s579
      %s603 = sphi 0, %s605
      %s606 = sphi 0, %s603
      %s607 = sphi 0, %s606
      %s623 = sphi 0, %s607
    $region4: #{decoder_loop_forward.1} parent=1 // loop_header_branch
      %34 = sbr.rel (%p32) target = $region8
    $region5: #{decoder_loop_forward.1} parent=1 // loop_body
      %s36 = ssub.s32 %s31, 1
      %s37 = ssub.s32 %s31, 2
      %s44 = sadd.s32 1, %s39
      %p45 = scmp.ge.s32.totalorder %s44, 2
      %s46 = scalar_select %p45, 0, %s44
      %s47 = sadd.s32 1, %s38
      %s48 = scalar_select %p45, %s47, %s38
      %p49 = scmp.ge.s32.totalorder %s48, 2
      %s50 = scalar_select %p49, 0, %s48
      %s51 = ssub.s32 %s38, %s50
      %p52 = scmp.eq.s32.totalorder %s51, 0
      %s54 = sadd.s32 %s53, 1
      %s55 = scalar_select %p52, %s53, %s54
      %p58 = pneg %p52
      %p59 = scmp.eq.s32.totalorder %s31, 3
      %p60 = por %p58, %p59
      %p61 = scmp.ne.s32.totalorder %s53, %s56
      %p62 = scmp.eq.s32.totalorder %s31, 0
      %p63 = por %p61, %p62
      %p64 = scmp.ne.s32.totalorder %s53, %s56
      %p65 = scmp.eq.s32.totalorder %s36, 3
      %p66 = por %p64, %p65
      %p67 = scmp.ne.s32.totalorder %s56, %s57
      %p68 = scmp.eq.s32.totalorder %s36, 0
      %p69 = por %p67, %p68
      %p70 = scmp.ne.s32.totalorder %s56, %s57
      %p71 = scmp.eq.s32.totalorder %s37, 3
      %p72 = por %p70, %p71
      %p74 = scmp.ne.s32.totalorder %s57, %s73
      %p75 = scmp.eq.s32.totalorder %s37, 0
      %p76 = por %p74, %p75
      %s77 = ssub.s32 %s38, %s50
      %p78 = scmp.eq.s32.totalorder %s77, 0
      %s80 = sadd.s32 %s79, 1
      %s81 = scalar_select %p78, %s79, %s80
      %p84 = pneg %p78
      %p85 = scmp.eq.s32.totalorder %s31, 3
      %p86 = por %p84, %p85
      %p87 = scmp.ne.s32.totalorder %s79, %s82
      %p88 = scmp.eq.s32.totalorder %s31, 0
      %p89 = por %p87, %p88
      %p90 = scmp.ne.s32.totalorder %s79, %s82
      %p91 = scmp.eq.s32.totalorder %s36, 3
      %p92 = por %p90, %p91
      %p93 = scmp.ne.s32.totalorder %s82, %s83
      %p94 = scmp.eq.s32.totalorder %s36, 0
      %p95 = por %p93, %p94
      %p96 = scmp.ne.s32.totalorder %s82, %s83
      %p97 = scmp.eq.s32.totalorder %s37, 3
      %p98 = por %p96, %p97
      %p100 = scmp.ne.s32.totalorder %s83, %s99
      %p101 = scmp.eq.s32.totalorder %s37, 0
      %p102 = por %p100, %p101
      %s103 = ssub.s32 %s38, %s50
      %p104 = scmp.eq.s32.totalorder %s103, 0
      %s106 = sadd.s32 %s105, 1
      %s107 = scalar_select %p104, %s105, %s106
      %p110 = pneg %p104
      %p111 = scmp.eq.s32.totalorder %s31, 3
      %p112 = por %p110, %p111
      %p113 = scmp.ne.s32.totalorder %s105, %s108
      %p114 = scmp.eq.s32.totalorder %s31, 0
      %p115 = por %p113, %p114
      %p116 = scmp.ne.s32.totalorder %s105, %s108
      %p117 = scmp.eq.s32.totalorder %s36, 3
      %p118 = por %p116, %p117
      %p119 = scmp.ne.s32.totalorder %s108, %s109
      %p120 = scmp.eq.s32.totalorder %s36, 0
      %p121 = por %p119, %p120
      %p122 = scmp.ne.s32.totalorder %s108, %s109
      %p123 = scmp.eq.s32.totalorder %s37, 3
      %p124 = por %p122, %p123
      %p126 = scmp.ne.s32.totalorder %s109, %s125
      %p127 = scmp.eq.s32.totalorder %s37, 0
      %p128 = por %p126, %p127
      %s129 = ssub.s32 %s38, %s50
      %p130 = scmp.eq.s32.totalorder %s129, 0
      %s132 = sadd.s32 %s131, 1
      %s133 = scalar_select %p130, %s131, %s132
      %p136 = pneg %p130
      %p137 = scmp.eq.s32.totalorder %s31, 3
      %p138 = por %p136, %p137
      %p139 = scmp.ne.s32.totalorder %s131, %s134
      %p140 = scmp.eq.s32.totalorder %s31, 0
      %p141 = por %p139, %p140
      %p142 = scmp.ne.s32.totalorder %s131, %s134
      %p143 = scmp.eq.s32.totalorder %s36, 3
      %p144 = por %p142, %p143
      %p145 = scmp.ne.s32.totalorder %s134, %s135
      %p146 = scmp.eq.s32.totalorder %s36, 0
      %p147 = por %p145, %p146
      %p148 = scmp.ne.s32.totalorder %s134, %s135
      %p149 = scmp.eq.s32.totalorder %s37, 3
      %p150 = por %p148, %p149
      %p152 = scmp.ne.s32.totalorder %s135, %s151
      %p153 = scmp.eq.s32.totalorder %s37, 0
      %p154 = por %p152, %p153
      %s155 = ssub.s32 %s39, %s46
      %p156 = scmp.eq.s32.totalorder %s155, 0
      %s158 = sadd.s32 %s157, 1
      %s159 = scalar_select %p156, %s157, %s158
      %p162 = pneg %p156
      %p163 = scmp.eq.s32.totalorder %s31, 3
      %p164 = por %p162, %p163
      %p165 = scmp.ne.s32.totalorder %s157, %s160
      %p166 = scmp.eq.s32.totalorder %s31, 0
      %p167 = por %p165, %p166
      %p168 = scmp.ne.s32.totalorder %s157, %s160
      %p169 = scmp.eq.s32.totalorder %s36, 3
      %p170 = por %p168, %p169
      %p171 = scmp.ne.s32.totalorder %s160, %s161
      %p172 = scmp.eq.s32.totalorder %s36, 0
      %p173 = por %p171, %p172
      %p174 = scmp.ne.s32.totalorder %s160, %s161
      %p175 = scmp.eq.s32.totalorder %s37, 3
      %p176 = por %p174, %p175
      %p178 = scmp.ne.s32.totalorder %s161, %s177
      %p179 = scmp.eq.s32.totalorder %s37, 0
      %p180 = por %p178, %p179
      %s181 = ssub.s32 %s39, %s46
      %p182 = scmp.eq.s32.totalorder %s181, 0
      %s184 = sadd.s32 %s183, 1
      %s185 = scalar_select %p182, %s183, %s184
      %p188 = pneg %p182
      %p189 = scmp.eq.s32.totalorder %s31, 3
      %p190 = por %p188, %p189
      %p191 = scmp.ne.s32.totalorder %s183, %s186
      %p192 = scmp.eq.s32.totalorder %s31, 0
      %p193 = por %p191, %p192
      %p194 = scmp.ne.s32.totalorder %s183, %s186
      %p195 = scmp.eq.s32.totalorder %s36, 3
      %p196 = por %p194, %p195
      %p197 = scmp.ne.s32.totalorder %s186, %s187
      %p198 = scmp.eq.s32.totalorder %s36, 0
      %p199 = por %p197, %p198
      %p200 = scmp.ne.s32.totalorder %s186, %s187
      %p201 = scmp.eq.s32.totalorder %s37, 3
      %p202 = por %p200, %p201
      %p204 = scmp.ne.s32.totalorder %s187, %s203
      %p205 = scmp.eq.s32.totalorder %s37, 0
      %p206 = por %p204, %p205
      %s207 = ssub.s32 %s39, %s46
      %p208 = scmp.eq.s32.totalorder %s207, 0
      %s210 = sadd.s32 %s209, 1
      %s211 = scalar_select %p208, %s209, %s210
      %p214 = pneg %p208
      %p215 = scmp.eq.s32.totalorder %s31, 3
      %p216 = por %p214, %p215
      %p217 = scmp.ne.s32.totalorder %s209, %s212
      %p218 = scmp.eq.s32.totalorder %s31, 0
      %p219 = por %p217, %p218
      %p220 = scmp.ne.s32.totalorder %s209, %s212
      %p221 = scmp.eq.s32.totalorder %s36, 3
      %p222 = por %p220, %p221
      %p223 = scmp.ne.s32.totalorder %s212, %s213
      %p224 = scmp.eq.s32.totalorder %s36, 0
      %p225 = por %p223, %p224
      %p226 = scmp.ne.s32.totalorder %s212, %s213
      %p227 = scmp.eq.s32.totalorder %s37, 3
      %p228 = por %p226, %p227
      %p230 = scmp.ne.s32.totalorder %s213, %s229
      %p231 = scmp.eq.s32.totalorder %s37, 0
      %p232 = por %p230, %p231
      %s233 = ssub.s32 %s39, %s46
      %p234 = scmp.eq.s32.totalorder %s233, 0
      %s236 = sadd.s32 %s235, 1
      %s237 = scalar_select %p234, %s235, %s236
      %p240 = pneg %p234
      %p241 = scmp.eq.s32.totalorder %s31, 3
      %p242 = por %p240, %p241
      %p243 = scmp.ne.s32.totalorder %s235, %s238
      %p244 = scmp.eq.s32.totalorder %s31, 0
      %p245 = por %p243, %p244
      %p246 = scmp.ne.s32.totalorder %s235, %s238
      %p247 = scmp.eq.s32.totalorder %s36, 3
      %p248 = por %p246, %p247
      %p249 = scmp.ne.s32.totalorder %s238, %s239
      %p250 = scmp.eq.s32.totalorder %s36, 0
      %p251 = por %p249, %p250
      %p252 = scmp.ne.s32.totalorder %s238, %s239
      %p253 = scmp.eq.s32.totalorder %s37, 3
      %p254 = por %p252, %p253
      %p256 = scmp.ne.s32.totalorder %s239, %s255
      %p257 = scmp.eq.s32.totalorder %s37, 0
      %p258 = por %p256, %p257
      %s259 = ssub.s32 %s39, %s46
      %p260 = scmp.eq.s32.totalorder %s259, 0
      %s262 = sadd.s32 %s261, 1
      %s263 = scalar_select %p260, %s261, %s262
      %p266 = pneg %p260
      %p267 = scmp.eq.s32.totalorder %s31, 3
      %p268 = por %p266, %p267
      %p269 = scmp.ne.s32.totalorder %s261, %s264
      %p270 = scmp.eq.s32.totalorder %s31, 0
      %p271 = por %p269, %p270
      %p272 = scmp.ne.s32.totalorder %s261, %s264
      %p273 = scmp.eq.s32.totalorder %s36, 3
      %p274 = por %p272, %p273
      %p275 = scmp.ne.s32.totalorder %s264, %s265
      %p276 = scmp.eq.s32.totalorder %s36, 0
      %p277 = por %p275, %p276
      %p278 = scmp.ne.s32.totalorder %s264, %s265
      %p279 = scmp.eq.s32.totalorder %s37, 3
      %p280 = por %p278, %p279
      %p282 = scmp.ne.s32.totalorder %s265, %s281
      %p283 = scmp.eq.s32.totalorder %s37, 0
      %p284 = por %p282, %p283
      %s285 = ssub.s32 %s39, %s46
      %p286 = scmp.eq.s32.totalorder %s285, 0
      %s288 = sadd.s32 %s287, 1
      %s289 = scalar_select %p286, %s287, %s288
      %p292 = pneg %p286
      %p293 = scmp.eq.s32.totalorder %s31, 3
      %p294 = por %p292, %p293
      %p295 = scmp.ne.s32.totalorder %s287, %s290
      %p296 = scmp.eq.s32.totalorder %s31, 0
      %p297 = por %p295, %p296
      %p298 = scmp.ne.s32.totalorder %s287, %s290
      %p299 = scmp.eq.s32.totalorder %s36, 3
      %p300 = por %p298, %p299
      %p301 = scmp.ne.s32.totalorder %s290, %s291
      %p302 = scmp.eq.s32.totalorder %s36, 0
      %p303 = por %p301, %p302
      %p304 = scmp.ne.s32.totalorder %s290, %s291
      %p305 = scmp.eq.s32.totalorder %s37, 3
      %p306 = por %p304, %p305
      %p308 = scmp.ne.s32.totalorder %s291, %s307
      %p309 = scmp.eq.s32.totalorder %s37, 0
      %p310 = por %p308, %p309
      %s311 = ssub.s32 %s39, %s46
      %p312 = scmp.eq.s32.totalorder %s311, 0
      %s314 = sadd.s32 %s313, 1
      %s315 = scalar_select %p312, %s313, %s314
      %p318 = pneg %p312
      %p319 = scmp.eq.s32.totalorder %s31, 3
      %p320 = por %p318, %p319
      %p321 = scmp.ne.s32.totalorder %s313, %s316
      %p322 = scmp.eq.s32.totalorder %s31, 0
      %p323 = por %p321, %p322
      %p324 = scmp.ne.s32.totalorder %s313, %s316
      %p325 = scmp.eq.s32.totalorder %s36, 3
      %p326 = por %p324, %p325
      %p327 = scmp.ne.s32.totalorder %s316, %s317
      %p328 = scmp.eq.s32.totalorder %s36, 0
      %p329 = por %p327, %p328
      %p330 = scmp.ne.s32.totalorder %s316, %s317
      %p331 = scmp.eq.s32.totalorder %s37, 3
      %p332 = por %p330, %p331
      %p334 = scmp.ne.s32.totalorder %s317, %s333
      %p335 = scmp.eq.s32.totalorder %s37, 0
      %p336 = por %p334, %p335
      %s337 = ssub.s32 %s39, %s46
      %p338 = scmp.eq.s32.totalorder %s337, 0
      %s340 = sadd.s32 %s339, 1
      %s341 = scalar_select %p338, %s339, %s340
      %p344 = pneg %p338
      %p345 = scmp.eq.s32.totalorder %s31, 3
      %p346 = por %p344, %p345
      %p347 = scmp.ne.s32.totalorder %s339, %s342
      %p348 = scmp.eq.s32.totalorder %s31, 0
      %p349 = por %p347, %p348
      %p350 = scmp.ne.s32.totalorder %s339, %s342
      %p351 = scmp.eq.s32.totalorder %s36, 3
      %p352 = por %p350, %p351
      %p353 = scmp.ne.s32.totalorder %s342, %s343
      %p354 = scmp.eq.s32.totalorder %s36, 0
      %p355 = por %p353, %p354
      %p356 = scmp.ne.s32.totalorder %s342, %s343
      %p357 = scmp.eq.s32.totalorder %s37, 3
      %p358 = por %p356, %p357
      %p360 = scmp.ne.s32.totalorder %s343, %s359
      %p361 = scmp.eq.s32.totalorder %s37, 0
      %p362 = por %p360, %p361
      %s363 = ssub.s32 %s39, %s46
      %p364 = scmp.eq.s32.totalorder %s363, 0
      %s366 = sadd.s32 %s365, 1
      %s367 = scalar_select %p364, %s365, %s366
      %p370 = pneg %p364
      %p371 = scmp.eq.s32.totalorder %s31, 3
      %p372 = por %p370, %p371
      %p373 = scmp.ne.s32.totalorder %s365, %s368
      %p374 = scmp.eq.s32.totalorder %s31, 0
      %p375 = por %p373, %p374
      %p376 = scmp.ne.s32.totalorder %s365, %s368
      %p377 = scmp.eq.s32.totalorder %s36, 3
      %p378 = por %p376, %p377
      %p379 = scmp.ne.s32.totalorder %s368, %s369
      %p380 = scmp.eq.s32.totalorder %s36, 0
      %p381 = por %p379, %p380
      %p382 = scmp.ne.s32.totalorder %s368, %s369
      %p383 = scmp.eq.s32.totalorder %s37, 3
      %p384 = por %p382, %p383
      %p386 = scmp.ne.s32.totalorder %s369, %s385
      %p387 = scmp.eq.s32.totalorder %s37, 0
      %p388 = por %p386, %p387
      %s389 = ssub.s32 %s39, %s46
      %p390 = scmp.eq.s32.totalorder %s389, 0
      %s392 = sadd.s32 %s391, 1
      %s393 = scalar_select %p390, %s391, %s392
      %p396 = pneg %p390
      %p397 = scmp.eq.s32.totalorder %s31, 3
      %p398 = por %p396, %p397
      %p399 = scmp.ne.s32.totalorder %s391, %s394
      %p400 = scmp.eq.s32.totalorder %s31, 0
      %p401 = por %p399, %p400
      %p402 = scmp.ne.s32.totalorder %s391, %s394
      %p403 = scmp.eq.s32.totalorder %s36, 3
      %p404 = por %p402, %p403
      %p405 = scmp.ne.s32.totalorder %s394, %s395
      %p406 = scmp.eq.s32.totalorder %s36, 0
      %p407 = por %p405, %p406
      %p408 = scmp.ne.s32.totalorder %s394, %s395
      %p409 = scmp.eq.s32.totalorder %s37, 3
      %p410 = por %p408, %p409
      %p412 = scmp.ne.s32.totalorder %s395, %s411
      %p413 = scmp.eq.s32.totalorder %s37, 0
      %p414 = por %p412, %p413
      %s415 = ssub.s32 %s39, %s46
      %p416 = scmp.eq.s32.totalorder %s415, 0
      %s418 = sadd.s32 %s417, 1
      %s419 = scalar_select %p416, %s417, %s418
      %p422 = pneg %p416
      %p423 = scmp.eq.s32.totalorder %s31, 3
      %p424 = por %p422, %p423
      %p425 = scmp.ne.s32.totalorder %s417, %s420
      %p426 = scmp.eq.s32.totalorder %s31, 0
      %p427 = por %p425, %p426
      %p428 = scmp.ne.s32.totalorder %s417, %s420
      %p429 = scmp.eq.s32.totalorder %s36, 3
      %p430 = por %p428, %p429
      %p431 = scmp.ne.s32.totalorder %s420, %s421
      %p432 = scmp.eq.s32.totalorder %s36, 0
      %p433 = por %p431, %p432
      %p434 = scmp.ne.s32.totalorder %s420, %s421
      %p435 = scmp.eq.s32.totalorder %s37, 3
      %p436 = por %p434, %p435
      %p438 = scmp.ne.s32.totalorder %s421, %s437
      %p439 = scmp.eq.s32.totalorder %s37, 0
      %p440 = por %p438, %p439
      %s441 = ssub.s32 %s39, %s46
      %p442 = scmp.eq.s32.totalorder %s441, 0
      %s444 = sadd.s32 %s443, 1
      %s445 = scalar_select %p442, %s443, %s444
      %p448 = pneg %p442
      %p449 = scmp.eq.s32.totalorder %s31, 3
      %p450 = por %p448, %p449
      %p451 = scmp.ne.s32.totalorder %s443, %s446
      %p452 = scmp.eq.s32.totalorder %s31, 0
      %p453 = por %p451, %p452
      %p454 = scmp.ne.s32.totalorder %s443, %s446
      %p455 = scmp.eq.s32.totalorder %s36, 3
      %p456 = por %p454, %p455
      %p457 = scmp.ne.s32.totalorder %s446, %s447
      %p458 = scmp.eq.s32.totalorder %s36, 0
      %p459 = por %p457, %p458
      %p460 = scmp.ne.s32.totalorder %s446, %s447
      %p461 = scmp.eq.s32.totalorder %s37, 3
      %p462 = por %p460, %p461
      %p464 = scmp.ne.s32.totalorder %s447, %s463
      %p465 = scmp.eq.s32.totalorder %s37, 0
      %p466 = por %p464, %p465
      %s467 = ssub.s32 %s39, %s46
      %p468 = scmp.eq.s32.totalorder %s467, 0
      %s470 = sadd.s32 %s469, 1
      %s471 = scalar_select %p468, %s469, %s470
      %p474 = pneg %p468
      %p475 = scmp.eq.s32.totalorder %s31, 3
      %p476 = por %p474, %p475
      %p477 = scmp.ne.s32.totalorder %s469, %s472
      %p478 = scmp.eq.s32.totalorder %s31, 0
      %p479 = por %p477, %p478
      %p480 = scmp.ne.s32.totalorder %s469, %s472
      %p481 = scmp.eq.s32.totalorder %s36, 3
      %p482 = por %p480, %p481
      %p483 = scmp.ne.s32.totalorder %s472, %s473
      %p484 = scmp.eq.s32.totalorder %s36, 0
      %p485 = por %p483, %p484
      %p486 = scmp.ne.s32.totalorder %s472, %s473
      %p487 = scmp.eq.s32.totalorder %s37, 3
      %p488 = por %p486, %p487
      %p490 = scmp.ne.s32.totalorder %s473, %s489
      %p491 = scmp.eq.s32.totalorder %s37, 0
      %p492 = por %p490, %p491
      %s493 = ssub.s32 %s39, %s46
      %p494 = scmp.eq.s32.totalorder %s493, 0
      %s496 = sadd.s32 %s495, 1
      %s497 = scalar_select %p494, %s495, %s496
      %p500 = pneg %p494
      %p501 = scmp.eq.s32.totalorder %s31, 3
      %p502 = por %p500, %p501
      %p503 = scmp.ne.s32.totalorder %s495, %s498
      %p504 = scmp.eq.s32.totalorder %s31, 0
      %p505 = por %p503, %p504
      %p506 = scmp.ne.s32.totalorder %s495, %s498
      %p507 = scmp.eq.s32.totalorder %s36, 3
      %p508 = por %p506, %p507
      %p509 = scmp.ne.s32.totalorder %s498, %s499
      %p510 = scmp.eq.s32.totalorder %s36, 0
      %p511 = por %p509, %p510
      %p512 = scmp.ne.s32.totalorder %s498, %s499
      %p513 = scmp.eq.s32.totalorder %s37, 3
      %p514 = por %p512, %p513
      %p516 = scmp.ne.s32.totalorder %s499, %s515
      %p517 = scmp.eq.s32.totalorder %s37, 0
      %p518 = por %p516, %p517
      %s519 = ssub.s32 %s39, %s46
      %p520 = scmp.eq.s32.totalorder %s519, 0
      %s522 = sadd.s32 %s521, 1
      %s523 = scalar_select %p520, %s521, %s522
      %p526 = pneg %p520
      %p527 = scmp.eq.s32.totalorder %s31, 3
      %p528 = por %p526, %p527
      %p529 = scmp.ne.s32.totalorder %s521, %s524
      %p530 = scmp.eq.s32.totalorder %s31, 0
      %p531 = por %p529, %p530
      %p532 = scmp.ne.s32.totalorder %s521, %s524
      %p533 = scmp.eq.s32.totalorder %s36, 3
      %p534 = por %p532, %p533
      %p535 = scmp.ne.s32.totalorder %s524, %s525
      %p536 = scmp.eq.s32.totalorder %s36, 0
      %p537 = por %p535, %p536
      %p538 = scmp.ne.s32.totalorder %s524, %s525
      %p539 = scmp.eq.s32.totalorder %s37, 3
      %p540 = por %p538, %p539
      %p542 = scmp.ne.s32.totalorder %s525, %s541
      %p543 = scmp.eq.s32.totalorder %s37, 0
      %p544 = por %p542, %p543
      %s545 = ssub.s32 %s38, %s50
      %p546 = scmp.eq.s32.totalorder %s545, 0
      %s548 = sadd.s32 %s547, 1
      %s549 = scalar_select %p546, %s547, %s548
      %p552 = pneg %p546
      %p553 = scmp.eq.s32.totalorder %s31, 3
      %p554 = por %p552, %p553
      %p555 = scmp.ne.s32.totalorder %s547, %s550
      %p556 = scmp.eq.s32.totalorder %s31, 0
      %p557 = por %p555, %p556
      %p558 = scmp.ne.s32.totalorder %s547, %s550
      %p559 = scmp.eq.s32.totalorder %s36, 3
      %p560 = por %p558, %p559
      %p561 = scmp.ne.s32.totalorder %s550, %s551
      %p562 = scmp.eq.s32.totalorder %s36, 0
      %p563 = por %p561, %p562
      %p564 = scmp.ne.s32.totalorder %s550, %s551
      %p565 = scmp.eq.s32.totalorder %s37, 3
      %p566 = por %p564, %p565
      %p568 = scmp.ne.s32.totalorder %s551, %s567
      %p569 = scmp.eq.s32.totalorder %s37, 0
      %p570 = por %p568, %p569
      %s571 = ssub.s32 %s39, %s46
      %s572 = ssub.s32 %s38, %s50
      %s573 = sor.u32 %s571, %s572
      %p574 = scmp.eq.s32.totalorder %s573, 0
      %s576 = sadd.s32 %s575, 1
      %s577 = scalar_select %p574, %s575, %s576
      %p580 = pneg %p574
      %p581 = scmp.eq.s32.totalorder %s31, 3
      %p582 = por %p580, %p581
      %p583 = scmp.ne.s32.totalorder %s575, %s578
      %p584 = scmp.eq.s32.totalorder %s31, 0
      %p585 = por %p583, %p584
      %p586 = scmp.ne.s32.totalorder %s575, %s578
      %p587 = scmp.eq.s32.totalorder %s36, 3
      %p588 = por %p586, %p587
      %p589 = scmp.ne.s32.totalorder %s578, %s579
      %p590 = scmp.eq.s32.totalorder %s36, 0
      %p591 = por %p589, %p590
      %p592 = scmp.ne.s32.totalorder %s578, %s579
      %p593 = scmp.eq.s32.totalorder %s37, 3
      %p594 = por %p592, %p593
      %p596 = scmp.ne.s32.totalorder %s579, %s595
      %p597 = scmp.eq.s32.totalorder %s37, 0
      %p598 = por %p596, %p597
      %s599 = ssub.s32 %s39, %s46
      %s600 = ssub.s32 %s38, %s50
      %s601 = sor.u32 %s599, %s600
      %p602 = scmp.eq.s32.totalorder %s601, 0
      %s604 = sadd.s32 %s603, 1
      %s605 = scalar_select %p602, %s603, %s604
      %p608 = pneg %p602
      %p609 = scmp.eq.s32.totalorder %s31, 3
      %p610 = por %p608, %p609
      %p611 = scmp.ne.s32.totalorder %s603, %s606
      %p612 = scmp.eq.s32.totalorder %s31, 0
      %p613 = por %p611, %p612
      %p614 = scmp.ne.s32.totalorder %s603, %s606
      %p615 = scmp.eq.s32.totalorder %s36, 3
      %p616 = por %p614, %p615
      %p617 = scmp.ne.s32.totalorder %s606, %s607
      %p618 = scmp.eq.s32.totalorder %s36, 0
      %p619 = por %p617, %p618
      %p620 = scmp.ne.s32.totalorder %s606, %s607
      %p621 = scmp.eq.s32.totalorder %s37, 3
      %p622 = por %p620, %p621
      %p624 = scmp.ne.s32.totalorder %s607, %s623
      %p625 = scmp.eq.s32.totalorder %s37, 0
      %p626 = por %p624, %p625
      %p627 = scmp.le.s32.totalorder 1, %s31
      %p628 = scmp.lt.s32.totalorder %s31, 5
      %p629 = pnand %p627, %p628
      %p630 = pneg %p629
      // Predicated region
      $region9: #{decoder_loop_forward.1} parent=5 // pred_check
        _
      $region10: #{decoder_loop_forward.1} parent=5 // pred_check_branch
        %632 = sbr.rel (%p629) target = $region12
      $region11: #{decoder_loop_forward.1} parent=5 // pred_region
        %s633 = ssub.s32 %s31, 1
      $region12: #{decoder_loop_forward.1} parent=5 // pred_fallthru
        _
      %p634 = scmp.lt.s32.totalorder %s31, 4
      // Predicated region
      $region13: #{decoder_loop_forward.1} parent=5 // pred_check
        %p635 = pneg %p634
      $region14: #{decoder_loop_forward.1} parent=5 // pred_check_branch
        %637 = sbr.rel (%p635) target = $region16
      $region15: #{decoder_loop_forward.1} parent=5 // pred_region
        // Predicated region
        $region17: #{decoder_loop_forward.1} parent=15 // pred_check
          %p638 = pneg %p63
        $region18: #{decoder_loop_forward.1} parent=15 // pred_check_branch
          %640 = sbr.rel (%p638) target = $region20
        $region19: #{decoder_loop_forward.1} parent=15 // pred_region
          %p641 = scmp.lt.s32.totalorder %s38, 1
          %s642 = scalar_select %p641, %s38, 1
          %s643 = smul.addr %s642, 8
          %s644 = scalar_lea.vmem %s0, %s643
        $region20: #{decoder_loop_forward.1} parent=15 // pred_fallthru
          _
        // Predicated region
        $region21: #{decoder_loop_forward.1} parent=15 // pred_check
          %p645 = pneg %p89
        $region22: #{decoder_loop_forward.1} parent=15 // pred_check_branch
          %647 = sbr.rel (%p645) target = $region24
        $region23: #{decoder_loop_forward.1} parent=15 // pred_region
          %p648 = scmp.lt.s32.totalorder %s38, 1
          %s649 = scalar_select %p648, %s38, 1
          %s650 = smul.addr %s649, 8
          %s651 = scalar_lea.vmem %s1, %s650
        $region24: #{decoder_loop_forward.1} parent=15 // pred_fallthru
          _
        // Predicated region
        $region25: #{decoder_loop_forward.1} parent=15 // pred_check
          %p652 = pneg %p115
        $region26: #{decoder_loop_forward.1} parent=15 // pred_check_branch
          %654 = sbr.rel (%p652) target = $region28
        $region27: #{decoder_loop_forward.1} parent=15 // pred_region
          %p655 = scmp.lt.s32.totalorder %s38, 1
          %s656 = scalar_select %p655, %s38, 1
          %s657 = scalar_lea.vmem %s2, %s656
        $region28: #{decoder_loop_forward.1} parent=15 // pred_fallthru
          _
        // Predicated region
        $region29: #{decoder_loop_forward.1} parent=15 // pred_check
          %p658 = pneg %p141
        $region30: #{decoder_loop_forward.1} parent=15 // pred_check_branch
          %660 = sbr.rel (%p658) target = $region32
        $region31: #{decoder_loop_forward.1} parent=15 // pred_region
          %p661 = scmp.lt.s32.totalorder %s38, 1
          %s662 = scalar_select %p661, %s38, 1
          %s663 = scalar_lea.vmem %s3, %s662
        $region32: #{decoder_loop_forward.1} parent=15 // pred_fallthru
          _
        // Predicated region
        $region33: #{decoder_loop_forward.1} parent=15 // pred_check
          %p664 = pneg %p167
        $region34: #{decoder_loop_forward.1} parent=15 // pred_check_branch
          %666 = sbr.rel (%p664) target = $region36
        $region35: #{decoder_loop_forward.1} parent=15 // pred_region
          %p667 = scmp.lt.s32.totalorder %s39, 1
          %s668 = scalar_select %p667, %s39, 1
          %s669 = smul.addr %s668, 4
          %s670 = smul.addr %s669, 4
          %s671 = scalar_lea.vmem %s4, %s670
        $region36: #{decoder_loop_forward.1} parent=15 // pred_fallthru
          _
        // Predicated region
        $region37: #{decoder_loop_forward.1} parent=15 // pred_check
          %p672 = pneg %p193
        $region38: #{decoder_loop_forward.1} parent=15 // pred_check_branch
          %674 = sbr.rel (%p672) target = $region40
        $region39: #{decoder_loop_forward.1} parent=15 // pred_region
          %p675 = scmp.lt.s32.totalorder %s39, 1
          %s676 = scalar_select %p675, %s39, 1
          %s677 = scalar_lea.vmem %s5, %s676
        $region40: #{decoder_loop_forward.1} parent=15 // pred_fallthru
          _
        // Predicated region
        $region41: #{decoder_loop_forward.1} parent=15 // pred_check
          %p678 = pneg %p219
        $region42: #{decoder_loop_forward.1} parent=15 // pred_check_branch
          %680 = sbr.rel (%p678) target = $region44
        $region43: #{decoder_loop_forward.1} parent=15 // pred_region
          %p681 = scmp.lt.s32.totalorder %s39, 1
          %s682 = scalar_select %p681, %s39, 1
          %s683 = smul.addr %s682, 4
          %s684 = smul.addr %s683, 4
          %s685 = scalar_lea.vmem %s6, %s684
        $region44: #{decoder_loop_forward.1} parent=15 // pred_fallthru
          _
        // Predicated region
        $region45: #{decoder_loop_forward.1} parent=15 // pred_check
          %p686 = pneg %p245
        $region46: #{decoder_loop_forward.1} parent=15 // pred_check_branch
          %688 = sbr.rel (%p686) target = $region48
        $region47: #{decoder_loop_forward.1} parent=15 // pred_region
          %p689 = scmp.lt.s32.totalorder %s39, 1
          %s690 = scalar_select %p689, %s39, 1
          %s691 = scalar_lea.vmem %s7, %s690
        $region48: #{decoder_loop_forward.1} parent=15 // pred_fallthru
          _
        // Predicated region
        $region49: #{decoder_loop_forward.1} parent=15 // pred_check
          %p692 = pneg %p271
        $region50: #{decoder_loop_forward.1} parent=15 // pred_check_branch
          %694 = sbr.rel (%p692) target = $region52
        $region51: #{decoder_loop_forward.1} parent=15 // pred_region
          %p695 = scmp.lt.s32.totalorder %s39, 1
          %s696 = scalar_select %p695, %s39, 1
          %s697 = smul.addr %s696, 4
          %s698 = smul.addr %s697, 4
          %s699 = scalar_lea.vmem %s8, %s698
        $region52: #{decoder_loop_forward.1} parent=15 // pred_fallthru
          _
        // Predicated region
        $region53: #{decoder_loop_forward.1} parent=15 // pred_check
          %p700 = pneg %p297
        $region54: #{decoder_loop_forward.1} parent=15 // pred_check_branch
          %702 = sbr.rel (%p700) target = $region56
        $region55: #{decoder_loop_forward.1} parent=15 // pred_region
          %p703 = scmp.lt.s32.totalorder %s39, 1
          %s704 = scalar_select %p703, %s39, 1
          %s705 = scalar_lea.vmem %s9, %s704
        $region56: #{decoder_loop_forward.1} parent=15 // pred_fallthru
          _
        // Predicated region
        $region57: #{decoder_loop_forward.1} parent=15 // pred_check
          %p706 = pneg %p323
        $region58: #{decoder_loop_forward.1} parent=15 // pred_check_branch
          %708 = sbr.rel (%p706) target = $region60
        $region59: #{decoder_loop_forward.1} parent=15 // pred_region
          %p709 = scmp.lt.s32.totalorder %s39, 1
          %s710 = scalar_select %p709, %s39, 1
          %s711 = smul.addr %s710, 4
          %s712 = smul.addr %s711, 4
          %s713 = scalar_lea.vmem %s10, %s712
        $region60: #{decoder_loop_forward.1} parent=15 // pred_fallthru
          _
        // Predicated region
        $region61: #{decoder_loop_forward.1} parent=15 // pred_check
          %p714 = pneg %p349
        $region62: #{decoder_loop_forward.1} parent=15 // pred_check_branch
          %716 = sbr.rel (%p714) target = $region64
        $region63: #{decoder_loop_forward.1} parent=15 // pred_region
          %p717 = scmp.lt.s32.totalorder %s39, 1
          %s718 = scalar_select %p717, %s39, 1
          %s719 = scalar_lea.vmem %s11, %s718
        $region64: #{decoder_loop_forward.1} parent=15 // pred_fallthru
          _
        // Predicated region
        $region65: #{decoder_loop_forward.1} parent=15 // pred_check
          %p720 = pneg %p375
        $region66: #{decoder_loop_forward.1} parent=15 // pred_check_branch
          %722 = sbr.rel (%p720) target = $region68
        $region67: #{decoder_loop_forward.1} parent=15 // pred_region
          %p723 = scmp.lt.s32.totalorder %s39, 1
          %s724 = scalar_select %p723, %s39, 1
          %s725 = smul.addr %s724, 4
          %s726 = smul.addr %s725, 4
          %s727 = scalar_lea.vmem %s12, %s726
        $region68: #{decoder_loop_forward.1} parent=15 // pred_fallthru
          _
        // Predicated region
        $region69: #{decoder_loop_forward.1} parent=15 // pred_check
          %p728 = pneg %p401
        $region70: #{decoder_loop_forward.1} parent=15 // pred_check_branch
          %730 = sbr.rel (%p728) target = $region72
        $region71: #{decoder_loop_forward.1} parent=15 // pred_region
          %p731 = scmp.lt.s32.totalorder %s39, 1
          %s732 = scalar_select %p731, %s39, 1
          %s733 = scalar_lea.vmem %s13, %s732
        $region72: #{decoder_loop_forward.1} parent=15 // pred_fallthru
          _
        // Predicated region
        $region73: #{decoder_loop_forward.1} parent=15 // pred_check
          %p734 = pneg %p427
        $region74: #{decoder_loop_forward.1} parent=15 // pred_check_branch
          %736 = sbr.rel (%p734) target = $region76
        $region75: #{decoder_loop_forward.1} parent=15 // pred_region
          %p737 = scmp.lt.s32.totalorder %s39, 1
          %s738 = scalar_select %p737, %s39, 1
          %s739 = smul.addr %s738, 4
          %s740 = smul.addr %s739, 4
          %s741 = scalar_lea.vmem %s14, %s740
        $region76: #{decoder_loop_forward.1} parent=15 // pred_fallthru
          _
        // Predicated region
        $region77: #{decoder_loop_forward.1} parent=15 // pred_check
          %p742 = pneg %p453
        $region78: #{decoder_loop_forward.1} parent=15 // pred_check_branch
          %744 = sbr.rel (%p742) target = $region80
        $region79: #{decoder_loop_forward.1} parent=15 // pred_region
          %p745 = scmp.lt.s32.totalorder %s39, 1
          %s746 = scalar_select %p745, %s39, 1
          %s747 = scalar_lea.vmem %s15, %s746
        $region80: #{decoder_loop_forward.1} parent=15 // pred_fallthru
          _
        // Predicated region
        $region81: #{decoder_loop_forward.1} parent=15 // pred_check
          %p748 = pneg %p479
        $region82: #{decoder_loop_forward.1} parent=15 // pred_check_branch
          %750 = sbr.rel (%p748) target = $region84
        $region83: #{decoder_loop_forward.1} parent=15 // pred_region
          %p751 = scmp.lt.s32.totalorder %s39, 1
          %s752 = scalar_select %p751, %s39, 1
          %s753 = smul.addr %s752, 8
          %s754 = smul.addr %s753, 4
          %s755 = scalar_lea.vmem %s16, %s754
        $region84: #{decoder_loop_forward.1} parent=15 // pred_fallthru
          _
        // Predicated region
        $region85: #{decoder_loop_forward.1} parent=15 // pred_check
          %p756 = pneg %p505
        $region86: #{decoder_loop_forward.1} parent=15 // pred_check_branch
          %758 = sbr.rel (%p756) target = $region88
        $region87: #{decoder_loop_forward.1} parent=15 // pred_region
          %p759 = scmp.lt.s32.totalorder %s39, 1
          %s760 = scalar_select %p759, %s39, 1
          %s761 = scalar_lea.vmem %s17, %s760
        $region88: #{decoder_loop_forward.1} parent=15 // pred_fallthru
          _
        // Predicated region
        $region89: #{decoder_loop_forward.1} parent=15 // pred_check
          %p762 = pneg %p531
        $region90: #{decoder_loop_forward.1} parent=15 // pred_check_branch
          %764 = sbr.rel (%p762) target = $region92
        $region91: #{decoder_loop_forward.1} parent=15 // pred_region
          %p765 = scmp.lt.s32.totalorder %s39, 1
          %s766 = scalar_select %p765, %s39, 1
          %s767 = smul.addr %s766, 8
          %s768 = scalar_lea.vmem %s18, %s767
        $region92: #{decoder_loop_forward.1} parent=15 // pred_fallthru
          _
      $region16: #{decoder_loop_forward.1} parent=5 // pred_fallthru
        _
      %p769 = scmp.le.s32.totalorder 1, %s31
      %p770 = scmp.lt.s32.totalorder %s31, 5
      %p771 = pnand %p769, %p770
      %p772 = pneg %p771
      // Predicated region
      $region93: #{decoder_loop_forward.1} parent=5 // pred_check
        _
      $region94: #{decoder_loop_forward.1} parent=5 // pred_check_branch
        %774 = sbr.rel (%p771) target = $region96
      $region95: #{decoder_loop_forward.1} parent=5 // pred_region
        %s775 = ssub.s32 %s31, 1
        %p776 = scmp.lt.s32.totalorder %s40, 1
        %s777 = scalar_select %p776, %s40, 1
        %s778 = smul.addr %s777, 8
        %s779 = scalar_lea.vmem %s0, %s778
        %p780 = pneg %p69
        %p781 = pneg %p66
        %p782 = scmp.lt.s32.totalorder %s40, 1
        %s783 = scalar_select %p782, %s40, 1
        %s784 = smul.addr %s783, 8
        %s785 = scalar_lea.vmem %s1, %s784
        %p786 = pneg %p95
        %p787 = pneg %p92
        %p788 = scmp.lt.s32.totalorder %s40, 1
        %s789 = scalar_select %p788, %s40, 1
        %s790 = scalar_lea.vmem %s2, %s789
        %p791 = pneg %p121
        %p792 = pneg %p118
        %p793 = scmp.lt.s32.totalorder %s40, 1
        %s794 = scalar_select %p793, %s40, 1
        %s795 = scalar_lea.vmem %s3, %s794
        %p796 = pneg %p147
        %p797 = pneg %p144
        %p798 = scmp.lt.s32.totalorder %s41, 1
        %s799 = scalar_select %p798, %s41, 1
        %s800 = smul.addr %s799, 4
        %s801 = smul.addr %s800, 4
        %s802 = scalar_lea.vmem %s4, %s801
        %p803 = pneg %p173
        %p804 = pneg %p170
        %p805 = scmp.lt.s32.totalorder %s41, 1
        %s806 = scalar_select %p805, %s41, 1
        %s807 = scalar_lea.vmem %s5, %s806
        %p808 = pneg %p199
        %p809 = pneg %p196
        %p810 = scmp.lt.s32.totalorder %s41, 1
        %s811 = scalar_select %p810, %s41, 1
        %s812 = smul.addr %s811, 4
        %s813 = smul.addr %s812, 4
        %s814 = scalar_lea.vmem %s6, %s813
        %p815 = pneg %p225
        %p816 = pneg %p222
        %p817 = scmp.lt.s32.totalorder %s41, 1
        %s818 = scalar_select %p817, %s41, 1
        %s819 = scalar_lea.vmem %s7, %s818
        %p820 = pneg %p251
        %p821 = pneg %p248
        %p822 = scmp.lt.s32.totalorder %s41, 1
        %s823 = scalar_select %p822, %s41, 1
        %s824 = smul.addr %s823, 4
        %s825 = smul.addr %s824, 4
        %s826 = scalar_lea.vmem %s8, %s825
        %p827 = pneg %p277
        %p828 = pneg %p274
        %p829 = scmp.lt.s32.totalorder %s41, 1
        %s830 = scalar_select %p829, %s41, 1
        %s831 = scalar_lea.vmem %s9, %s830
        %p832 = pneg %p303
        %p833 = pneg %p300
        %p834 = scmp.lt.s32.totalorder %s41, 1
        %s835 = scalar_select %p834, %s41, 1
        %s836 = smul.addr %s835, 4
        %s837 = smul.addr %s836, 4
        %s838 = scalar_lea.vmem %s10, %s837
        %p839 = pneg %p329
        %p840 = pneg %p326
        %p841 = scmp.lt.s32.totalorder %s41, 1
        %s842 = scalar_select %p841, %s41, 1
        %s843 = scalar_lea.vmem %s11, %s842
        %p844 = pneg %p355
        %p845 = pneg %p352
        %p846 = scmp.lt.s32.totalorder %s41, 1
        %s847 = scalar_select %p846, %s41, 1
        %s848 = smul.addr %s847, 4
        %s849 = smul.addr %s848, 4
        %s850 = scalar_lea.vmem %s12, %s849
        %p851 = pneg %p381
        %p852 = pneg %p378
        %p853 = scmp.lt.s32.totalorder %s41, 1
        %s854 = scalar_select %p853, %s41, 1
        %s855 = scalar_lea.vmem %s13, %s854
        %p856 = pneg %p407
        %p857 = pneg %p404
        %p858 = scmp.lt.s32.totalorder %s41, 1
        %s859 = scalar_select %p858, %s41, 1
        %s860 = smul.addr %s859, 4
        %s861 = smul.addr %s860, 4
        %s862 = scalar_lea.vmem %s14, %s861
        %p863 = pneg %p433
        %p864 = pneg %p430
        %p865 = scmp.lt.s32.totalorder %s41, 1
        %s866 = scalar_select %p865, %s41, 1
        %s867 = scalar_lea.vmem %s15, %s866
        %p868 = pneg %p459
        %p869 = pneg %p456
        %p870 = scmp.lt.s32.totalorder %s41, 1
        %s871 = scalar_select %p870, %s41, 1
        %s872 = smul.addr %s871, 8
        %s873 = smul.addr %s872, 4
        %s874 = scalar_lea.vmem %s16, %s873
        %p875 = pneg %p485
        %p876 = pneg %p482
        %p877 = scmp.lt.s32.totalorder %s41, 1
        %s878 = scalar_select %p877, %s41, 1
        %s879 = scalar_lea.vmem %s17, %s878
        %p880 = pneg %p511
        %p881 = pneg %p508
        %p882 = scmp.lt.s32.totalorder %s41, 1
        %s883 = scalar_select %p882, %s41, 1
        %s884 = smul.addr %s883, 8
        %s885 = scalar_lea.vmem %s18, %s884
        %p886 = pneg %p537
        %p887 = pneg %p534
        %p888 = pneg %p563
        %p889 = pneg %p560
        %s890 = sand.u32 %s550, 1
        %s891 = scalar_lea.sflag [#allocation3], %s890
        %s892 = sand.u32 %s550, 1
        %s893 = smul.addr %s892, 8
        %s894 = scalar_lea.vmem [#allocation2], %s893
        %p895 = pneg %p591
        %p896 = pneg %p588
        %p897 = scmp.lt.s32.totalorder %s41, 1
        %s898 = scalar_select %p897, %s41, 1
        %p899 = scmp.lt.s32.totalorder %s40, 1
        %s900 = scalar_select %p899, %s40, 1
        %s901 = smul.addr %s900, 4
        %s902 = smul.addr %s898, 8
        %s903 = sadd.s32 %s901, %s902
        %s904 = smul.addr %s903, 8
        %s905 = scalar_lea.vmem %s20, %s904
        %p906 = pneg %p619
        %p907 = pneg %p616
        %p908 = scmp.lt.s32.totalorder %s41, 1
        %s909 = scalar_select %p908, %s41, 1
        %p910 = scmp.lt.s32.totalorder %s40, 1
        %s911 = scalar_select %p910, %s40, 1
        %s912 = smul.addr %s911, 4
        %s913 = smul.addr %s909, 8
        %s914 = sadd.s32 %s912, %s913
        %s915 = smul.addr %s914, 8
        %s916 = scalar_lea.vmem %s21, %s915
        %p917 = scmp.lt.s32.totalorder %s40, 1
        %s918 = scalar_select %p917, %s40, 1
        %s919 = smul.addr %s918, 8
        %s920 = scalar_lea.vmem %s0, %s919
        %p921 = scmp.lt.s32.totalorder %s40, 1
        %s922 = scalar_select %p921, %s40, 1
        %s923 = smul.addr %s922, 8
        %s924 = scalar_lea.vmem %s1, %s923
        %p925 = scmp.lt.s32.totalorder %s40, 1
        %s926 = scalar_select %p925, %s40, 1
        %s927 = scalar_lea.vmem %s2, %s926
        %p928 = scmp.lt.s32.totalorder %s40, 1
        %s929 = scalar_select %p928, %s40, 1
        %s930 = scalar_lea.vmem %s3, %s929
        %p931 = scmp.lt.s32.totalorder %s41, 1
        %s932 = scalar_select %p931, %s41, 1
        %s933 = smul.addr %s932, 4
        %s934 = smul.addr %s933, 4
        %s935 = scalar_lea.vmem %s4, %s934
        %p936 = scmp.lt.s32.totalorder %s41, 1
        %s937 = scalar_select %p936, %s41, 1
        %s938 = scalar_lea.vmem %s5, %s937
        %p939 = scmp.lt.s32.totalorder %s41, 1
        %s940 = scalar_select %p939, %s41, 1
        %s941 = smul.addr %s940, 4
        %s942 = smul.addr %s941, 4
        %s943 = scalar_lea.vmem %s6, %s942
        %p944 = scmp.lt.s32.totalorder %s41, 1
        %s945 = scalar_select %p944, %s41, 1
        %s946 = scalar_lea.vmem %s7, %s945
        %p947 = scmp.lt.s32.totalorder %s41, 1
        %s948 = scalar_select %p947, %s41, 1
        %s949 = smul.addr %s948, 4
        %s950 = smul.addr %s949, 4
        %s951 = scalar_lea.vmem %s8, %s950
        %p952 = scmp.lt.s32.totalorder %s41, 1
        %s953 = scalar_select %p952, %s41, 1
        %s954 = scalar_lea.vmem %s9, %s953
        %p955 = scmp.lt.s32.totalorder %s41, 1
        %s956 = scalar_select %p955, %s41, 1
        %s957 = smul.addr %s956, 4
        %s958 = smul.addr %s957, 4
        %s959 = scalar_lea.vmem %s10, %s958
        %p960 = scmp.lt.s32.totalorder %s41, 1
        %s961 = scalar_select %p960, %s41, 1
        %s962 = scalar_lea.vmem %s11, %s961
        %p963 = scmp.lt.s32.totalorder %s41, 1
        %s964 = scalar_select %p963, %s41, 1
        %s965 = smul.addr %s964, 4
        %s966 = smul.addr %s965, 4
        %s967 = scalar_lea.vmem %s12, %s966
        %p968 = scmp.lt.s32.totalorder %s41, 1
        %s969 = scalar_select %p968, %s41, 1
        %s970 = scalar_lea.vmem %s13, %s969
        %p971 = scmp.lt.s32.totalorder %s41, 1
        %s972 = scalar_select %p971, %s41, 1
        %s973 = smul.addr %s972, 4
        %s974 = smul.addr %s973, 4
        %s975 = scalar_lea.vmem %s14, %s974
        %p976 = scmp.lt.s32.totalorder %s41, 1
        %s977 = scalar_select %p976, %s41, 1
        %s978 = scalar_lea.vmem %s15, %s977
        %p979 = scmp.lt.s32.totalorder %s41, 1
        %s980 = scalar_select %p979, %s41, 1
        %s981 = smul.addr %s980, 8
        %s982 = smul.addr %s981, 4
        %s983 = scalar_lea.vmem %s16, %s982
        %p984 = scmp.lt.s32.totalorder %s41, 1
        %s985 = scalar_select %p984, %s41, 1
        %s986 = scalar_lea.vmem %s17, %s985
        %p987 = scmp.lt.s32.totalorder %s41, 1
        %s988 = scalar_select %p987, %s41, 1
        %s989 = smul.addr %s988, 8
        %s990 = scalar_lea.vmem %s18, %s989
        %p991 = scmp.lt.s32.totalorder %s41, 1
        %s992 = scalar_select %p991, %s41, 1
        %p993 = scmp.lt.s32.totalorder %s40, 1
        %s994 = scalar_select %p993, %s40, 1
        %s995 = smul.addr %s994, 4
        %s996 = smul.addr %s992, 8
        %s997 = sadd.s32 %s995, %s996
        %s998 = smul.addr %s997, 8
        %s999 = scalar_lea.vmem %s20, %s998
        %p1000 = scmp.lt.s32.totalorder %s41, 1
        %s1001 = scalar_select %p1000, %s41, 1
        %p1002 = scmp.lt.s32.totalorder %s40, 1
        %s1003 = scalar_select %p1002, %s40, 1
        %s1004 = smul.addr %s1003, 4
        %s1005 = smul.addr %s1001, 8
        %s1006 = sadd.s32 %s1004, %s1005
        %s1007 = smul.addr %s1006, 8
        %s1008 = scalar_lea.vmem %s21, %s1007
        %p1010 = scmp.eq.s32.totalorder %s41, 0
        // Predicated region
        $region97: #{decoder_loop_forward.1} parent=95 // pred_check
          %p1011 = pneg %p1010
        $region98: #{decoder_loop_forward.1} parent=95 // pred_check_branch
          %1013 = sbr.rel (%p1011) target = $region100
        $region99: #{decoder_loop_forward.1} parent=95 // pred_region
          %v1014 = vld [vmem:[%s920] sm:$0xff]
          %vm1015 = vcmask 261120
          %1016 = vst.msk [vmem:[%s894] sm:$0xff] %vm1015, %v1014
        $region100: #{decoder_loop_forward.1} parent=95 // pred_fallthru
          _
        %v1017 = vld [vmem:[%s894] sm:$0xff]
        %v1018 = vld [vmem:[%s924] sm:$0xff]
        %v1019 = vld [vmem:[%s990] sm:$0x3f]
        %v1020 = vlaneseq
        %v1021 = vshrl.u32 %v1020, 7
        %v1022 = vlaneseq
        %v1023 = vand.u32 %v1022, 127
        %v1024 = vld [vmem:[%s927] sm:$0x1]
        %v1026 = vlaneseq
        %v1027 = vshrl.u32 %v1026, 7
        %v1028 = vsub.s32 0, %v1027
        %v1029 = vrot.slane %v1024, %v1028
        %vm1031 = vcmp.gt.f32.partialorder %v1029, 0.5
        %vm1032 = vcmp.gt.s32.totalorder %v1023, %v1021
        %vm1033 = vmor %vm1032, %vm1031
        %v1034 = vsel %vm1033, -1e+09, 0.0
        %v1035 = vld [vmem:[%s930] sm:$0x1]
        %v1037 = vlaneseq
        %v1038 = vshrl.u32 %v1037, 7
        %v1039 = vsub.s32 0, %v1038
        %v1040 = vrot.slane %v1035, %v1039
        %vm1042 = vcmp.gt.f32.partialorder %v1040, 0.5
        %v1043 = vsel %vm1042, -1e+09, 0.0
        %v1044 = vld [vmem:[%s935] sm:$0xf]
        %v1045 = vld [vmem:[%s935 + $0x4] sm:$0xf]
        %v1046 = vld [vmem:[%s935 + $0x8] sm:$0xf]
        %v1047 = vld [vmem:[%s935 + $0xc] sm:$0xf]
        %v1048 = vpack.c.bf16 %v1017, %v1017
        %v1049 = vld [vmem:[%s938] sm:$0x1]
        %v1051 = vlaneseq
        %v1052 = vshrl.u32 %v1051, 7
        %v1053 = vsub.s32 0, %v1052
        %v1054 = vrot.slane %v1049, %v1053
        %v1060 = vunpack.c.l.b16 %v1044
        %v1061 = vunpack.c.l.b16 %v1045
        %v1062 = vunpack.c.l.b16 %v1046
        %v1063 = vunpack.c.l.b16 %v1047
        %v1064 = vpack.c.b16 %v1061, %v1060
        %v1065 = vpack.c.b16 %v1063, %v1062
        %vm1068 = vcmask 261120
        %v1070 = vsel %vm1068, %v1048, 0
        %1072 = vmatprep.subr.bf16.mxu0 0
        %1073 = vmatpush1.bf16.msra.mxu0 %v1064
        %1074 = vmatprep.subr.bf16.mxu0 0
        %1075 = vmatpush1.bf16.msra.mxu0 %v1065
        %1076 = vmatprep.subr.bf16.mxu0 0
        %1077 = vmatpush1.bf16.msra.mxu0 0
        %1078 = vmatprep.subr.bf16.mxu0 0
        %1079 = vmatpush1.bf16.msra.mxu0 0
        %1080 = vmatprep.subr.bf16.mxu0 0
        %1081 = vmatpush1.bf16.msra.mxu0 0
        %1082 = vmatprep.subr.bf16.mxu0 0
        %1083 = vmatpush1.bf16.msra.mxu0 0
        %1084 = vmatprep.subr.bf16.mxu0 0
        %1085 = vmatpush1.bf16.msra.mxu0 0
        %1086 = vmatprep.subr.bf16.mxu0 0
        %1087 = vmatpush1.bf16.msra.mxu0 0
        %1088 = vmatprep.subr.bf16.mxu0 0
        %1089 = vmatpush1.bf16.msra.mxu0 0
        %1090 = vmatprep.subr.bf16.mxu0 0
        %1091 = vmatpush1.bf16.msra.mxu0 0
        %1092 = vmatprep.subr.bf16.mxu0 0
        %1093 = vmatpush1.bf16.msra.mxu0 0
        %1094 = vmatprep.subr.bf16.mxu0 0
        %1095 = vmatpush1.bf16.msra.mxu0 0
        %1096 = vmatprep.subr.bf16.mxu0 0
        %1097 = vmatpush1.bf16.msra.mxu0 0
        %1098 = vmatprep.subr.bf16.mxu0 0
        %1099 = vmatpush1.bf16.msra.mxu0 0
        %1100 = vmatprep.subr.bf16.mxu0 0
        %1101 = vmatpush1.bf16.msra.mxu0 0
        %1102 = vmatprep.subr.bf16.mxu0 0
        %1103 = vmatpush1.bf16.msra.mxu0 0
        %1104 = vmatprep.mubr.bf16.mxu0 0
        %1105 = vmatmul.mubr.bf16.gmra.mrb[0].mxu0 %v1070
        %v1106 = vpop.f32.mrb[0].mxu0
        %v1107 = vadd.f32 %v1054, %v1106
        %v1108 = vpop.f32.mrb[0].mxu0
        %v1109 = vpop.f32.mrb[0].mxu0
        %v1110 = vpop.f32.mrb[0].mxu0
        %1111 = vdwg.mxu0
        %v1112 = vpack.c.bf16 %v1107, %v1107
        %1114 = vrot.lane.b32.xlu0 %v1112, 96
        %v1115 = vpop.permute.xlu0 %1114
        %vm1116 = vcmask 64512
        %v1118 = vsel %vm1116, %v1112, 0
        %v1121 = vsel %vm1116, %v1115, 0
        %1123 = vmatprep.subr.bf16.mxu0 0
        %1124 = vmatpush1.bf16.xpose.msra.mxu0 %v1121
        %1125 = vmatprep.subr.bf16.mxu0 0
        %1126 = vmatpush1.bf16.xpose.msra.mxu0 0
        %1127 = vmatprep.subr.bf16.mxu0 0
        %1128 = vmatpush1.bf16.xpose.msra.mxu0 0
        %1129 = vmatprep.subr.bf16.mxu0 0
        %1130 = vmatpush1.bf16.xpose.msra.mxu0 0
        %1131 = vmatprep.subr.bf16.mxu0 0
        %1132 = vmatpush1.bf16.xpose.msra.mxu0 0
        %1133 = vmatprep.subr.bf16.mxu0 0
        %1134 = vmatpush1.bf16.xpose.msra.mxu0 0
        %1135 = vmatprep.subr.bf16.mxu0 0
        %1136 = vmatpush1.bf16.xpose.msra.mxu0 0
        %1137 = vmatprep.subr.bf16.mxu0 0
        %1138 = vmatpush1.bf16.xpose.msra.mxu0 0
        %1139 = vmatprep.subr.bf16.mxu0 0
        %1140 = vmatpush1.bf16.xpose.msra.mxu0 0
        %1141 = vmatprep.subr.bf16.mxu0 0
        %1142 = vmatpush1.bf16.xpose.msra.mxu0 0
        %1143 = vmatprep.subr.bf16.mxu0 0
        %1144 = vmatpush1.bf16.xpose.msra.mxu0 0
        %1145 = vmatprep.subr.bf16.mxu0 0
        %1146 = vmatpush1.bf16.xpose.msra.mxu0 0
        %1147 = vmatprep.subr.bf16.mxu0 0
        %1148 = vmatpush1.bf16.xpose.msra.mxu0 0
        %1149 = vmatprep.subr.bf16.mxu0 0
        %1150 = vmatpush1.bf16.xpose.msra.mxu0 0
        %1151 = vmatprep.subr.bf16.mxu0 0
        %1152 = vmatpush1.bf16.xpose.msra.mxu0 0
        %1153 = vmatprep.subr.bf16.mxu0 0
        %1154 = vmatpush1.bf16.xpose.msra.mxu0 0
        %1155 = vmatprep.mubr.bf16.mxu0 0
        %1156 = vmatmul.mubr.bf16.gmra.mrb[0].mxu0 %v1118
        %v1157 = vpop.f32.mrb[0].mxu0
        %v1158 = vadd.f32 0.0, %v1157
        %v1159 = vpop.f32.mrb[0].mxu0
        %v1160 = vpop.f32.mrb[0].mxu0
        %v1161 = vpop.f32.mrb[0].mxu0
        %1162 = vdwg.mxu0
        %v1163 = vmul.f32 %v1158, 0.35355338
        %v1164 = vadd.f32 %v1163, %v1034
        %v1165 = vsel %vm1116, %v1164, -inf
        %1166 = vmax.xlane.f32.xlu0 %v1165
        %v1167 = vpop.xlane.xlu0 %1166
        %v1168 = vsub.f32 %v1164, %v1167
        %v1169 = vmul.f32 %v1168, 1.442695
        %v1170 = vpow.pop %v1169
        %v1171 = vsel %vm1116, %v1170, 0.0
        %1172 = vadd.xlane.f32.xlu0 %v1171
        %v1173 = vpop.xlane.xlu0 %1172
        %v1174 = vrcp.pop %v1173
        %v1175 = vmul.f32 %v1170, %v1174
        %1176 = vst.msk [vmem:[%s999] sm:$0xff] %vm1116, %v1175
        %v1177 = vpack.c.bf16 %v1175, %v1175
        %1178 = vrot.lane.b32.xlu0 %v1112, 64
        %v1179 = vpop.permute.xlu0 %1178
        %v1181 = vsel %vm1116, %v1177, 0
        %vm1183 = vcmask 1043456
        %v1185 = vsel %vm1183, %v1179, 0
        %1187 = vmatprep.subr.bf16.mxu0 0
        %1188 = vmatpush1.bf16.msra.mxu0 %v1185
        %1189 = vmatprep.subr.bf16.mxu0 0
        %1190 = vmatpush1.bf16.msra.mxu0 0
        %1191 = vmatprep.subr.bf16.mxu0 0
        %1192 = vmatpush1.bf16.msra.mxu0 0
        %1193 = vmatprep.subr.bf16.mxu0 0
        %1194 = vmatpush1.bf16.msra.mxu0 0
        %1195 = vmatprep.subr.bf16.mxu0 0
        %1196 = vmatpush1.bf16.msra.mxu0 0
        %1197 = vmatprep.subr.bf16.mxu0 0
        %1198 = vmatpush1.bf16.msra.mxu0 0
        %1199 = vmatprep.subr.bf16.mxu0 0
        %1200 = vmatpush1.bf16.msra.mxu0 0
        %1201 = vmatprep.subr.bf16.mxu0 0
        %1202 = vmatpush1.bf16.msra.mxu0 0
        %1203 = vmatprep.subr.bf16.mxu0 0
        %1204 = vmatpush1.bf16.msra.mxu0 0
        %1205 = vmatprep.subr.bf16.mxu0 0
        %1206 = vmatpush1.bf16.msra.mxu0 0
        %1207 = vmatprep.subr.bf16.mxu0 0
        %1208 = vmatpush1.bf16.msra.mxu0 0
        %1209 = vmatprep.subr.bf16.mxu0 0
        %1210 = vmatpush1.bf16.msra.mxu0 0
        %1211 = vmatprep.subr.bf16.mxu0 0
        %1212 = vmatpush1.bf16.msra.mxu0 0
        %1213 = vmatprep.subr.bf16.mxu0 0
        %1214 = vmatpush1.bf16.msra.mxu0 0
        %1215 = vmatprep.subr.bf16.mxu0 0
        %1216 = vmatpush1.bf16.msra.mxu0 0
        %1217 = vmatprep.subr.bf16.mxu0 0
        %1218 = vmatpush1.bf16.msra.mxu0 0
        %1219 = vmatprep.mubr.bf16.mxu0 0
        %1220 = vmatmul.mubr.bf16.gmra.mrb[0].mxu0 %v1181
        %v1221 = vpop.f32.mrb[0].mxu0
        %v1222 = vadd.f32 0.0, %v1221
        %v1223 = vpop.f32.mrb[0].mxu0
        %v1224 = vpop.f32.mrb[0].mxu0
        %v1225 = vpop.f32.mrb[0].mxu0
        %1226 = vdwg.mxu0
        %1227 = vrot.lane.b32.xlu0 %v1112, 120
        %v1228 = vpop.permute.xlu0 %1227
        %1229 = vrot.lane.b32.xlu0 %v1112, 88
        %v1230 = vpop.permute.xlu0 %1229
        %v1232 = vsel %vm1116, %v1228, 0
        %v1235 = vsel %vm1116, %v1230, 0
        %1237 = vmatprep.subr.bf16.mxu0 0
        %1238 = vmatpush1.bf16.xpose.msra.mxu0 %v1235
        %1239 = vmatprep.subr.bf16.mxu0 0
        %1240 = vmatpush1.bf16.xpose.msra.mxu0 0
        %1241 = vmatprep.subr.bf16.mxu0 0
        %1242 = vmatpush1.bf16.xpose.msra.mxu0 0
        %1243 = vmatprep.subr.bf16.mxu0 0
        %1244 = vmatpush1.bf16.xpose.msra.mxu0 0
        %1245 = vmatprep.subr.bf16.mxu0 0
        %1246 = vmatpush1.bf16.xpose.msra.mxu0 0
        %1247 = vmatprep.subr.bf16.mxu0 0
        %1248 = vmatpush1.bf16.xpose.msra.mxu0 0
        %1249 = vmatprep.subr.bf16.mxu0 0
        %1250 = vmatpush1.bf16.xpose.msra.mxu0 0
        %1251 = vmatprep.subr.bf16.mxu0 0
        %1252 = vmatpush1.bf16.xpose.msra.mxu0 0
        %1253 = vmatprep.subr.bf16.mxu0 0
        %1254 = vmatpush1.bf16.xpose.msra.mxu0 0
        %1255 = vmatprep.subr.bf16.mxu0 0
        %1256 = vmatpush1.bf16.xpose.msra.mxu0 0
        %1257 = vmatprep.subr.bf16.mxu0 0
        %1258 = vmatpush1.bf16.xpose.msra.mxu0 0
        %1259 = vmatprep.subr.bf16.mxu0 0
        %1260 = vmatpush1.bf16.xpose.msra.mxu0 0
        %1261 = vmatprep.subr.bf16.mxu0 0
        %1262 = vmatpush1.bf16.xpose.msra.mxu0 0
        %1263 = vmatprep.subr.bf16.mxu0 0
        %1264 = vmatpush1.bf16.xpose.msra.mxu0 0
        %1265 = vmatprep.subr.bf16.mxu0 0
        %1266 = vmatpush1.bf16.xpose.msra.mxu0 0
        %1267 = vmatprep.subr.bf16.mxu0 0
        %1268 = vmatpush1.bf16.xpose.msra.mxu0 0
        %1269 = vmatprep.mubr.bf16.mxu0 0
        %1270 = vmatmul.mubr.bf16.gmra.mrb[0].mxu0 %v1232
        %v1271 = vpop.f32.mrb[0].mxu0
        %v1272 = vadd.f32 0.0, %v1271
        %v1273 = vpop.f32.mrb[0].mxu0
        %v1274 = vpop.f32.mrb[0].mxu0
        %v1275 = vpop.f32.mrb[0].mxu0
        %1276 = vdwg.mxu0
        %v1277 = vmul.f32 %v1272, 0.35355338
        %v1278 = vadd.f32 %v1277, %v1034
        %v1279 = vsel %vm1116, %v1278, -inf
        %1280 = vmax.xlane.f32.xlu0 %v1279
        %v1281 = vpop.xlane.xlu0 %1280
        %v1282 = vsub.f32 %v1278, %v1281
        %v1283 = vmul.f32 %v1282, 1.442695
        %v1284 = vpow.pop %v1283
        %v1285 = vsel %vm1116, %v1284, 0.0
        %1286 = vadd.xlane.f32.xlu0 %v1285
        %v1287 = vpop.xlane.xlu0 %1286
        %v1288 = vrcp.pop %v1287
        %v1289 = vmul.f32 %v1284, %v1288
        %s1290 = scalar_lea.vmem %s999, 8
        %1291 = vst.msk [vmem:[%s1290] sm:$0xff] %vm1116, %v1289
        %v1292 = vpack.c.bf16 %v1289, %v1289
        %1293 = vrot.lane.b32.xlu0 %v1112, 56
        %v1294 = vpop.permute.xlu0 %1293
        %v1296 = vsel %vm1116, %v1292, 0
        %v1299 = vsel %vm1183, %v1294, 0
        %1301 = vmatprep.subr.bf16.mxu0 0
        %1302 = vmatpush1.bf16.msra.mxu0 %v1299
        %1303 = vmatprep.subr.bf16.mxu0 0
        %1304 = vmatpush1.bf16.msra.mxu0 0
        %1305 = vmatprep.subr.bf16.mxu0 0
        %1306 = vmatpush1.bf16.msra.mxu0 0
        %1307 = vmatprep.subr.bf16.mxu0 0
        %1308 = vmatpush1.bf16.msra.mxu0 0
        %1309 = vmatprep.subr.bf16.mxu0 0
        %1310 = vmatpush1.bf16.msra.mxu0 0
        %1311 = vmatprep.subr.bf16.mxu0 0
        %1312 = vmatpush1.bf16.msra.mxu0 0
        %1313 = vmatprep.subr.bf16.mxu0 0
        %1314 = vmatpush1.bf16.msra.mxu0 0
        %1315 = vmatprep.subr.bf16.mxu0 0
        %1316 = vmatpush1.bf16.msra.mxu0 0
        %1317 = vmatprep.subr.bf16.mxu0 0
        %1318 = vmatpush1.bf16.msra.mxu0 0
        %1319 = vmatprep.subr.bf16.mxu0 0
        %1320 = vmatpush1.bf16.msra.mxu0 0
        %1321 = vmatprep.subr.bf16.mxu0 0
        %1322 = vmatpush1.bf16.msra.mxu0 0
        %1323 = vmatprep.subr.bf16.mxu0 0
        %1324 = vmatpush1.bf16.msra.mxu0 0
        %1325 = vmatprep.subr.bf16.mxu0 0
        %1326 = vmatpush1.bf16.msra.mxu0 0
        %1327 = vmatprep.subr.bf16.mxu0 0
        %1328 = vmatpush1.bf16.msra.mxu0 0
        %1329 = vmatprep.subr.bf16.mxu0 0
        %1330 = vmatpush1.bf16.msra.mxu0 0
        %1331 = vmatprep.subr.bf16.mxu0 0
        %1332 = vmatpush1.bf16.msra.mxu0 0
        %1333 = vmatprep.mubr.bf16.mxu0 0
        %1334 = vmatmul.mubr.bf16.gmra.mrb[0].mxu0 %v1296
        %v1335 = vpop.f32.mrb[0].mxu0
        %v1336 = vadd.f32 0.0, %v1335
        %v1337 = vpop.f32.mrb[0].mxu0
        %v1338 = vpop.f32.mrb[0].mxu0
        %v1339 = vpop.f32.mrb[0].mxu0
        %1340 = vdwg.mxu0
        %1341 = vrot.lane.b32.xlu0 %v1112, 112
        %v1342 = vpop.permute.xlu0 %1341
        %1343 = vrot.lane.b32.xlu0 %v1112, 80
        %v1344 = vpop.permute.xlu0 %1343
        %v1346 = vsel %vm1116, %v1342, 0
        %v1349 = vsel %vm1116, %v1344, 0
        %1351 = vmatprep.subr.bf16.mxu0 0
        %1352 = vmatpush1.bf16.xpose.msra.mxu0 %v1349
        %1353 = vmatprep.subr.bf16.mxu0 0
        %1354 = vmatpush1.bf16.xpose.msra.mxu0 0
        %1355 = vmatprep.subr.bf16.mxu0 0
        %1356 = vmatpush1.bf16.xpose.msra.mxu0 0
        %1357 = vmatprep.subr.bf16.mxu0 0
        %1358 = vmatpush1.bf16.xpose.msra.mxu0 0
        %1359 = vmatprep.subr.bf16.mxu0 0
        %1360 = vmatpush1.bf16.xpose.msra.mxu0 0
        %1361 = vmatprep.subr.bf16.mxu0 0
        %1362 = vmatpush1.bf16.xpose.msra.mxu0 0
        %1363 = vmatprep.subr.bf16.mxu0 0
        %1364 = vmatpush1.bf16.xpose.msra.mxu0 0
        %1365 = vmatprep.subr.bf16.mxu0 0
        %1366 = vmatpush1.bf16.xpose.msra.mxu0 0
        %1367 = vmatprep.subr.bf16.mxu0 0
        %1368 = vmatpush1.bf16.xpose.msra.mxu0 0
        %1369 = vmatprep.subr.bf16.mxu0 0
        %1370 = vmatpush1.bf16.xpose.msra.mxu0 0
        %1371 = vmatprep.subr.bf16.mxu0 0
        %1372 = vmatpush1.bf16.xpose.msra.mxu0 0
        %1373 = vmatprep.subr.bf16.mxu0 0
        %1374 = vmatpush1.bf16.xpose.msra.mxu0 0
        %1375 = vmatprep.subr.bf16.mxu0 0
        %1376 = vmatpush1.bf16.xpose.msra.mxu0 0
        %1377 = vmatprep.subr.bf16.mxu0 0
        %1378 = vmatpush1.bf16.xpose.msra.mxu0 0
        %1379 = vmatprep.subr.bf16.mxu0 0
        %1380 = vmatpush1.bf16.xpose.msra.mxu0 0
        %1381 = vmatprep.subr.bf16.mxu0 0
        %1382 = vmatpush1.bf16.xpose.msra.mxu0 0
        %1383 = vmatprep.mubr.bf16.mxu0 0
        %1384 = vmatmul.mubr.bf16.gmra.mrb[0].mxu0 %v1346
        %v1385 = vpop.f32.mrb[0].mxu0
        %v1386 = vadd.f32 0.0, %v1385
        %v1387 = vpop.f32.mrb[0].mxu0
        %v1388 = vpop.f32.mrb[0].mxu0
        %v1389 = vpop.f32.mrb[0].mxu0
        %1390 = vdwg.mxu0
        %v1391 = vmul.f32 %v1386, 0.35355338
        %v1392 = vadd.f32 %v1391, %v1034
        %v1393 = vsel %vm1116, %v1392, -inf
        %1394 = vmax.xlane.f32.xlu0 %v1393
        %v1395 = vpop.xlane.xlu0 %1394
        %v1396 = vsub.f32 %v1392, %v1395
        %v1397 = vmul.f32 %v1396, 1.442695
        %v1398 = vpow.pop %v1397
        %v1399 = vsel %vm1116, %v1398, 0.0
        %1400 = vadd.xlane.f32.xlu0 %v1399
        %v1401 = vpop.xlane.xlu0 %1400
        %v1402 = vrcp.pop %v1401
        %v1403 = vmul.f32 %v1398, %v1402
        %s1404 = scalar_lea.vmem %s999, 16
        %1405 = vst.msk [vmem:[%s1404] sm:$0xff] %vm1116, %v1403
        %v1406 = vpack.c.bf16 %v1403, %v1403
        %1407 = vrot.lane.b32.xlu0 %v1112, 48
        %v1408 = vpop.permute.xlu0 %1407
        %v1410 = vsel %vm1116, %v1406, 0
        %v1413 = vsel %vm1183, %v1408, 0
        %1415 = vmatprep.subr.bf16.mxu0 0
        %1416 = vmatpush1.bf16.msra.mxu0 %v1413
        %1417 = vmatprep.subr.bf16.mxu0 0
        %1418 = vmatpush1.bf16.msra.mxu0 0
        %1419 = vmatprep.subr.bf16.mxu0 0
        %1420 = vmatpush1.bf16.msra.mxu0 0
        %1421 = vmatprep.subr.bf16.mxu0 0
        %1422 = vmatpush1.bf16.msra.mxu0 0
        %1423 = vmatprep.subr.bf16.mxu0 0
        %1424 = vmatpush1.bf16.msra.mxu0 0
        %1425 = vmatprep.subr.bf16.mxu0 0
        %1426 = vmatpush1.bf16.msra.mxu0 0
        %1427 = vmatprep.subr.bf16.mxu0 0
        %1428 = vmatpush1.bf16.msra.mxu0 0
        %1429 = vmatprep.subr.bf16.mxu0 0
        %1430 = vmatpush1.bf16.msra.mxu0 0
        %1431 = vmatprep.subr.bf16.mxu0 0
        %1432 = vmatpush1.bf16.msra.mxu0 0
        %1433 = vmatprep.subr.bf16.mxu0 0
        %1434 = vmatpush1.bf16.msra.mxu0 0
        %1435 = vmatprep.subr.bf16.mxu0 0
        %1436 = vmatpush1.bf16.msra.mxu0 0
        %1437 = vmatprep.subr.bf16.mxu0 0
        %1438 = vmatpush1.bf16.msra.mxu0 0
        %1439 = vmatprep.subr.bf16.mxu0 0
        %1440 = vmatpush1.bf16.msra.mxu0 0
        %1441 = vmatprep.subr.bf16.mxu0 0
        %1442 = vmatpush1.bf16.msra.mxu0 0
        %1443 = vmatprep.subr.bf16.mxu0 0
        %1444 = vmatpush1.bf16.msra.mxu0 0
        %1445 = vmatprep.subr.bf16.mxu0 0
        %1446 = vmatpush1.bf16.msra.mxu0 0
        %1447 = vmatprep.mubr.bf16.mxu0 0
        %1448 = vmatmul.mubr.bf16.gmra.mrb[0].mxu0 %v1410
        %v1449 = vpop.f32.mrb[0].mxu0
        %v1450 = vadd.f32 0.0, %v1449
        %v1451 = vpop.f32.mrb[0].mxu0
        %v1452 = vpop.f32.mrb[0].mxu0
        %v1453 = vpop.f32.mrb[0].mxu0
        %1454 = vdwg.mxu0
        %1455 = vrot.lane.b32.xlu0 %v1112, 104
        %v1456 = vpop.permute.xlu0 %1455
        %1457 = vrot.lane.b32.xlu0 %v1112, 72
        %v1458 = vpop.permute.xlu0 %1457
        %v1460 = vsel %vm1116, %v1456, 0
        %v1463 = vsel %vm1116, %v1458, 0
        %1465 = vmatprep.subr.bf16.mxu0 0
        %1466 = vmatpush1.bf16.xpose.msra.mxu0 %v1463
        %1467 = vmatprep.subr.bf16.mxu0 0
        %1468 = vmatpush1.bf16.xpose.msra.mxu0 0
        %1469 = vmatprep.subr.bf16.mxu0 0
        %1470 = vmatpush1.bf16.xpose.msra.mxu0 0
        %1471 = vmatprep.subr.bf16.mxu0 0
        %1472 = vmatpush1.bf16.xpose.msra.mxu0 0
        %1473 = vmatprep.subr.bf16.mxu0 0
        %1474 = vmatpush1.bf16.xpose.msra.mxu0 0
        %1475 = vmatprep.subr.bf16.mxu0 0
        %1476 = vmatpush1.bf16.xpose.msra.mxu0 0
        %1477 = vmatprep.subr.bf16.mxu0 0
        %1478 = vmatpush1.bf16.xpose.msra.mxu0 0
        %1479 = vmatprep.subr.bf16.mxu0 0
        %1480 = vmatpush1.bf16.xpose.msra.mxu0 0
        %1481 = vmatprep.subr.bf16.mxu0 0
        %1482 = vmatpush1.bf16.xpose.msra.mxu0 0
        %1483 = vmatprep.subr.bf16.mxu0 0
        %1484 = vmatpush1.bf16.xpose.msra.mxu0 0
        %1485 = vmatprep.subr.bf16.mxu0 0
        %1486 = vmatpush1.bf16.xpose.msra.mxu0 0
        %1487 = vmatprep.subr.bf16.mxu0 0
        %1488 = vmatpush1.bf16.xpose.msra.mxu0 0
        %1489 = vmatprep.subr.bf16.mxu0 0
        %1490 = vmatpush1.bf16.xpose.msra.mxu0 0
        %1491 = vmatprep.subr.bf16.mxu0 0
        %1492 = vmatpush1.bf16.xpose.msra.mxu0 0
        %1493 = vmatprep.subr.bf16.mxu0 0
        %1494 = vmatpush1.bf16.xpose.msra.mxu0 0
        %1495 = vmatprep.subr.bf16.mxu0 0
        %1496 = vmatpush1.bf16.xpose.msra.mxu0 0
        %1497 = vmatprep.mubr.bf16.mxu0 0
        %1498 = vmatmul.mubr.bf16.gmra.mrb[0].mxu0 %v1460
        %v1499 = vpop.f32.mrb[0].mxu0
        %v1500 = vadd.f32 0.0, %v1499
        %v1501 = vpop.f32.mrb[0].mxu0
        %v1502 = vpop.f32.mrb[0].mxu0
        %v1503 = vpop.f32.mrb[0].mxu0
        %1504 = vdwg.mxu0
        %v1505 = vmul.f32 %v1500, 0.35355338
        %v1506 = vadd.f32 %v1505, %v1034
        %v1507 = vsel %vm1116, %v1506, -inf
        %1508 = vmax.xlane.f32.xlu0 %v1507
        %v1509 = vpop.xlane.xlu0 %1508
        %v1510 = vsub.f32 %v1506, %v1509
        %v1511 = vmul.f32 %v1510, 1.442695
        %v1512 = vpow.pop %v1511
        %v1513 = vsel %vm1116, %v1512, 0.0
        %1514 = vadd.xlane.f32.xlu0 %v1513
        %v1515 = vpop.xlane.xlu0 %1514
        %v1516 = vrcp.pop %v1515
        %v1517 = vmul.f32 %v1512, %v1516
        %s1518 = scalar_lea.vmem %s999, 24
        %1519 = vst.msk [vmem:[%s1518] sm:$0xff] %vm1116, %v1517
        %v1520 = vpack.c.bf16 %v1517, %v1517
        %1521 = vrot.lane.b32.xlu0 %v1112, 40
        %v1522 = vpop.permute.xlu0 %1521
        %v1524 = vsel %vm1116, %v1520, 0
        %v1527 = vsel %vm1183, %v1522, 0
        %1529 = vmatprep.subr.bf16.mxu0 0
        %1530 = vmatpush1.bf16.msra.mxu0 %v1527
        %1531 = vmatprep.subr.bf16.mxu0 0
        %1532 = vmatpush1.bf16.msra.mxu0 0
        %1533 = vmatprep.subr.bf16.mxu0 0
        %1534 = vmatpush1.bf16.msra.mxu0 0
        %1535 = vmatprep.subr.bf16.mxu0 0
        %1536 = vmatpush1.bf16.msra.mxu0 0
        %1537 = vmatprep.subr.bf16.mxu0 0
        %1538 = vmatpush1.bf16.msra.mxu0 0
        %1539 = vmatprep.subr.bf16.mxu0 0
        %1540 = vmatpush1.bf16.msra.mxu0 0
        %1541 = vmatprep.subr.bf16.mxu0 0
        %1542 = vmatpush1.bf16.msra.mxu0 0
        %1543 = vmatprep.subr.bf16.mxu0 0
        %1544 = vmatpush1.bf16.msra.mxu0 0
        %1545 = vmatprep.subr.bf16.mxu0 0
        %1546 = vmatpush1.bf16.msra.mxu0 0
        %1547 = vmatprep.subr.bf16.mxu0 0
        %1548 = vmatpush1.bf16.msra.mxu0 0
        %1549 = vmatprep.subr.bf16.mxu0 0
        %1550 = vmatpush1.bf16.msra.mxu0 0
        %1551 = vmatprep.subr.bf16.mxu0 0
        %1552 = vmatpush1.bf16.msra.mxu0 0
        %1553 = vmatprep.subr.bf16.mxu0 0
        %1554 = vmatpush1.bf16.msra.mxu0 0
        %1555 = vmatprep.subr.bf16.mxu0 0
        %1556 = vmatpush1.bf16.msra.mxu0 0
        %1557 = vmatprep.subr.bf16.mxu0 0
        %1558 = vmatpush1.bf16.msra.mxu0 0
        %1559 = vmatprep.subr.bf16.mxu0 0
        %1560 = vmatpush1.bf16.msra.mxu0 0
        %1561 = vmatprep.mubr.bf16.mxu0 0
        %1562 = vmatmul.mubr.bf16.gmra.mrb[0].mxu0 %v1524
        %v1563 = vpop.f32.mrb[0].mxu0
        %v1564 = vadd.f32 0.0, %v1563
        %v1565 = vpop.f32.mrb[0].mxu0
        %v1566 = vpop.f32.mrb[0].mxu0
        %v1567 = vpop.f32.mrb[0].mxu0
        %1568 = vdwg.mxu0
        %1570 = vrot.lane.b32.xlu0 %v1336, 8
        %v1571 = vpop.permute.xlu0 %1570
        %1574 = vrot.lane.b32.xlu0 %v1450, 16
        %v1575 = vpop.permute.xlu0 %1574
        %1578 = vrot.lane.b32.xlu0 %v1564, 24
        %v1579 = vpop.permute.xlu0 %1578
        %v1581 = vsel %vm1116, %v1222, %v1571
        %vm1582 = vcmask 130048
        %v1583 = vsel %vm1582, %v1581, %v1575
        %vm1584 = vcmask 195584
        %v1585 = vsel %vm1584, %v1583, %v1579
        %v1586 = vld [vmem:[%s943] sm:$0xf]
        %v1587 = vld [vmem:[%s943 + $0x4] sm:$0xf]
        %v1588 = vld [vmem:[%s943 + $0x8] sm:$0xf]
        %v1589 = vld [vmem:[%s943 + $0xc] sm:$0xf]
        %v1590 = vpack.c.bf16 %v1585, %v1585
        %v1591 = vld [vmem:[%s946] sm:$0x1]
        %v1593 = vlaneseq
        %v1594 = vshrl.u32 %v1593, 7
        %v1595 = vsub.s32 0, %v1594
        %v1596 = vrot.slane %v1591, %v1595
        %v1602 = vunpack.c.l.b16 %v1586
        %v1603 = vunpack.c.l.b16 %v1587
        %v1604 = vunpack.c.l.b16 %v1588
        %v1605 = vunpack.c.l.b16 %v1589
        %v1606 = vpack.c.b16 %v1603, %v1602
        %v1607 = vpack.c.b16 %v1605, %v1604
        %v1611 = vsel %vm1068, %v1590, 0
        %1613 = vmatprep.subr.bf16.mxu0 0
        %1614 = vmatpush1.bf16.msra.mxu0 %v1606
        %1615 = vmatprep.subr.bf16.mxu0 0
        %1616 = vmatpush1.bf16.msra.mxu0 %v1607
        %1617 = vmatprep.subr.bf16.mxu0 0
        %1618 = vmatpush1.bf16.msra.mxu0 0
        %1619 = vmatprep.subr.bf16.mxu0 0
        %1620 = vmatpush1.bf16.msra.mxu0 0
        %1621 = vmatprep.subr.bf16.mxu0 0
        %1622 = vmatpush1.bf16.msra.mxu0 0
        %1623 = vmatprep.subr.bf16.mxu0 0
        %1624 = vmatpush1.bf16.msra.mxu0 0
        %1625 = vmatprep.subr.bf16.mxu0 0
        %1626 = vmatpush1.bf16.msra.mxu0 0
        %1627 = vmatprep.subr.bf16.mxu0 0
        %1628 = vmatpush1.bf16.msra.mxu0 0
        %1629 = vmatprep.subr.bf16.mxu0 0
        %1630 = vmatpush1.bf16.msra.mxu0 0
        %1631 = vmatprep.subr.bf16.mxu0 0
        %1632 = vmatpush1.bf16.msra.mxu0 0
        %1633 = vmatprep.subr.bf16.mxu0 0
        %1634 = vmatpush1.bf16.msra.mxu0 0
        %1635 = vmatprep.subr.bf16.mxu0 0
        %1636 = vmatpush1.bf16.msra.mxu0 0
        %1637 = vmatprep.subr.bf16.mxu0 0
        %1638 = vmatpush1.bf16.msra.mxu0 0
        %1639 = vmatprep.subr.bf16.mxu0 0
        %1640 = vmatpush1.bf16.msra.mxu0 0
        %1641 = vmatprep.subr.bf16.mxu0 0
        %1642 = vmatpush1.bf16.msra.mxu0 0
        %1643 = vmatprep.subr.bf16.mxu0 0
        %1644 = vmatpush1.bf16.msra.mxu0 0
        %1645 = vmatprep.mubr.bf16.mxu0 0
        %1646 = vmatmul.mubr.bf16.gmra.mrb[0].mxu0 %v1611
        %v1647 = vpop.f32.mrb[0].mxu0
        %v1648 = vadd.f32 %v1596, %v1647
        %v1649 = vpop.f32.mrb[0].mxu0
        %v1650 = vpop.f32.mrb[0].mxu0
        %v1651 = vpop.f32.mrb[0].mxu0
        %1652 = vdwg.mxu0
        %v1653 = vadd.f32 %v1017, %v1648
        %v1654 = vsel %vm1068, %v1653, 0.0
        %1655 = vadd.xlane.f32.xlu0 %v1654
        %v1656 = vpop.xlane.xlu0 %1655
        %v1657 = vrcp.pop 32.0
        %v1658 = vmul.f32 %v1656, %v1657
        %v1659 = vsub.f32 %v1653, %v1658
        %v1660 = vmul.f32 %v1659, %v1659
        %v1661 = vsel %vm1068, %v1660, 0.0
        %1662 = vadd.xlane.f32.xlu0 %v1661
        %v1663 = vpop.xlane.xlu0 %1662
        %v1664 = vmul.f32 %v1663, %v1657
        %v1665 = vadd.f32 %v1664, 1e-12
        %v1666 = vrsqrt.pop %v1665
        %v1667 = vmul.f32 %v1659, %v1666
        %v1668 = vlaneseq
        %v1669 = vshrl.u32 %v1668, 7
        %v1670 = vsub.s32 0, %v1669
        %v1671 = vrot.slane %v1019, %v1670
        %v1672 = vmul.f32 %v1667, %v1671
        %v1673 = vlaneseq
        %v1674 = vshrl.u32 %v1673, 7
        %v1675 = vsub.s32 1, %v1674
        %v1676 = vrot.slane %v1019, %v1675
        %v1677 = vadd.f32 %v1672, %v1676
        %v1678 = vld [vmem:[%s951] sm:$0xf]
        %v1679 = vld [vmem:[%s951 + $0x4] sm:$0xf]
        %v1680 = vld [vmem:[%s951 + $0x8] sm:$0xf]
        %v1681 = vld [vmem:[%s951 + $0xc] sm:$0xf]
        %v1682 = vpack.c.bf16 %v1677, %v1677
        %v1683 = vld [vmem:[%s954] sm:$0x1]
        %v1685 = vlaneseq
        %v1686 = vshrl.u32 %v1685, 7
        %v1687 = vsub.s32 0, %v1686
        %v1688 = vrot.slane %v1683, %v1687
        %v1694 = vunpack.c.l.b16 %v1678
        %v1695 = vunpack.c.l.b16 %v1679
        %v1696 = vunpack.c.l.b16 %v1680
        %v1697 = vunpack.c.l.b16 %v1681
        %v1698 = vpack.c.b16 %v1695, %v1694
        %v1699 = vpack.c.b16 %v1697, %v1696
        %v1703 = vsel %vm1068, %v1682, 0
        %1705 = vmatprep.subr.bf16.mxu0 0
        %1706 = vmatpush1.bf16.msra.mxu0 %v1698
        %1707 = vmatprep.subr.bf16.mxu0 0
        %1708 = vmatpush1.bf16.msra.mxu0 %v1699
        %1709 = vmatprep.subr.bf16.mxu0 0
        %1710 = vmatpush1.bf16.msra.mxu0 0
        %1711 = vmatprep.subr.bf16.mxu0 0
        %1712 = vmatpush1.bf16.msra.mxu0 0
        %1713 = vmatprep.subr.bf16.mxu0 0
        %1714 = vmatpush1.bf16.msra.mxu0 0
        %1715 = vmatprep.subr.bf16.mxu0 0
        %1716 = vmatpush1.bf16.msra.mxu0 0
        %1717 = vmatprep.subr.bf16.mxu0 0
        %1718 = vmatpush1.bf16.msra.mxu0 0
        %1719 = vmatprep.subr.bf16.mxu0 0
        %1720 = vmatpush1.bf16.msra.mxu0 0
        %1721 = vmatprep.subr.bf16.mxu0 0
        %1722 = vmatpush1.bf16.msra.mxu0 0
        %1723 = vmatprep.subr.bf16.mxu0 0
        %1724 = vmatpush1.bf16.msra.mxu0 0
        %1725 = vmatprep.subr.bf16.mxu0 0
        %1726 = vmatpush1.bf16.msra.mxu0 0
        %1727 = vmatprep.subr.bf16.mxu0 0
        %1728 = vmatpush1.bf16.msra.mxu0 0
        %1729 = vmatprep.subr.bf16.mxu0 0
        %1730 = vmatpush1.bf16.msra.mxu0 0
        %1731 = vmatprep.subr.bf16.mxu0 0
        %1732 = vmatpush1.bf16.msra.mxu0 0
        %1733 = vmatprep.subr.bf16.mxu0 0
        %1734 = vmatpush1.bf16.msra.mxu0 0
        %1735 = vmatprep.subr.bf16.mxu0 0
        %1736 = vmatpush1.bf16.msra.mxu0 0
        %1737 = vmatprep.mubr.bf16.mxu0 0
        %1738 = vmatmul.mubr.bf16.gmra.mrb[0].mxu0 %v1703
        %v1739 = vpop.f32.mrb[0].mxu0
        %v1740 = vadd.f32 %v1688, %v1739
        %v1741 = vpop.f32.mrb[0].mxu0
        %v1742 = vpop.f32.mrb[0].mxu0
        %v1743 = vpop.f32.mrb[0].mxu0
        %1744 = vdwg.mxu0
        %v1745 = vld [vmem:[%s959] sm:$0xf]
        %v1746 = vld [vmem:[%s959 + $0x4] sm:$0xf]
        %v1747 = vld [vmem:[%s959 + $0x8] sm:$0xf]
        %v1748 = vld [vmem:[%s959 + $0xc] sm:$0xf]
        %v1749 = vpack.c.bf16 %v1018, %v1018
        %v1750 = vld [vmem:[%s962] sm:$0x1]
        %v1752 = vlaneseq
        %v1753 = vshrl.u32 %v1752, 7
        %v1754 = vsub.s32 0, %v1753
        %v1755 = vrot.slane %v1750, %v1754
        %v1761 = vunpack.c.l.b16 %v1745
        %v1762 = vunpack.c.l.b16 %v1746
        %v1763 = vunpack.c.l.b16 %v1747
        %v1764 = vunpack.c.l.b16 %v1748
        %v1765 = vpack.c.b16 %v1762, %v1761
        %v1766 = vpack.c.b16 %v1764, %v1763
        %v1770 = vsel %vm1068, %v1749, 0
        %1772 = vmatprep.subr.bf16.mxu0 0
        %1773 = vmatpush1.bf16.msra.mxu0 %v1765
        %1774 = vmatprep.subr.bf16.mxu0 0
        %1775 = vmatpush1.bf16.msra.mxu0 %v1766
        %1776 = vmatprep.subr.bf16.mxu0 0
        %1777 = vmatpush1.bf16.msra.mxu0 0
        %1778 = vmatprep.subr.bf16.mxu0 0
        %1779 = vmatpush1.bf16.msra.mxu0 0
        %1780 = vmatprep.subr.bf16.mxu0 0
        %1781 = vmatpush1.bf16.msra.mxu0 0
        %1782 = vmatprep.subr.bf16.mxu0 0
        %1783 = vmatpush1.bf16.msra.mxu0 0
        %1784 = vmatprep.subr.bf16.mxu0 0
        %1785 = vmatpush1.bf16.msra.mxu0 0
        %1786 = vmatprep.subr.bf16.mxu0 0
        %1787 = vmatpush1.bf16.msra.mxu0 0
        %1788 = vmatprep.subr.bf16.mxu0 0
        %1789 = vmatpush1.bf16.msra.mxu0 0
        %1790 = vmatprep.subr.bf16.mxu0 0
        %1791 = vmatpush1.bf16.msra.mxu0 0
        %1792 = vmatprep.subr.bf16.mxu0 0
        %1793 = vmatpush1.bf16.msra.mxu0 0
        %1794 = vmatprep.subr.bf16.mxu0 0
        %1795 = vmatpush1.bf16.msra.mxu0 0
        %1796 = vmatprep.subr.bf16.mxu0 0
        %1797 = vmatpush1.bf16.msra.mxu0 0
        %1798 = vmatprep.subr.bf16.mxu0 0
        %1799 = vmatpush1.bf16.msra.mxu0 0
        %1800 = vmatprep.subr.bf16.mxu0 0
        %1801 = vmatpush1.bf16.msra.mxu0 0
        %1802 = vmatprep.subr.bf16.mxu0 0
        %1803 = vmatpush1.bf16.msra.mxu0 0
        %1804 = vmatprep.mubr.bf16.mxu0 0
        %1805 = vmatmul.mubr.bf16.gmra.mrb[0].mxu0 %v1770
        %v1806 = vpop.f32.mrb[0].mxu0
        %v1807 = vadd.f32 %v1755, %v1806
        %v1808 = vpop.f32.mrb[0].mxu0
        %v1809 = vpop.f32.mrb[0].mxu0
        %v1810 = vpop.f32.mrb[0].mxu0
        %1811 = vdwg.mxu0
        %v1812 = vpack.c.bf16 %v1740, %v1740
        %v1813 = vpack.c.bf16 %v1807, %v1807
        %v1815 = vsel %vm1116, %v1812, 0
        %v1818 = vsel %vm1116, %v1813, 0
        %1820 = vmatprep.subr.bf16.mxu0 0
        %1821 = vmatpush1.bf16.xpose.msra.mxu0 %v1818
        %1822 = vmatprep.subr.bf16.mxu0 0
        %1823 = vmatpush1.bf16.xpose.msra.mxu0 0
        %1824 = vmatprep.subr.bf16.mxu0 0
        %1825 = vmatpush1.bf16.xpose.msra.mxu0 0
        %1826 = vmatprep.subr.bf16.mxu0 0
        %1827 = vmatpush1.bf16.xpose.msra.mxu0 0
        %1828 = vmatprep.subr.bf16.mxu0 0
        %1829 = vmatpush1.bf16.xpose.msra.mxu0 0
        %1830 = vmatprep.subr.bf16.mxu0 0
        %1831 = vmatpush1.bf16.xpose.msra.mxu0 0
        %1832 = vmatprep.subr.bf16.mxu0 0
        %1833 = vmatpush1.bf16.xpose.msra.mxu0 0
        %1834 = vmatprep.subr.bf16.mxu0 0
        %1835 = vmatpush1.bf16.xpose.msra.mxu0 0
        %1836 = vmatprep.subr.bf16.mxu0 0
        %1837 = vmatpush1.bf16.xpose.msra.mxu0 0
        %1838 = vmatprep.subr.bf16.mxu0 0
        %1839 = vmatpush1.bf16.xpose.msra.mxu0 0
        %1840 = vmatprep.subr.bf16.mxu0 0
        %1841 = vmatpush1.bf16.xpose.msra.mxu0 0
        %1842 = vmatprep.subr.bf16.mxu0 0
        %1843 = vmatpush1.bf16.xpose.msra.mxu0 0
        %1844 = vmatprep.subr.bf16.mxu0 0
        %1845 = vmatpush1.bf16.xpose.msra.mxu0 0
        %1846 = vmatprep.subr.bf16.mxu0 0
        %1847 = vmatpush1.bf16.xpose.msra.mxu0 0
        %1848 = vmatprep.subr.bf16.mxu0 0
        %1849 = vmatpush1.bf16.xpose.msra.mxu0 0
        %1850 = vmatprep.subr.bf16.mxu0 0
        %1851 = vmatpush1.bf16.xpose.msra.mxu0 0
        %1852 = vmatprep.mubr.bf16.mxu0 0
        %1853 = vmatmul.mubr.bf16.gmra.mrb[0].mxu0 %v1815
        %v1854 = vpop.f32.mrb[0].mxu0
        %v1855 = vadd.f32 0.0, %v1854
        %v1856 = vpop.f32.mrb[0].mxu0
        %v1857 = vpop.f32.mrb[0].mxu0
        %v1858 = vpop.f32.mrb[0].mxu0
        %1859 = vdwg.mxu0
        %v1860 = vmul.f32 %v1855, 0.35355338
        %v1861 = vadd.f32 %v1860, %v1043
        %v1862 = vsel %vm1116, %v1861, -inf
        %1863 = vmax.xlane.f32.xlu0 %v1862
        %v1864 = vpop.xlane.xlu0 %1863
        %v1865 = vsub.f32 %v1861, %v1864
        %v1866 = vmul.f32 %v1865, 1.442695
        %v1867 = vpow.pop %v1866
        %v1868 = vsel %vm1116, %v1867, 0.0
        %1869 = vadd.xlane.f32.xlu0 %v1868
        %v1870 = vpop.xlane.xlu0 %1869
        %v1871 = vrcp.pop %v1870
        %v1872 = vmul.f32 %v1867, %v1871
        %1873 = vst.msk [vmem:[%s1008] sm:$0xff] %vm1116, %v1872
        %v1874 = vpack.c.bf16 %v1872, %v1872
        %1876 = vrot.lane.b32.xlu0 %v1813, 96
        %v1877 = vpop.permute.xlu0 %1876
        %v1879 = vsel %vm1116, %v1874, 0
        %v1882 = vsel %vm1183, %v1877, 0
        %1884 = vmatprep.subr.bf16.mxu0 0
        %1885 = vmatpush1.bf16.msra.mxu0 %v1882
        %1886 = vmatprep.subr.bf16.mxu0 0
        %1887 = vmatpush1.bf16.msra.mxu0 0
        %1888 = vmatprep.subr.bf16.mxu0 0
        %1889 = vmatpush1.bf16.msra.mxu0 0
        %1890 = vmatprep.subr.bf16.mxu0 0
        %1891 = vmatpush1.bf16.msra.mxu0 0
        %1892 = vmatprep.subr.bf16.mxu0 0
        %1893 = vmatpush1.bf16.msra.mxu0 0
        %1894 = vmatprep.subr.bf16.mxu0 0
        %1895 = vmatpush1.bf16.msra.mxu0 0
        %1896 = vmatprep.subr.bf16.mxu0 0
        %1897 = vmatpush1.bf16.msra.mxu0 0
        %1898 = vmatprep.subr.bf16.mxu0 0
        %1899 = vmatpush1.bf16.msra.mxu0 0
        %1900 = vmatprep.subr.bf16.mxu0 0
        %1901 = vmatpush1.bf16.msra.mxu0 0
        %1902 = vmatprep.subr.bf16.mxu0 0
        %1903 = vmatpush1.bf16.msra.mxu0 0
        %1904 = vmatprep.subr.bf16.mxu0 0
        %1905 = vmatpush1.bf16.msra.mxu0 0
        %1906 = vmatprep.subr.bf16.mxu0 0
        %1907 = vmatpush1.bf16.msra.mxu0 0
        %1908 = vmatprep.subr.bf16.mxu0 0
        %1909 = vmatpush1.bf16.msra.mxu0 0
        %1910 = vmatprep.subr.bf16.mxu0 0
        %1911 = vmatpush1.bf16.msra.mxu0 0
        %1912 = vmatprep.subr.bf16.mxu0 0
        %1913 = vmatpush1.bf16.msra.mxu0 0
        %1914 = vmatprep.subr.bf16.mxu0 0
        %1915 = vmatpush1.bf16.msra.mxu0 0
        %1916 = vmatprep.mubr.bf16.mxu0 0
        %1917 = vmatmul.mubr.bf16.gmra.mrb[0].mxu0 %v1879
        %v1918 = vpop.f32.mrb[0].mxu0
        %v1919 = vadd.f32 0.0, %v1918
        %v1920 = vpop.f32.mrb[0].mxu0
        %v1921 = vpop.f32.mrb[0].mxu0
        %v1922 = vpop.f32.mrb[0].mxu0
        %1923 = vdwg.mxu0
        %1925 = vrot.lane.b32.xlu0 %v1812, 120
        %v1926 = vpop.permute.xlu0 %1925
        %1927 = vrot.lane.b32.xlu0 %v1813, 120
        %v1928 = vpop.permute.xlu0 %1927
        %v1930 = vsel %vm1116, %v1926, 0
        %v1933 = vsel %vm1116, %v1928, 0
        %1935 = vmatprep.subr.bf16.mxu0 0
        %1936 = vmatpush1.bf16.xpose.msra.mxu0 %v1933
        %1937 = vmatprep.subr.bf16.mxu0 0
        %1938 = vmatpush1.bf16.xpose.msra.mxu0 0
        %1939 = vmatprep.subr.bf16.mxu0 0
        %1940 = vmatpush1.bf16.xpose.msra.mxu0 0
        %1941 = vmatprep.subr.bf16.mxu0 0
        %1942 = vmatpush1.bf16.xpose.msra.mxu0 0
        %1943 = vmatprep.subr.bf16.mxu0 0
        %1944 = vmatpush1.bf16.xpose.msra.mxu0 0
        %1945 = vmatprep.subr.bf16.mxu0 0
        %1946 = vmatpush1.bf16.xpose.msra.mxu0 0
        %1947 = vmatprep.subr.bf16.mxu0 0
        %1948 = vmatpush1.bf16.xpose.msra.mxu0 0
        %1949 = vmatprep.subr.bf16.mxu0 0
        %1950 = vmatpush1.bf16.xpose.msra.mxu0 0
        %1951 = vmatprep.subr.bf16.mxu0 0
        %1952 = vmatpush1.bf16.xpose.msra.mxu0 0
        %1953 = vmatprep.subr.bf16.mxu0 0
        %1954 = vmatpush1.bf16.xpose.msra.mxu0 0
        %1955 = vmatprep.subr.bf16.mxu0 0
        %1956 = vmatpush1.bf16.xpose.msra.mxu0 0
        %1957 = vmatprep.subr.bf16.mxu0 0
        %1958 = vmatpush1.bf16.xpose.msra.mxu0 0
        %1959 = vmatprep.subr.bf16.mxu0 0
        %1960 = vmatpush1.bf16.xpose.msra.mxu0 0
        %1961 = vmatprep.subr.bf16.mxu0 0
        %1962 = vmatpush1.bf16.xpose.msra.mxu0 0
        %1963 = vmatprep.subr.bf16.mxu0 0
        %1964 = vmatpush1.bf16.xpose.msra.mxu0 0
        %1965 = vmatprep.subr.bf16.mxu0 0
        %1966 = vmatpush1.bf16.xpose.msra.mxu0 0
        %1967 = vmatprep.mubr.bf16.mxu0 0
        %1968 = vmatmul.mubr.bf16.gmra.mrb[0].mxu0 %v1930
        %v1969 = vpop.f32.mrb[0].mxu0
        %v1970 = vadd.f32 0.0, %v1969
        %v1971 = vpop.f32.mrb[0].mxu0
        %v1972 = vpop.f32.mrb[0].mxu0
        %v1973 = vpop.f32.mrb[0].mxu0
        %1974 = vdwg.mxu0
        %v1975 = vmul.f32 %v1970, 0.35355338
        %v1976 = vadd.f32 %v1975, %v1043
        %v1977 = vsel %vm1116, %v1976, -inf
        %1978 = vmax.xlane.f32.xlu0 %v1977
        %v1979 = vpop.xlane.xlu0 %1978
        %v1980 = vsub.f32 %v1976, %v1979
        %v1981 = vmul.f32 %v1980, 1.442695
        %v1982 = vpow.pop %v1981
        %v1983 = vsel %vm1116, %v1982, 0.0
        %1984 = vadd.xlane.f32.xlu0 %v1983
        %v1985 = vpop.xlane.xlu0 %1984
        %v1986 = vrcp.pop %v1985
        %v1987 = vmul.f32 %v1982, %v1986
        %s1988 = scalar_lea.vmem %s1008, 8
        %1989 = vst.msk [vmem:[%s1988] sm:$0xff] %vm1116, %v1987
        %v1990 = vpack.c.bf16 %v1987, %v1987
        %1991 = vrot.lane.b32.xlu0 %v1813, 88
        %v1992 = vpop.permute.xlu0 %1991
        %v1994 = vsel %vm1116, %v1990, 0
        %v1997 = vsel %vm1183, %v1992, 0
        %1999 = vmatprep.subr.bf16.mxu0 0
        %2000 = vmatpush1.bf16.msra.mxu0 %v1997
        %2001 = vmatprep.subr.bf16.mxu0 0
        %2002 = vmatpush1.bf16.msra.mxu0 0
        %2003 = vmatprep.subr.bf16.mxu0 0
        %2004 = vmatpush1.bf16.msra.mxu0 0
        %2005 = vmatprep.subr.bf16.mxu0 0
        %2006 = vmatpush1.bf16.msra.mxu0 0
        %2007 = vmatprep.subr.bf16.mxu0 0
        %2008 = vmatpush1.bf16.msra.mxu0 0
        %2009 = vmatprep.subr.bf16.mxu0 0
        %2010 = vmatpush1.bf16.msra.mxu0 0
        %2011 = vmatprep.subr.bf16.mxu0 0
        %2012 = vmatpush1.bf16.msra.mxu0 0
        %2013 = vmatprep.subr.bf16.mxu0 0
        %2014 = vmatpush1.bf16.msra.mxu0 0
        %2015 = vmatprep.subr.bf16.mxu0 0
        %2016 = vmatpush1.bf16.msra.mxu0 0
        %2017 = vmatprep.subr.bf16.mxu0 0
        %2018 = vmatpush1.bf16.msra.mxu0 0
        %2019 = vmatprep.subr.bf16.mxu0 0
        %2020 = vmatpush1.bf16.msra.mxu0 0
        %2021 = vmatprep.subr.bf16.mxu0 0
        %2022 = vmatpush1.bf16.msra.mxu0 0
        %2023 = vmatprep.subr.bf16.mxu0 0
        %2024 = vmatpush1.bf16.msra.mxu0 0
        %2025 = vmatprep.subr.bf16.mxu0 0
        %2026 = vmatpush1.bf16.msra.mxu0 0
        %2027 = vmatprep.subr.bf16.mxu0 0
        %2028 = vmatpush1.bf16.msra.mxu0 0
        %2029 = vmatprep.subr.bf16.mxu0 0
        %2030 = vmatpush1.bf16.msra.mxu0 0
        %2031 = vmatprep.mubr.bf16.mxu0 0
        %2032 = vmatmul.mubr.bf16.gmra.mrb[0].mxu0 %v1994
        %v2033 = vpop.f32.mrb[0].mxu0
        %v2034 = vadd.f32 0.0, %v2033
        %v2035 = vpop.f32.mrb[0].mxu0
        %v2036 = vpop.f32.mrb[0].mxu0
        %v2037 = vpop.f32.mrb[0].mxu0
        %2038 = vdwg.mxu0
        %2039 = vrot.lane.b32.xlu0 %v1812, 112
        %v2040 = vpop.permute.xlu0 %2039
        %2041 = vrot.lane.b32.xlu0 %v1813, 112
        %v2042 = vpop.permute.xlu0 %2041
        %v2044 = vsel %vm1116, %v2040, 0
        %v2047 = vsel %vm1116, %v2042, 0
        %2049 = vmatprep.subr.bf16.mxu0 0
        %2050 = vmatpush1.bf16.xpose.msra.mxu0 %v2047
        %2051 = vmatprep.subr.bf16.mxu0 0
        %2052 = vmatpush1.bf16.xpose.msra.mxu0 0
        %2053 = vmatprep.subr.bf16.mxu0 0
        %2054 = vmatpush1.bf16.xpose.msra.mxu0 0
        %2055 = vmatprep.subr.bf16.mxu0 0
        %2056 = vmatpush1.bf16.xpose.msra.mxu0 0
        %2057 = vmatprep.subr.bf16.mxu0 0
        %2058 = vmatpush1.bf16.xpose.msra.mxu0 0
        %2059 = vmatprep.subr.bf16.mxu0 0
        %2060 = vmatpush1.bf16.xpose.msra.mxu0 0
        %2061 = vmatprep.subr.bf16.mxu0 0
        %2062 = vmatpush1.bf16.xpose.msra.mxu0 0
        %2063 = vmatprep.subr.bf16.mxu0 0
        %2064 = vmatpush1.bf16.xpose.msra.mxu0 0
        %2065 = vmatprep.subr.bf16.mxu0 0
        %2066 = vmatpush1.bf16.xpose.msra.mxu0 0
        %2067 = vmatprep.subr.bf16.mxu0 0
        %2068 = vmatpush1.bf16.xpose.msra.mxu0 0
        %2069 = vmatprep.subr.bf16.mxu0 0
        %2070 = vmatpush1.bf16.xpose.msra.mxu0 0
        %2071 = vmatprep.subr.bf16.mxu0 0
        %2072 = vmatpush1.bf16.xpose.msra.mxu0 0
        %2073 = vmatprep.subr.bf16.mxu0 0
        %2074 = vmatpush1.bf16.xpose.msra.mxu0 0
        %2075 = vmatprep.subr.bf16.mxu0 0
        %2076 = vmatpush1.bf16.xpose.msra.mxu0 0
        %2077 = vmatprep.subr.bf16.mxu0 0
        %2078 = vmatpush1.bf16.xpose.msra.mxu0 0
        %2079 = vmatprep.subr.bf16.mxu0 0
        %2080 = vmatpush1.bf16.xpose.msra.mxu0 0
        %2081 = vmatprep.mubr.bf16.mxu0 0
        %2082 = vmatmul.mubr.bf16.gmra.mrb[0].mxu0 %v2044
        %v2083 = vpop.f32.mrb[0].mxu0
        %v2084 = vadd.f32 0.0, %v2083
        %v2085 = vpop.f32.mrb[0].mxu0
        %v2086 = vpop.f32.mrb[0].mxu0
        %v2087 = vpop.f32.mrb[0].mxu0
        %2088 = vdwg.mxu0
        %v2089 = vmul.f32 %v2084, 0.35355338
        %v2090 = vadd.f32 %v2089, %v1043
        %v2091 = vsel %vm1116, %v2090, -inf
        %2092 = vmax.xlane.f32.xlu0 %v2091
        %v2093 = vpop.xlane.xlu0 %2092
        %v2094 = vsub.f32 %v2090, %v2093
        %v2095 = vmul.f32 %v2094, 1.442695
        %v2096 = vpow.pop %v2095
        %v2097 = vsel %vm1116, %v2096, 0.0
        %2098 = vadd.xlane.f32.xlu0 %v2097
        %v2099 = vpop.xlane.xlu0 %2098
        %v2100 = vrcp.pop %v2099
        %v2101 = vmul.f32 %v2096, %v2100
        %s2102 = scalar_lea.vmem %s1008, 16
        %2103 = vst.msk [vmem:[%s2102] sm:$0xff] %vm1116, %v2101
        %v2104 = vpack.c.bf16 %v2101, %v2101
        %2105 = vrot.lane.b32.xlu0 %v1813, 80
        %v2106 = vpop.permute.xlu0 %2105
        %v2108 = vsel %vm1116, %v2104, 0
        %v2111 = vsel %vm1183, %v2106, 0
        %2113 = vmatprep.subr.bf16.mxu0 0
        %2114 = vmatpush1.bf16.msra.mxu0 %v2111
        %2115 = vmatprep.subr.bf16.mxu0 0
        %2116 = vmatpush1.bf16.msra.mxu0 0
        %2117 = vmatprep.subr.bf16.mxu0 0
        %2118 = vmatpush1.bf16.msra.mxu0 0
        %2119 = vmatprep.subr.bf16.mxu0 0
        %2120 = vmatpush1.bf16.msra.mxu0 0
        %2121 = vmatprep.subr.bf16.mxu0 0
        %2122 = vmatpush1.bf16.msra.mxu0 0
        %2123 = vmatprep.subr.bf16.mxu0 0
        %2124 = vmatpush1.bf16.msra.mxu0 0
        %2125 = vmatprep.subr.bf16.mxu0 0
        %2126 = vmatpush1.bf16.msra.mxu0 0
        %2127 = vmatprep.subr.bf16.mxu0 0
        %2128 = vmatpush1.bf16.msra.mxu0 0
        %2129 = vmatprep.subr.bf16.mxu0 0
        %2130 = vmatpush1.bf16.msra.mxu0 0
        %2131 = vmatprep.subr.bf16.mxu0 0
        %2132 = vmatpush1.bf16.msra.mxu0 0
        %2133 = vmatprep.subr.bf16.mxu0 0
        %2134 = vmatpush1.bf16.msra.mxu0 0
        %2135 = vmatprep.subr.bf16.mxu0 0
        %2136 = vmatpush1.bf16.msra.mxu0 0
        %2137 = vmatprep.subr.bf16.mxu0 0
        %2138 = vmatpush1.bf16.msra.mxu0 0
        %2139 = vmatprep.subr.bf16.mxu0 0
        %2140 = vmatpush1.bf16.msra.mxu0 0
        %2141 = vmatprep.subr.bf16.mxu0 0
        %2142 = vmatpush1.bf16.msra.mxu0 0
        %2143 = vmatprep.subr.bf16.mxu0 0
        %2144 = vmatpush1.bf16.msra.mxu0 0
        %2145 = vmatprep.mubr.bf16.mxu0 0
        %2146 = vmatmul.mubr.bf16.gmra.mrb[0].mxu0 %v2108
        %v2147 = vpop.f32.mrb[0].mxu0
        %v2148 = vadd.f32 0.0, %v2147
        %v2149 = vpop.f32.mrb[0].mxu0
        %v2150 = vpop.f32.mrb[0].mxu0
        %v2151 = vpop.f32.mrb[0].mxu0
        %2152 = vdwg.mxu0
        %2153 = vrot.lane.b32.xlu0 %v1812, 104
        %v2154 = vpop.permute.xlu0 %2153
        %2155 = vrot.lane.b32.xlu0 %v1813, 104
        %v2156 = vpop.permute.xlu0 %2155
        %v2158 = vsel %vm1116, %v2154, 0
        %v2161 = vsel %vm1116, %v2156, 0
        %2163 = vmatprep.subr.bf16.mxu0 0
        %2164 = vmatpush1.bf16.xpose.msra.mxu0 %v2161
        %2165 = vmatprep.subr.bf16.mxu0 0
        %2166 = vmatpush1.bf16.xpose.msra.mxu0 0
        %2167 = vmatprep.subr.bf16.mxu0 0
        %2168 = vmatpush1.bf16.xpose.msra.mxu0 0
        %2169 = vmatprep.subr.bf16.mxu0 0
        %2170 = vmatpush1.bf16.xpose.msra.mxu0 0
        %2171 = vmatprep.subr.bf16.mxu0 0
        %2172 = vmatpush1.bf16.xpose.msra.mxu0 0
        %2173 = vmatprep.subr.bf16.mxu0 0
        %2174 = vmatpush1.bf16.xpose.msra.mxu0 0
        %2175 = vmatprep.subr.bf16.mxu0 0
        %2176 = vmatpush1.bf16.xpose.msra.mxu0 0
        %2177 = vmatprep.subr.bf16.mxu0 0
        %2178 = vmatpush1.bf16.xpose.msra.mxu0 0
        %2179 = vmatprep.subr.bf16.mxu0 0
        %2180 = vmatpush1.bf16.xpose.msra.mxu0 0
        %2181 = vmatprep.subr.bf16.mxu0 0
        %2182 = vmatpush1.bf16.xpose.msra.mxu0 0
        %2183 = vmatprep.subr.bf16.mxu0 0
        %2184 = vmatpush1.bf16.xpose.msra.mxu0 0
        %2185 = vmatprep.subr.bf16.mxu0 0
        %2186 = vmatpush1.bf16.xpose.msra.mxu0 0
        %2187 = vmatprep.subr.bf16.mxu0 0
        %2188 = vmatpush1.bf16.xpose.msra.mxu0 0
        %2189 = vmatprep.subr.bf16.mxu0 0
        %2190 = vmatpush1.bf16.xpose.msra.mxu0 0
        %2191 = vmatprep.subr.bf16.mxu0 0
        %2192 = vmatpush1.bf16.xpose.msra.mxu0 0
        %2193 = vmatprep.subr.bf16.mxu0 0
        %2194 = vmatpush1.bf16.xpose.msra.mxu0 0
        %2195 = vmatprep.mubr.bf16.mxu0 0
        %2196 = vmatmul.mubr.bf16.gmra.mrb[0].mxu0 %v2158
        %v2197 = vpop.f32.mrb[0].mxu0
        %v2198 = vadd.f32 0.0, %v2197
        %v2199 = vpop.f32.mrb[0].mxu0
        %v2200 = vpop.f32.mrb[0].mxu0
        %v2201 = vpop.f32.mrb[0].mxu0
        %2202 = vdwg.mxu0
        %v2203 = vmul.f32 %v2198, 0.35355338
        %v2204 = vadd.f32 %v2203, %v1043
        %v2205 = vsel %vm1116, %v2204, -inf
        %2206 = vmax.xlane.f32.xlu0 %v2205
        %v2207 = vpop.xlane.xlu0 %2206
        %v2208 = vsub.f32 %v2204, %v2207
        %v2209 = vmul.f32 %v2208, 1.442695
        %v2210 = vpow.pop %v2209
        %v2211 = vsel %vm1116, %v2210, 0.0
        %2212 = vadd.xlane.f32.xlu0 %v2211
        %v2213 = vpop.xlane.xlu0 %2212
        %v2214 = vrcp.pop %v2213
        %v2215 = vmul.f32 %v2210, %v2214
        %s2216 = scalar_lea.vmem %s1008, 24
        %2217 = vst.msk [vmem:[%s2216] sm:$0xff] %vm1116, %v2215
        %v2218 = vpack.c.bf16 %v2215, %v2215
        %2219 = vrot.lane.b32.xlu0 %v1813, 72
        %v2220 = vpop.permute.xlu0 %2219
        %v2222 = vsel %vm1116, %v2218, 0
        %v2225 = vsel %vm1183, %v2220, 0
        %2227 = vmatprep.subr.bf16.mxu0 0
        %2228 = vmatpush1.bf16.msra.mxu0 %v2225
        %2229 = vmatprep.subr.bf16.mxu0 0
        %2230 = vmatpush1.bf16.msra.mxu0 0
        %2231 = vmatprep.subr.bf16.mxu0 0
        %2232 = vmatpush1.bf16.msra.mxu0 0
        %2233 = vmatprep.subr.bf16.mxu0 0
        %2234 = vmatpush1.bf16.msra.mxu0 0
        %2235 = vmatprep.subr.bf16.mxu0 0
        %2236 = vmatpush1.bf16.msra.mxu0 0
        %2237 = vmatprep.subr.bf16.mxu0 0
        %2238 = vmatpush1.bf16.msra.mxu0 0
        %2239 = vmatprep.subr.bf16.mxu0 0
        %2240 = vmatpush1.bf16.msra.mxu0 0
        %2241 = vmatprep.subr.bf16.mxu0 0
        %2242 = vmatpush1.bf16.msra.mxu0 0
        %2243 = vmatprep.subr.bf16.mxu0 0
        %2244 = vmatpush1.bf16.msra.mxu0 0
        %2245 = vmatprep.subr.bf16.mxu0 0
        %2246 = vmatpush1.bf16.msra.mxu0 0
        %2247 = vmatprep.subr.bf16.mxu0 0
        %2248 = vmatpush1.bf16.msra.mxu0 0
        %2249 = vmatprep.subr.bf16.mxu0 0
        %2250 = vmatpush1.bf16.msra.mxu0 0
        %2251 = vmatprep.subr.bf16.mxu0 0
        %2252 = vmatpush1.bf16.msra.mxu0 0
        %2253 = vmatprep.subr.bf16.mxu0 0
        %2254 = vmatpush1.bf16.msra.mxu0 0
        %2255 = vmatprep.subr.bf16.mxu0 0
        %2256 = vmatpush1.bf16.msra.mxu0 0
        %2257 = vmatprep.subr.bf16.mxu0 0
        %2258 = vmatpush1.bf16.msra.mxu0 0
        %2259 = vmatprep.mubr.bf16.mxu0 0
        %2260 = vmatmul.mubr.bf16.gmra.mrb[0].mxu0 %v2222
        %v2261 = vpop.f32.mrb[0].mxu0
        %v2262 = vadd.f32 0.0, %v2261
        %v2263 = vpop.f32.mrb[0].mxu0
        %v2264 = vpop.f32.mrb[0].mxu0
        %v2265 = vpop.f32.mrb[0].mxu0
        %2266 = vdwg.mxu0
        %2268 = vrot.lane.b32.xlu0 %v2034, 8
        %v2269 = vpop.permute.xlu0 %2268
        %2272 = vrot.lane.b32.xlu0 %v2148, 16
        %v2273 = vpop.permute.xlu0 %2272
        %2276 = vrot.lane.b32.xlu0 %v2262, 24
        %v2277 = vpop.permute.xlu0 %2276
        %v2279 = vsel %vm1116, %v1919, %v2269
        %v2280 = vsel %vm1582, %v2279, %v2273
        %v2281 = vsel %vm1584, %v2280, %v2277
        %v2282 = vld [vmem:[%s967] sm:$0xf]
        %v2283 = vld [vmem:[%s967 + $0x4] sm:$0xf]
        %v2284 = vld [vmem:[%s967 + $0x8] sm:$0xf]
        %v2285 = vld [vmem:[%s967 + $0xc] sm:$0xf]
        %v2286 = vpack.c.bf16 %v2281, %v2281
        %v2287 = vld [vmem:[%s970] sm:$0x1]
        %v2289 = vlaneseq
        %v2290 = vshrl.u32 %v2289, 7
        %v2291 = vsub.s32 0, %v2290
        %v2292 = vrot.slane %v2287, %v2291
        %v2298 = vunpack.c.l.b16 %v2282
        %v2299 = vunpack.c.l.b16 %v2283
        %v2300 = vunpack.c.l.b16 %v2284
        %v2301 = vunpack.c.l.b16 %v2285
        %v2302 = vpack.c.b16 %v2299, %v2298
        %v2303 = vpack.c.b16 %v2301, %v2300
        %v2307 = vsel %vm1068, %v2286, 0
        %2309 = vmatprep.subr.bf16.mxu0 0
        %2310 = vmatpush1.bf16.msra.mxu0 %v2302
        %2311 = vmatprep.subr.bf16.mxu0 0
        %2312 = vmatpush1.bf16.msra.mxu0 %v2303
        %2313 = vmatprep.subr.bf16.mxu0 0
        %2314 = vmatpush1.bf16.msra.mxu0 0
        %2315 = vmatprep.subr.bf16.mxu0 0
        %2316 = vmatpush1.bf16.msra.mxu0 0
        %2317 = vmatprep.subr.bf16.mxu0 0
        %2318 = vmatpush1.bf16.msra.mxu0 0
        %2319 = vmatprep.subr.bf16.mxu0 0
        %2320 = vmatpush1.bf16.msra.mxu0 0
        %2321 = vmatprep.subr.bf16.mxu0 0
        %2322 = vmatpush1.bf16.msra.mxu0 0
        %2323 = vmatprep.subr.bf16.mxu0 0
        %2324 = vmatpush1.bf16.msra.mxu0 0
        %2325 = vmatprep.subr.bf16.mxu0 0
        %2326 = vmatpush1.bf16.msra.mxu0 0
        %2327 = vmatprep.subr.bf16.mxu0 0
        %2328 = vmatpush1.bf16.msra.mxu0 0
        %2329 = vmatprep.subr.bf16.mxu0 0
        %2330 = vmatpush1.bf16.msra.mxu0 0
        %2331 = vmatprep.subr.bf16.mxu0 0
        %2332 = vmatpush1.bf16.msra.mxu0 0
        %2333 = vmatprep.subr.bf16.mxu0 0
        %2334 = vmatpush1.bf16.msra.mxu0 0
        %2335 = vmatprep.subr.bf16.mxu0 0
        %2336 = vmatpush1.bf16.msra.mxu0 0
        %2337 = vmatprep.subr.bf16.mxu0 0
        %2338 = vmatpush1.bf16.msra.mxu0 0
        %2339 = vmatprep.subr.bf16.mxu0 0
        %2340 = vmatpush1.bf16.msra.mxu0 0
        %2341 = vmatprep.mubr.bf16.mxu0 0
        %2342 = vmatmul.mubr.bf16.gmra.mrb[0].mxu0 %v2307
        %v2343 = vpop.f32.mrb[0].mxu0
        %v2344 = vadd.f32 %v2292, %v2343
        %v2345 = vpop.f32.mrb[0].mxu0
        %v2346 = vpop.f32.mrb[0].mxu0
        %v2347 = vpop.f32.mrb[0].mxu0
        %2348 = vdwg.mxu0
        %v2349 = vadd.f32 %v1677, %v2344
        %v2350 = vsel %vm1068, %v2349, 0.0
        %2351 = vadd.xlane.f32.xlu0 %v2350
        %v2352 = vpop.xlane.xlu0 %2351
        %v2353 = vmul.f32 %v2352, %v1657
        %v2354 = vsub.f32 %v2349, %v2353
        %v2355 = vmul.f32 %v2354, %v2354
        %v2356 = vsel %vm1068, %v2355, 0.0
        %2357 = vadd.xlane.f32.xlu0 %v2356
        %v2358 = vpop.xlane.xlu0 %2357
        %v2359 = vmul.f32 %v2358, %v1657
        %v2360 = vadd.f32 %v2359, 1e-12
        %v2361 = vrsqrt.pop %v2360
        %v2362 = vmul.f32 %v2354, %v2361
        %v2363 = vlaneseq
        %v2364 = vshrl.u32 %v2363, 7
        %v2365 = vsub.s32 2, %v2364
        %v2366 = vrot.slane %v1019, %v2365
        %v2367 = vmul.f32 %v2362, %v2366
        %v2368 = vlaneseq
        %v2369 = vshrl.u32 %v2368, 7
        %v2370 = vsub.s32 3, %v2369
        %v2371 = vrot.slane %v1019, %v2370
        %v2372 = vadd.f32 %v2367, %v2371
        %v2373 = vld [vmem:[%s975] sm:$0xf]
        %v2374 = vld [vmem:[%s975 + $0x4] sm:$0xf]
        %v2375 = vld [vmem:[%s975 + $0x8] sm:$0xf]
        %v2376 = vld [vmem:[%s975 + $0xc] sm:$0xf]
        %v2377 = vpack.c.bf16 %v2372, %v2372
        %v2378 = vld [vmem:[%s978] sm:$0x1]
        %v2380 = vlaneseq
        %v2381 = vshrl.u32 %v2380, 7
        %v2382 = vsub.s32 0, %v2381
        %v2383 = vrot.slane %v2378, %v2382
        %v2389 = vunpack.c.l.b16 %v2373
        %v2390 = vunpack.c.l.b16 %v2374
        %v2391 = vunpack.c.l.b16 %v2375
        %v2392 = vunpack.c.l.b16 %v2376
        %v2393 = vpack.c.b16 %v2390, %v2389
        %v2394 = vpack.c.b16 %v2392, %v2391
        %v2398 = vsel %vm1068, %v2377, 0
        %2400 = vmatprep.subr.bf16.mxu0 0
        %2401 = vmatpush1.bf16.msra.mxu0 %v2393
        %2402 = vmatprep.subr.bf16.mxu0 0
        %2403 = vmatpush1.bf16.msra.mxu0 %v2394
        %2404 = vmatprep.subr.bf16.mxu0 0
        %2405 = vmatpush1.bf16.msra.mxu0 0
        %2406 = vmatprep.subr.bf16.mxu0 0
        %2407 = vmatpush1.bf16.msra.mxu0 0
        %2408 = vmatprep.subr.bf16.mxu0 0
        %2409 = vmatpush1.bf16.msra.mxu0 0
        %2410 = vmatprep.subr.bf16.mxu0 0
        %2411 = vmatpush1.bf16.msra.mxu0 0
        %2412 = vmatprep.subr.bf16.mxu0 0
        %2413 = vmatpush1.bf16.msra.mxu0 0
        %2414 = vmatprep.subr.bf16.mxu0 0
        %2415 = vmatpush1.bf16.msra.mxu0 0
        %2416 = vmatprep.subr.bf16.mxu0 0
        %2417 = vmatpush1.bf16.msra.mxu0 0
        %2418 = vmatprep.subr.bf16.mxu0 0
        %2419 = vmatpush1.bf16.msra.mxu0 0
        %2420 = vmatprep.subr.bf16.mxu0 0
        %2421 = vmatpush1.bf16.msra.mxu0 0
        %2422 = vmatprep.subr.bf16.mxu0 0
        %2423 = vmatpush1.bf16.msra.mxu0 0
        %2424 = vmatprep.subr.bf16.mxu0 0
        %2425 = vmatpush1.bf16.msra.mxu0 0
        %2426 = vmatprep.subr.bf16.mxu0 0
        %2427 = vmatpush1.bf16.msra.mxu0 0
        %2428 = vmatprep.subr.bf16.mxu0 0
        %2429 = vmatpush1.bf16.msra.mxu0 0
        %2430 = vmatprep.subr.bf16.mxu0 0
        %2431 = vmatpush1.bf16.msra.mxu0 0
        %2432 = vmatprep.mubr.bf16.mxu0 0
        %2433 = vmatmul.mubr.bf16.gmra.mrb[0].mxu0 %v2398
        %v2434 = vpop.f32.mrb[0].mxu0
        %v2435 = vadd.f32 %v2383, %v2434
        %v2436 = vpop.f32.mrb[0].mxu0
        %v2437 = vpop.f32.mrb[0].mxu0
        %v2438 = vpop.f32.mrb[0].mxu0
        %2439 = vdwg.mxu0
        %v2440 = vmul.f32 %v2435, 0.5
        %v2441 = vmul.f32 %v2435, 0.70710677
        %vm2442 = vcmp.ge.f32.partialorder %v2441, 0.0
        %v2443 = vsel %vm2442, 1.0, -1.0
        %v2444 = vmul.f32 %v2441, %v2443
        %v2445 = vmul.f32 %v2444, 0.3275911
        %v2446 = vadd.f32 %v2445, 1.0
        %v2447 = vrcp.pop %v2446
        %v2448 = vmul.f32 1.0, %v2447
        %v2449 = vmul.f32 %v2448, 1.0614054
        %v2450 = vadd.f32 %v2449, -1.4531521
        %v2451 = vmul.f32 %v2450, %v2448
        %v2452 = vadd.f32 %v2451, 1.4214138
        %v2453 = vmul.f32 %v2452, %v2448
        %v2454 = vadd.f32 %v2453, -0.28449672
        %v2455 = vmul.f32 %v2454, %v2448
        %v2456 = vadd.f32 %v2455, 0.2548296
        %v2457 = vmul.f32 %v2456, %v2448
        %v2458 = vsub.f32 0.0, %v2444
        %v2459 = vmul.f32 %v2458, %v2444
        %v2460 = vmul.f32 %v2459, 1.442695
        %v2461 = vpow.pop %v2460
        %v2462 = vmul.f32 %v2457, %v2461
        %v2463 = vsub.f32 1.0, %v2462
        %v2464 = vmul.f32 %v2443, %v2463
        %v2465 = vadd.f32 %v2464, 1.0
        %v2466 = vmul.f32 %v2440, %v2465
        %v2467 = vld [vmem:[%s983] sm:$0xf]
        %v2468 = vld [vmem:[%s983 + $0x4] sm:$0xf]
        %v2469 = vld [vmem:[%s983 + $0x8] sm:$0xf]
        %v2470 = vld [vmem:[%s983 + $0xc] sm:$0xf]
        %v2471 = vld [vmem:[%s983 + $0x10] sm:$0xf]
        %v2472 = vld [vmem:[%s983 + $0x14] sm:$0xf]
        %v2473 = vld [vmem:[%s983 + $0x18] sm:$0xf]
        %v2474 = vld [vmem:[%s983 + $0x1c] sm:$0xf]
        %v2475 = vpack.c.bf16 %v2466, %v2466
        %v2476 = vld [vmem:[%s986] sm:$0x1]
        %v2478 = vlaneseq
        %v2479 = vshrl.u32 %v2478, 7
        %v2480 = vsub.s32 0, %v2479
        %v2481 = vrot.slane %v2476, %v2480
        %v2491 = vunpack.c.l.b16 %v2467
        %v2492 = vunpack.c.l.b16 %v2468
        %v2493 = vunpack.c.l.b16 %v2469
        %v2494 = vunpack.c.l.b16 %v2470
        %v2495 = vunpack.c.l.b16 %v2471
        %v2496 = vunpack.c.l.b16 %v2472
        %v2497 = vunpack.c.l.b16 %v2473
        %v2498 = vunpack.c.l.b16 %v2474
        %v2499 = vpack.c.b16 %v2492, %v2491
        %v2500 = vpack.c.b16 %v2494, %v2493
        %v2501 = vpack.c.b16 %v2496, %v2495
        %v2502 = vpack.c.b16 %v2498, %v2497
        %vm2507 = vcmask 523264
        %v2509 = vsel %vm2507, %v2475, 0
        %2511 = vmatprep.subr.bf16.mxu0 0
        %2512 = vmatpush1.bf16.msra.mxu0 %v2499
        %2513 = vmatprep.subr.bf16.mxu0 0
        %2514 = vmatpush1.bf16.msra.mxu0 %v2500
        %2515 = vmatprep.subr.bf16.mxu0 0
        %2516 = vmatpush1.bf16.msra.mxu0 %v2501
        %2517 = vmatprep.subr.bf16.mxu0 0
        %2518 = vmatpush1.bf16.msra.mxu0 %v2502
        %2519 = vmatprep.subr.bf16.mxu0 0
        %2520 = vmatpush1.bf16.msra.mxu0 0
        %2521 = vmatprep.subr.bf16.mxu0 0
        %2522 = vmatpush1.bf16.msra.mxu0 0
        %2523 = vmatprep.subr.bf16.mxu0 0
        %2524 = vmatpush1.bf16.msra.mxu0 0
        %2525 = vmatprep.subr.bf16.mxu0 0
        %2526 = vmatpush1.bf16.msra.mxu0 0
        %2527 = vmatprep.subr.bf16.mxu0 0
        %2528 = vmatpush1.bf16.msra.mxu0 0
        %2529 = vmatprep.subr.bf16.mxu0 0
        %2530 = vmatpush1.bf16.msra.mxu0 0
        %2531 = vmatprep.subr.bf16.mxu0 0
        %2532 = vmatpush1.bf16.msra.mxu0 0
        %2533 = vmatprep.subr.bf16.mxu0 0
        %2534 = vmatpush1.bf16.msra.mxu0 0
        %2535 = vmatprep.subr.bf16.mxu0 0
        %2536 = vmatpush1.bf16.msra.mxu0 0
        %2537 = vmatprep.subr.bf16.mxu0 0
        %2538 = vmatpush1.bf16.msra.mxu0 0
        %2539 = vmatprep.subr.bf16.mxu0 0
        %2540 = vmatpush1.bf16.msra.mxu0 0
        %2541 = vmatprep.subr.bf16.mxu0 0
        %2542 = vmatpush1.bf16.msra.mxu0 0
        %2543 = vmatprep.mubr.bf16.mxu0 0
        %2544 = vmatmul.mubr.bf16.gmra.mrb[0].mxu0 %v2509
        %v2545 = vpop.f32.mrb[0].mxu0
        %v2546 = vadd.f32 %v2481, %v2545
        %v2547 = vpop.f32.mrb[0].mxu0
        %v2548 = vpop.f32.mrb[0].mxu0
        %v2549 = vpop.f32.mrb[0].mxu0
        %2550 = vdwg.mxu0
        %v2551 = vadd.f32 %v2372, %v2546
        %v2552 = vsel %vm1068, %v2551, 0.0
        %2553 = vadd.xlane.f32.xlu0 %v2552
        %v2554 = vpop.xlane.xlu0 %2553
        %v2555 = vmul.f32 %v2554, %v1657
        %v2556 = vsub.f32 %v2551, %v2555
        %v2557 = vmul.f32 %v2556, %v2556
        %v2558 = vsel %vm1068, %v2557, 0.0
        %2559 = vadd.xlane.f32.xlu0 %v2558
        %v2560 = vpop.xlane.xlu0 %2559
        %v2561 = vmul.f32 %v2560, %v1657
        %v2562 = vadd.f32 %v2561, 1e-12
        %v2563 = vrsqrt.pop %v2562
        %v2564 = vmul.f32 %v2556, %v2563
        %v2565 = vlaneseq
        %v2566 = vshrl.u32 %v2565, 7
        %v2567 = vsub.s32 4, %v2566
        %v2568 = vrot.slane %v1019, %v2567
        %v2569 = vmul.f32 %v2564, %v2568
        %v2570 = vlaneseq
        %v2571 = vshrl.u32 %v2570, 7
        %v2572 = vsub.s32 5, %v2571
        %v2573 = vrot.slane %v1019, %v2572
        %v2574 = vadd.f32 %v2569, %v2573
        %2575 = vst.msk [vmem:[%s894] sm:$0xff] %vm1068, %v2574
        %s2576 = sand.u32 %s550, 1
        %s2577 = scalar_lea.sflag [#allocation3], %s2576
        %s2578 = sand.u32 %s550, 1
        %s2579 = smul.addr %s2578, 8
        %s2580 = scalar_lea.vmem [#allocation2], %s2579
        %p2581 = scmp.lt.s32.totalorder %s41, 1
        %s2582 = scalar_select %p2581, %s41, 1
        %p2583 = scmp.lt.s32.totalorder %s40, 1
        %s2584 = scalar_select %p2583, %s40, 1
        %s2585 = smul.addr %s2584, 4
        %s2586 = smul.addr %s2582, 8
        %s2587 = sadd.s32 %s2585, %s2586
        %s2588 = smul.addr %s2587, 8
        %s2589 = scalar_lea.vmem %s20, %s2588
        %p2590 = scmp.lt.s32.totalorder %s41, 1
        %s2591 = scalar_select %p2590, %s41, 1
        %p2592 = scmp.lt.s32.totalorder %s40, 1
        %s2593 = scalar_select %p2592, %s40, 1
        %s2594 = smul.addr %s2593, 4
        %s2595 = smul.addr %s2591, 8
        %s2596 = sadd.s32 %s2594, %s2595
        %s2597 = smul.addr %s2596, 8
        %s2598 = scalar_lea.vmem %s21, %s2597
        // Predicated region
        $region101: #{decoder_loop_forward.1} parent=95 // pred_check
          %p2599 = pneg %p560
        $region102: #{decoder_loop_forward.1} parent=95 // pred_check_branch
          %2601 = sbr.rel (%p2599) target = $region104
        $region103: #{decoder_loop_forward.1} parent=95 // pred_region
          %s2603 = ssub.s32 128, 128
          %2604 = vsyncadd %s2577, %s2603
          %s2605 = smul.addr %s40, 128
          %s2606 = scalar_lea.hbm %s19, %s2605
          %s2608 = sshll.u32 %s2580, 4
          %s2609 = int_to_ptr.vmem [resolvable:$true] %s2608
          %2611 = dma.vmem_to_hbm [thread:$0]  %s2609, 128, %s2606, %s2577
        $region104: #{decoder_loop_forward.1} parent=95 // pred_fallthru
          _
        // Predicated region
        $region105: #{decoder_loop_forward.1} parent=95 // pred_check
          %p2612 = pneg %p588
        $region106: #{decoder_loop_forward.1} parent=95 // pred_check_branch
          %2614 = sbr.rel (%p2612) target = $region108
        $region107: #{decoder_loop_forward.1} parent=95 // pred_region
          _
        $region108: #{decoder_loop_forward.1} parent=95 // pred_fallthru
          _
        // Predicated region
        $region109: #{decoder_loop_forward.1} parent=95 // pred_check
          %p2615 = pneg %p616
        $region110: #{decoder_loop_forward.1} parent=95 // pred_check_branch
          %2617 = sbr.rel (%p2615) target = $region112
        $region111: #{decoder_loop_forward.1} parent=95 // pred_region
          _
        $region112: #{decoder_loop_forward.1} parent=95 // pred_fallthru
          _
      $region96: #{decoder_loop_forward.1} parent=5 // pred_fallthru
        _
      %p2618 = scmp.le.s32.totalorder 2, %s31
      // Predicated region
      $region113: #{decoder_loop_forward.1} parent=5 // pred_check
        %p2619 = pneg %p2618
      $region114: #{decoder_loop_forward.1} parent=5 // pred_check_branch
        %2621 = sbr.rel (%p2619) target = $region116
      $region115: #{decoder_loop_forward.1} parent=5 // pred_region
        %s2622 = ssub.s32 %s31, 2
        // Predicated region
        $region117: #{decoder_loop_forward.1} parent=115 // pred_check
          %p2623 = pneg %p566
        $region118: #{decoder_loop_forward.1} parent=115 // pred_check_branch
          %2625 = sbr.rel (%p2623) target = $region120
        $region119: #{decoder_loop_forward.1} parent=115 // pred_region
          %s2626 = sand.u32 %s551, 1
          %s2627 = scalar_lea.sflag [#allocation3], %s2626
          %s2628 = sand.u32 %s551, 1
          %s2629 = smul.addr %s2628, 8
          %s2630 = scalar_lea.vmem [#allocation2], %s2629
          %2631 = dma.done %s2627, 128
        $region120: #{decoder_loop_forward.1} parent=115 // pred_fallthru
          _
        // Predicated region
        $region121: #{decoder_loop_forward.1} parent=115 // pred_check
          %p2632 = pneg %p594
        $region122: #{decoder_loop_forward.1} parent=115 // pred_check_branch
          %2634 = sbr.rel (%p2632) target = $region124
        $region123: #{decoder_loop_forward.1} parent=115 // pred_region
          %p2635 = scmp.lt.s32.totalorder %s43, 1
          %s2636 = scalar_select %p2635, %s43, 1
          %p2637 = scmp.lt.s32.totalorder %s42, 1
          %s2638 = scalar_select %p2637, %s42, 1
          %s2639 = smul.addr %s2638, 4
          %s2640 = smul.addr %s2636, 8
          %s2641 = sadd.s32 %s2639, %s2640
          %s2642 = smul.addr %s2641, 8
          %s2643 = scalar_lea.vmem %s20, %s2642
        $region124: #{decoder_loop_forward.1} parent=115 // pred_fallthru
          _
        // Predicated region
        $region125: #{decoder_loop_forward.1} parent=115 // pred_check
          %p2644 = pneg %p622
        $region126: #{decoder_loop_forward.1} parent=115 // pred_check_branch
          %2646 = sbr.rel (%p2644) target = $region128
        $region127: #{decoder_loop_forward.1} parent=115 // pred_region
          %p2647 = scmp.lt.s32.totalorder %s43, 1
          %s2648 = scalar_select %p2647, %s43, 1
          %p2649 = scmp.lt.s32.totalorder %s42, 1
          %s2650 = scalar_select %p2649, %s42, 1
          %s2651 = smul.addr %s2650, 4
          %s2652 = smul.addr %s2648, 8
          %s2653 = sadd.s32 %s2651, %s2652
          %s2654 = smul.addr %s2653, 8
          %s2655 = scalar_lea.vmem %s21, %s2654
        $region128: #{decoder_loop_forward.1} parent=115 // pred_fallthru
          _
      $region116: #{decoder_loop_forward.1} parent=5 // pred_fallthru
        _
    $region6: #{decoder_loop_forward.1} parent=1 // loop_footer
      %s35 = sadd.s32 1, %s31
    $region7: #{decoder_loop_forward.1} parent=1 // loop_footer_branch
      %30 = sbr.rel target = $region3
    $region8: #{decoder_loop_forward.1} parent=1 // loop_exit
      _
    %2656 = vsyncpa [#allocation3], 1
    %s2657 = scalar_lea.sflag [#allocation3], 1
    %2658 = vsyncpa %s2657, 1

</llo_original>
